<compile_context>
chip_gen: v5e
topology: v5e:2x2
jax: 0.10.0
libtpu: 0.0.40
codegen_flags: <defaults>
</compile_context>

<pallas_src>
import functools

import jax
import jax.numpy as jnp
from jax import lax
from jax.experimental import pallas as pl
from jax.experimental.pallas import tpu as pltpu

EPS = 1e-5
LANE = 128


def _vmem_limit_bytes():
    # 3/4 of physical VMEM, capped at 96 MiB: ~96 MiB on v5e/v6e (128-MiB parts), 48 MiB on v7x.
    try:
        cap = getattr(pltpu.get_tpu_info(), "vmem_capacity_bytes", 64 * 1024 * 1024)
    except Exception:  # pragma: no cover - conservative fallback
        cap = 64 * 1024 * 1024
    return int(min(96 * 1024 * 1024, cap * 3 // 4))


# ----------------------------- Pallas kernels ------------------------------


def _conv1_kernel(T, Ho, Wo, x_ref, w_ref, ps_ref, pb_ref, es_ref, eb_ref, o_ref, acts_ref):
    """bn1+ReLU (cached across Cout tiles) -> 3x3/stride-T conv (9 MXU matmuls) -> bn2+ReLU,
    emitted directly in the (Ho+2, Wo+2) zero-halo bf16 layout consumed by stage 2.

    x_ref    : (1, T*T, Hh, Wh, Cip)  bf16, spatial border pre-filled with the bn1-zero value
    w_ref    : (9, Cip, tn)           conv1 weights per tap, bf16
    ps/pb    : (1, Cip)               bn1 affine (prologue), f32
    es/eb    : (1, tn)                bn2 affine (epilogue), f32
    o_ref    : (1, Ho+2, Wo+2, tn)    activated output with zero halo, bf16
    acts_ref : (T*T, Hh, Wh, Cip)     VMEM scratch, bf16 (per-image activation cache)
    """
    Cin = x_ref.shape[-1]
    tn = o_ref.shape[-1]

    # Prologue: bn1 affine (f32) + ReLU, cast to bf16 once, computed only for the first
    # Cout tile of each image (grid iterates j inner; x block is unchanged across j).
    @pl.when(pl.program_id(1) == 0)
    def _():
        ps = ps_ref[...].reshape(1, 1, Cin)
        pb = pb_ref[...].reshape(1, 1, Cin)
        for p in range(T * T):
            a = jnp.maximum(x_ref[0, p].astype(jnp.float32) * ps + pb, 0.0)
            acts_ref[p] = a.astype(acts_ref.dtype)

    # 3x3 conv, stride T: in-kernel im2col from the cached bf16 phase blocks; one MXU matmul
    # per tap with f32 accumulation.
    acc = jnp.zeros((Ho * Wo, tn), jnp.float32)
    for ky in range(3):
        for kx in range(3):
            p = (ky % T) * T + (kx % T)
            dy, dx = ky // T, kx // T
            win = acts_ref[p, dy:dy + Ho, dx:dx + Wo, :].reshape(Ho * Wo, Cin)
            acc += jnp.dot(win, w_ref[ky * 3 + kx], preferred_element_type=jnp.float32)

    # Epilogue: bn2 affine + ReLU; write zero halo + interior (feeds conv2 with no glue pad).
    out = jnp.maximum(acc * es_ref[...] + eb_ref[...], 0.0)
    o_ref[...] = jnp.zeros(o_ref.shape, o_ref.dtype)
    o_ref[0, 1:1 + Ho, 1:1 + Wo, :] = out.reshape(Ho, Wo, tn).astype(o_ref.dtype)


def _conv3x3_acc(x_ref, w_ref, Ho, Wo, tn):
    """9-tap MXU accumulation over a (1, Ho+2, Wo+2, C) bf16 zero-halo block (no upcasts)."""
    C = x_ref.shape[-1]
    acc = jnp.zeros((Ho * Wo, tn), jnp.float32)
    for ky in range(3):
        for kx in range(3):
            win = x_ref[0, ky:ky + Ho, kx:kx + Wo, :].reshape(Ho * Wo, C)
            acc += jnp.dot(win, w_ref[ky * 3 + kx], preferred_element_type=jnp.float32)
    return acc


def _conv2_id_kernel(Ho, Wo, alpha, x_ref, w_ref, r_ref, o_ref):
    """3x3/stride-1 conv on the activated intermediate + alpha * identity shortcut (f32 add)."""
    acc = _conv3x3_acc(x_ref, w_ref, Ho, Wo, o_ref.shape[-1])
    res = r_ref[0].astype(jnp.float32)
    acc = acc + (res if alpha == 1.0 else alpha * res)
    o_ref[0] = acc.astype(o_ref.dtype)


def _conv2_proj_kernel(Ho, Wo, x_ref, w_ref, r_ref, ss_ref, sb_ref, ws_ref, o_ref, sc_ref):
    """3x3/stride-1 conv + fused projection shortcut (bn_s+ReLU -> 1x1, alpha folded into W_s).

    The bn_s+ReLU shortcut activation is computed once per image and cached in VMEM scratch."""
    @pl.when(pl.program_id(1) == 0)
    def _():
        sc = jnp.maximum(r_ref[0].astype(jnp.float32) * ss_ref[...] + sb_ref[...], 0.0)
        sc_ref[...] = sc.astype(sc_ref.dtype)

    acc = _conv3x3_acc(x_ref, w_ref, Ho, Wo, o_ref.shape[-1])
    acc = acc + jnp.dot(sc_ref[...], ws_ref[...], preferred_element_type=jnp.float32)
    o_ref[0] = acc.astype(o_ref.dtype)


# ------------------- glue (pure data movement / param prep) -------------------


def _pad_to(n, m):
    return ((n + m - 1) // m) * m


def _pad_last(x, c):
    if x.shape[-1] == c:
        return x
    cfg = [(0, 0)] * (x.ndim - 1) + [(0, c - x.shape[-1])]
    return jnp.pad(x, cfg)


def _bn_affine(bn, cp):
    gamma, beta, mean, var = bn
    s = (gamma / jnp.sqrt(var + EPS)).astype(jnp.float32)
    b = (beta - mean * s).astype(jnp.float32)
    return (jnp.pad(s, (0, cp - s.shape[0])).reshape(1, cp),
            jnp.pad(b, (0, cp - b.shape[0])).reshape(1, cp))


def _prep_w3x3(w, cin_p, cout_p):
    """OIHW -> (9, Cin_p, Cout_p) bf16, tap order ky*3+kx."""
    cout, cin, kh, kw = w.shape
    wm = jnp.transpose(w, (2, 3, 1, 0)).reshape(kh * kw, cin, cout)
    wm = jnp.pad(wm, ((0, 0), (0, cin_p - cin), (0, cout_p - cout)))
    return wm.astype(jnp.bfloat16)


def _prep_w1x1(w, cin_p, cout_p, scale=1.0):
    """OI11 -> (Cin_p, Cout_p) bf16 with `scale` (alpha) folded in."""
    cout, cin = w.shape[0], w.shape[1]
    wm = jnp.transpose(w[:, :, 0, 0], (1, 0)) * scale
    wm = jnp.pad(wm, ((0, cin_p - cin), (0, cout_p - cout)))
    return wm.astype(jnp.bfloat16)


def _pad_and_phase(x, stride, pad_val):
    """Spatially pad by 1 (plus alignment to `stride`) with per-channel pad_val, then
    phase-decompose (space-to-batch) so every stride-`stride` 3x3 tap window is a contiguous
    slice: (N, H, W, C) -> (N, T*T, Hp/T, Wp/T, C)."""
    N, H, W, C = x.shape
    T = stride
    Hp = _pad_to(H + 2, T)
    Wp = _pad_to(W + 2, T)
    xp = jnp.broadcast_to(pad_val.reshape(1, 1, 1, C), (N, Hp, Wp, C)).astype(x.dtype)
    xp = lax.dynamic_update_slice(xp, x, (0, 1, 1, 0))
    xp = xp.reshape(N, Hp // T, T, Wp // T, T, C)
    xp = jnp.transpose(xp, (0, 2, 4, 1, 3, 5))
    return xp.reshape(N, T * T, Hp // T, Wp // T, C)


# ----------------------------- BasicBlockV2 forward ------------------------------


def _basic_block_v2_nhwc(x, params, stride, is_normal):
    N, H, W, Cin = x.shape
    Cout = params["conv1_w"].shape[0]
    Cip, Cop = _pad_to(Cin, LANE), _pad_to(Cout, LANE)
    Ho, Wo = (H - 1) // stride + 1, (W - 1) // stride + 1
    alpha = 1.0 if is_normal else 1.5
    TN = 256 if Cop % 256 == 0 else LANE           # fill the 256-wide MXU on v6e/v7x
    grid = (N, Cop // TN)
    vmem = _vmem_limit_bytes()

    s1, b1 = _bn_affine(params["bn1"], Cip)
    s2, b2 = _bn_affine(params["bn2"], Cop)
    w1m = _prep_w3x3(params["conv1_w"], Cip, Cop)
    w2m = _prep_w3x3(params["conv2_w"], Cop, Cop)

    # bf16 activations into the kernels; BN affines / accumulation stay f32.
    xc = _pad_last(x.astype(jnp.bfloat16), Cip)                       # (N, H, W, Cip) bf16

    # Border pad value = value the bn1 affine maps to 0 (ReLU keeps 0) -> no in-kernel border
    # mask.  Guard against a ~0 bn1 scale (falls back to 0-pad for that channel).
    safe = jnp.abs(s1) > 1e-12
    pad_val = jnp.where(safe, -b1 / jnp.where(safe, s1, 1.0), 0.0).reshape(Cip)

    T = stride
    xp = _pad_and_phase(xc, T, pad_val)                               # (N, T*T, Hh, Wh, Cip)
    Hh, Wh = xp.shape[2], xp.shape[3]
    Hp2, Wp2 = Ho + 2, Wo + 2

    # -------- stage 1: bn1 -> relu -> conv1(3x3, stride) -> bn2 -> relu (one kernel) --------
    h = pl.pallas_call(
        functools.partial(_conv1_kernel, T, Ho, Wo),
        out_shape=jax.ShapeDtypeStruct((N, Hp2, Wp2, Cop), jnp.bfloat16),
        grid_spec=pltpu.PrefetchScalarGridSpec(
            num_scalar_prefetch=0,
            grid=grid,
            in_specs=[
                pl.BlockSpec((1, T * T, Hh, Wh, Cip), lambda n, j: (n, 0, 0, 0, 0)),
                pl.BlockSpec((9, Cip, TN), lambda n, j: (0, 0, j)),
                pl.BlockSpec((1, Cip), lambda n, j: (0, 0)),
                pl.BlockSpec((1, Cip), lambda n, j: (0, 0)),
                pl.BlockSpec((1, TN), lambda n, j: (0, j)),
                pl.BlockSpec((1, TN), lambda n, j: (0, j)),
            ],
            out_specs=pl.BlockSpec((1, Hp2, Wp2, TN), lambda n, j: (n, 0, 0, j)),
            scratch_shapes=[pltpu.VMEM((T * T, Hh, Wh, Cip), jnp.bfloat16)],
        ),
        compiler_params=pltpu.CompilerParams(
            dimension_semantics=("parallel", "arbitrary"),   # j arbitrary: per-image cache
            vmem_limit_bytes=vmem),
    )(xp, w1m, s1, b1, s2, b2)

    # -------- stage 2: conv2(3x3, stride 1) + alpha * shortcut (one kernel) --------
    if stride != 1 or Cin != Cout:
        # Projection shortcut, fully fused: subsample x BEFORE bn_s+relu (glue data movement),
        # then bn_s affine + relu (cached) + 1x1 conv (alpha folded into weights) in-kernel.
        r = xc[:, ::stride, ::stride, :].reshape(N, Ho * Wo, Cip)
        ss, sb = _bn_affine(params["bn_s"], Cip)
        wsm = _prep_w1x1(params["conv_s_w"], Cip, Cop, scale=alpha)
        kern = functools.partial(_conv2_proj_kernel, Ho, Wo)
        in_specs = [
            pl.BlockSpec((1, Hp2, Wp2, Cop), lambda n, j: (n, 0, 0, 0)),
            pl.BlockSpec((9, Cop, TN), lambda n, j: (0, 0, j)),
            pl.BlockSpec((1, Ho * Wo, Cip), lambda n, j: (n, 0, 0)),
            pl.BlockSpec((1, Cip), lambda n, j: (0, 0)),
            pl.BlockSpec((1, Cip), lambda n, j: (0, 0)),
            pl.BlockSpec((Cip, TN), lambda n, j: (0, j)),
        ]
        args = (h, w2m, r, ss, sb, wsm)
        scratch = [pltpu.VMEM((Ho * Wo, Cip), jnp.bfloat16)]
        dims = ("parallel", "arbitrary")
    else:
        # Identity shortcut (stride == 1 and Cin == Cout): fused residual add in f32.
        r = xc.reshape(N, Ho * Wo, Cip)
        kern = functools.partial(_conv2_id_kernel, Ho, Wo, float(alpha))
        in_specs = [
            pl.BlockSpec((1, Hp2, Wp2, Cop), lambda n, j: (n, 0, 0, 0)),
            pl.BlockSpec((9, Cop, TN), lambda n, j: (0, 0, j)),
            pl.BlockSpec((1, Ho * Wo, TN), lambda n, j: (n, 0, j)),
        ]
        args = (h, w2m, r)
        scratch = []
        dims = ("parallel", "parallel")

    out = pl.pallas_call(
        kern,
        out_shape=jax.ShapeDtypeStruct((N, Ho * Wo, Cop), jnp.float32),
        grid_spec=pltpu.PrefetchScalarGridSpec(
            num_scalar_prefetch=0,
            grid=grid,
            in_specs=in_specs,
            out_specs=pl.BlockSpec((1, Ho * Wo, TN), lambda n, j: (n, 0, j)),
            scratch_shapes=scratch,
        ),
        compiler_params=pltpu.CompilerParams(
            dimension_semantics=dims, vmem_limit_bytes=vmem),
    )(*args)

    return out.reshape(N, Ho, Wo, Cop)[:, :, :, :Cout]


@functools.partial(jax.jit, static_argnames=("stride", "is_normal"))
def basic_block_v2_forward(x_nchw, params, stride=1, is_normal=True):
    x = jnp.transpose(x_nchw, (0, 2, 3, 1))                 # NCHW -> NHWC (network boundary)
    out = _basic_block_v2_nhwc(x, params, stride, is_normal)
    return jnp.transpose(out, (0, 3, 1, 2))                 # NHWC -> NCHW


# ----------------------------- pure-JAX reference ------------------------------


def _ref_forward(x, params, stride, is_normal):
    def bn(x, p):
        g, b, m, v = p
        sc = g / jnp.sqrt(v + EPS)
        return x * sc[None, :, None, None] + (b - m * sc)[None, :, None, None]

    def conv(x, w, s, pad):
        return lax.conv_general_dilated(
            x, w, (s, s), [(pad, pad), (pad, pad)],
            dimension_numbers=("NCHW", "OIHW", "NCHW"))

    out = conv(jax.nn.relu(bn(x, params["bn1"])), params["conv1_w"], stride, 1)
    out = conv(jax.nn.relu(bn(out, params["bn2"])), params["conv2_w"], 1, 1)
    if stride != 1 or x.shape[1] != params["conv1_w"].shape[0]:
        sc = conv(jax.nn.relu(bn(x, params["bn_s"])), params["conv_s_w"], stride, 0)
    else:
        sc = x
    return out + (1.0 if is_normal else 1.5) * sc


# ----------------------------- main ------------------------------


def _make_params(key, in_planes, planes):
    ks = jax.random.split(key, 16)
    f32 = jnp.float32

    def bn_params(k0, k1, k2, k3, c):
        gamma = 1.0 + 0.1 * jax.random.normal(k0, (c,), f32)
        beta = 0.1 * jax.random.normal(k1, (c,), f32)
        mean = 0.1 * jax.random.normal(k2, (c,), f32)
        var = jnp.abs(jax.random.normal(k3, (c,), f32)) + 0.5
        return (gamma, beta, mean, var)

    return {
        "bn1": bn_params(ks[0], ks[1], ks[2], ks[3], in_planes),
        "conv1_w": 0.1 * jax.random.normal(ks[4], (planes, in_planes, 3, 3), f32),
        "bn2": bn_params(ks[5], ks[6], ks[7], ks[8], planes),
        "conv2_w": 0.1 * jax.random.normal(ks[9], (planes, planes, 3, 3), f32),
        "bn_s": bn_params(ks[10], ks[11], ks[12], ks[13], in_planes),
        "conv_s_w": 0.1 * jax.random.normal(ks[14], (planes, in_planes, 1, 1), f32),
    }


if __name__ == "__main__":
    key = jax.random.PRNGKey(0)

    # Test 1: projection-shortcut path (stride=2, channel change).
    k_x, k_p, k_x2, k_p2 = jax.random.split(key, 4)
    in_planes, planes, stride, is_normal = 4, 8, 2, True
    x = jax.random.normal(k_x, (2, in_planes, 16, 16), jnp.float32)    # NCHW like PyTorch
    params = _make_params(k_p, in_planes, planes)

    out = jax.block_until_ready(
        basic_block_v2_forward(x, params, stride=stride, is_normal=is_normal))
    ref = jax.block_until_ready(_ref_forward(x, params, stride, is_normal))
    assert out.shape == ref.shape == (2, planes, 8, 8), (out.shape, ref.shape)
    # bf16 activations / weights / intermediate on the MXU (f32 accumulation + f32 BN affine /
    # residual add) -> tolerance 3e-2.
    if not bool(jnp.allclose(out, ref, atol=3e-2, rtol=3e-2)):
        raise AssertionError("Pallas BasicBlockV2 (projection) mismatch vs reference")

    # Test 2: identity-shortcut path (stride=1, in_planes == planes).
    x2 = jax.random.normal(k_x2, (2, planes, 16, 16), jnp.float32)
    params2 = _make_params(k_p2, planes, planes)
    out2 = jax.block_until_ready(
        basic_block_v2_forward(x2, params2, stride=1, is_normal=False))
    ref2 = jax.block_until_ready(_ref_forward(x2, params2, 1, False))
    assert out2.shape == ref2.shape == (2, planes, 16, 16), (out2.shape, ref2.shape)
    if not bool(jnp.allclose(out2, ref2, atol=3e-2, rtol=3e-2)):
        raise AssertionError("Pallas BasicBlockV2 (identity) mismatch vs reference")

    print("KERNEL_OK")
</pallas_src>

<mosaic_0001>
module attributes {stable_mosaic.version = 11 : i64} {
  func.func @_conv1_kernel(%arg0: i32, %arg1: i32, %arg2: memref<1x4x9x9x128xbf16, #tpu.memory_space<vmem>>, %arg3: memref<9x128x128xbf16, #tpu.memory_space<vmem>>, %arg4: memref<1x128xf32, #tpu.memory_space<vmem>>, %arg5: memref<1x128xf32, #tpu.memory_space<vmem>>, %arg6: memref<1x128xf32, #tpu.memory_space<vmem>>, %arg7: memref<1x128xf32, #tpu.memory_space<vmem>>, %arg8: memref<1x10x10x128xbf16, #tpu.memory_space<vmem>>, %arg9: memref<4x9x9x128xbf16, #tpu.memory_space<vmem>>) attributes {dimension_semantics = [#tpu.dimension_semantics<parallel>, #tpu.dimension_semantics<arbitrary>], iteration_bounds = array<i64: 2, 1>, scalar_prefetch = 0 : i64, scratch_operands = 1 : i64, tpu.core_type = #tpu.core_type<tc>, window_params = [{transform_indices = @transform_0, window_bounds = array<i64: 1, 4, 9, 9, 128>}, {transform_indices = @transform_1, window_bounds = array<i64: 9, 128, 128>}, {pipeline_mode = #tpu.pipeline_mode<synchronous>, transform_indices = @transform_2, window_bounds = array<i64: 1, 128>}, {pipeline_mode = #tpu.pipeline_mode<synchronous>, transform_indices = @transform_3, window_bounds = array<i64: 1, 128>}, {transform_indices = @transform_4, window_bounds = array<i64: 1, 128>}, {transform_indices = @transform_5, window_bounds = array<i64: 1, 128>}, {transform_indices = @transform_6, window_bounds = array<i64: 1, 10, 10, 128>}]} {
    %c0_i32 = arith.constant 0 : i32
    %0 = arith.cmpi eq, %arg1, %c0_i32 : i32
    %1 = arith.extui %0 : i1 to i32
    %c0_i32_0 = arith.constant 0 : i32
    %2 = arith.cmpi ne, %1, %c0_i32_0 : i32
    scf.if %2 {
      %c0_78 = arith.constant 0 : index
      %c0_79 = arith.constant 0 : index
      %82 = vector.load %arg4[%c0_78, %c0_79] : memref<1x128xf32, #tpu.memory_space<vmem>>, vector<1x128xf32>
      %83 = vector.shape_cast %82 : vector<1x128xf32> to vector<1x1x128xf32>
      %c0_80 = arith.constant 0 : index
      %c0_81 = arith.constant 0 : index
      %84 = vector.load %arg5[%c0_80, %c0_81] : memref<1x128xf32, #tpu.memory_space<vmem>>, vector<1x128xf32>
      %85 = vector.shape_cast %84 : vector<1x128xf32> to vector<1x1x128xf32>
      %c0_82 = arith.constant 0 : index
      %c0_83 = arith.constant 0 : index
      %c0_84 = arith.constant 0 : index
      %c0_85 = arith.constant 0 : index
      %c0_86 = arith.constant 0 : index
      %86 = vector.load %arg2[%c0_82, %c0_83, %c0_84, %c0_85, %c0_86] : memref<1x4x9x9x128xbf16, #tpu.memory_space<vmem>>, vector<1x1x9x9x128xbf16>
      %87 = vector.shape_cast %86 : vector<1x1x9x9x128xbf16> to vector<9x9x128xbf16>
      %88 = arith.extf %87 : vector<9x9x128xbf16> to vector<9x9x128xf32>
      %89 = vector.broadcast %83 : vector<1x1x128xf32> to vector<9x9x128xf32>
      %90 = arith.mulf %88, %89 : vector<9x9x128xf32>
      %91 = vector.broadcast %85 : vector<1x1x128xf32> to vector<9x9x128xf32>
      %92 = arith.addf %90, %91 : vector<9x9x128xf32>
      %cst_87 = arith.constant 0.000000e+00 : f32
      %93 = vector.broadcast %cst_87 : f32 to vector<9x9x128xf32>
      %94 = arith.maximumf %92, %93 : vector<9x9x128xf32>
      %95 = arith.truncf %94 : vector<9x9x128xf32> to vector<9x9x128xbf16>
      %c0_88 = arith.constant 0 : index
      %c0_89 = arith.constant 0 : index
      %c0_90 = arith.constant 0 : index
      %c0_91 = arith.constant 0 : index
      %96 = vector.load %arg9[%c0_88, %c0_89, %c0_90, %c0_91] : memref<4x9x9x128xbf16, #tpu.memory_space<vmem>>, vector<1x9x9x128xbf16>
      %97 = vector.shape_cast %96 : vector<1x9x9x128xbf16> to vector<9x9x128xbf16>
      %98 = vector.shape_cast %95 : vector<9x9x128xbf16> to vector<1x9x9x128xbf16>
      tpu.vector_store %arg9[%c0_88, %c0_89, %c0_90, %c0_91], %98 {strides = array<i32>} : memref<4x9x9x128xbf16, #tpu.memory_space<vmem>>, vector<1x9x9x128xbf16>,
      %c0_92 = arith.constant 0 : index
      %c1_93 = arith.constant 1 : index
      %c0_94 = arith.constant 0 : index
      %c0_95 = arith.constant 0 : index
      %c0_96 = arith.constant 0 : index
      %99 = vector.load %arg2[%c0_92, %c1_93, %c0_94, %c0_95, %c0_96] : memref<1x4x9x9x128xbf16, #tpu.memory_space<vmem>>, vector<1x1x9x9x128xbf16>
      %100 = vector.shape_cast %99 : vector<1x1x9x9x128xbf16> to vector<9x9x128xbf16>
      %101 = arith.extf %100 : vector<9x9x128xbf16> to vector<9x9x128xf32>
      %102 = vector.broadcast %83 : vector<1x1x128xf32> to vector<9x9x128xf32>
      %103 = arith.mulf %101, %102 : vector<9x9x128xf32>
      %104 = vector.broadcast %85 : vector<1x1x128xf32> to vector<9x9x128xf32>
      %105 = arith.addf %103, %104 : vector<9x9x128xf32>
      %cst_97 = arith.constant 0.000000e+00 : f32
      %106 = vector.broadcast %cst_97 : f32 to vector<9x9x128xf32>
      %107 = arith.maximumf %105, %106 : vector<9x9x128xf32>
      %108 = arith.truncf %107 : vector<9x9x128xf32> to vector<9x9x128xbf16>
      %c1_98 = arith.constant 1 : index
      %c0_99 = arith.constant 0 : index
      %c0_100 = arith.constant 0 : index
      %c0_101 = arith.constant 0 : index
      %109 = vector.load %arg9[%c1_98, %c0_99, %c0_100, %c0_101] : memref<4x9x9x128xbf16, #tpu.memory_space<vmem>>, vector<1x9x9x128xbf16>
      %110 = vector.shape_cast %109 : vector<1x9x9x128xbf16> to vector<9x9x128xbf16>
      %111 = vector.shape_cast %108 : vector<9x9x128xbf16> to vector<1x9x9x128xbf16>
      tpu.vector_store %arg9[%c1_98, %c0_99, %c0_100, %c0_101], %111 {strides = array<i32>} : memref<4x9x9x128xbf16, #tpu.memory_space<vmem>>, vector<1x9x9x128xbf16>,
      %c0_102 = arith.constant 0 : index
      %c2_103 = arith.constant 2 : index
      %c0_104 = arith.constant 0 : index
      %c0_105 = arith.constant 0 : index
      %c0_106 = arith.constant 0 : index
      %112 = vector.load %arg2[%c0_102, %c2_103, %c0_104, %c0_105, %c0_106] : memref<1x4x9x9x128xbf16, #tpu.memory_space<vmem>>, vector<1x1x9x9x128xbf16>
      %113 = vector.shape_cast %112 : vector<1x1x9x9x128xbf16> to vector<9x9x128xbf16>
      %114 = arith.extf %113 : vector<9x9x128xbf16> to vector<9x9x128xf32>
      %115 = vector.broadcast %83 : vector<1x1x128xf32> to vector<9x9x128xf32>
      %116 = arith.mulf %114, %115 : vector<9x9x128xf32>
      %117 = vector.broadcast %85 : vector<1x1x128xf32> to vector<9x9x128xf32>
      %118 = arith.addf %116, %117 : vector<9x9x128xf32>
      %cst_107 = arith.constant 0.000000e+00 : f32
      %119 = vector.broadcast %cst_107 : f32 to vector<9x9x128xf32>
      %120 = arith.maximumf %118, %119 : vector<9x9x128xf32>
      %121 = arith.truncf %120 : vector<9x9x128xf32> to vector<9x9x128xbf16>
      %c2_108 = arith.constant 2 : index
      %c0_109 = arith.constant 0 : index
      %c0_110 = arith.constant 0 : index
      %c0_111 = arith.constant 0 : index
      %122 = vector.load %arg9[%c2_108, %c0_109, %c0_110, %c0_111] : memref<4x9x9x128xbf16, #tpu.memory_space<vmem>>, vector<1x9x9x128xbf16>
      %123 = vector.shape_cast %122 : vector<1x9x9x128xbf16> to vector<9x9x128xbf16>
      %124 = vector.shape_cast %121 : vector<9x9x128xbf16> to vector<1x9x9x128xbf16>
      tpu.vector_store %arg9[%c2_108, %c0_109, %c0_110, %c0_111], %124 {strides = array<i32>} : memref<4x9x9x128xbf16, #tpu.memory_space<vmem>>, vector<1x9x9x128xbf16>,
      %c0_112 = arith.constant 0 : index
      %c3_113 = arith.constant 3 : index
      %c0_114 = arith.constant 0 : index
      %c0_115 = arith.constant 0 : index
      %c0_116 = arith.constant 0 : index
      %125 = vector.load %arg2[%c0_112, %c3_113, %c0_114, %c0_115, %c0_116] : memref<1x4x9x9x128xbf16, #tpu.memory_space<vmem>>, vector<1x1x9x9x128xbf16>
      %126 = vector.shape_cast %125 : vector<1x1x9x9x128xbf16> to vector<9x9x128xbf16>
      %127 = arith.extf %126 : vector<9x9x128xbf16> to vector<9x9x128xf32>
      %128 = vector.broadcast %83 : vector<1x1x128xf32> to vector<9x9x128xf32>
      %129 = arith.mulf %127, %128 : vector<9x9x128xf32>
      %130 = vector.broadcast %85 : vector<1x1x128xf32> to vector<9x9x128xf32>
      %131 = arith.addf %129, %130 : vector<9x9x128xf32>
      %cst_117 = arith.constant 0.000000e+00 : f32
      %132 = vector.broadcast %cst_117 : f32 to vector<9x9x128xf32>
      %133 = arith.maximumf %131, %132 : vector<9x9x128xf32>
      %134 = arith.truncf %133 : vector<9x9x128xf32> to vector<9x9x128xbf16>
      %c3_118 = arith.constant 3 : index
      %c0_119 = arith.constant 0 : index
      %c0_120 = arith.constant 0 : index
      %c0_121 = arith.constant 0 : index
      %135 = vector.load %arg9[%c3_118, %c0_119, %c0_120, %c0_121] : memref<4x9x9x128xbf16, #tpu.memory_space<vmem>>, vector<1x9x9x128xbf16>
      %136 = vector.shape_cast %135 : vector<1x9x9x128xbf16> to vector<9x9x128xbf16>
      %137 = vector.shape_cast %134 : vector<9x9x128xbf16> to vector<1x9x9x128xbf16>
      tpu.vector_store %arg9[%c3_118, %c0_119, %c0_120, %c0_121], %137 {strides = array<i32>} : memref<4x9x9x128xbf16, #tpu.memory_space<vmem>>, vector<1x9x9x128xbf16>,
    } else {
    }
    %cst = arith.constant 0.000000e+00 : f32
    %3 = vector.broadcast %cst : f32 to vector<64x128xf32>
    %c0 = arith.constant 0 : index
    %c0_1 = arith.constant 0 : index
    %c0_2 = arith.constant 0 : index
    %c0_3 = arith.constant 0 : index
    %4 = vector.load %arg9[%c0, %c0_1, %c0_2, %c0_3] : memref<4x9x9x128xbf16, #tpu.memory_space<vmem>>, vector<1x8x8x128xbf16>
    %5 = vector.shape_cast %4 : vector<1x8x8x128xbf16> to vector<8x8x128xbf16>
    %6 = vector.shape_cast %5 : vector<8x8x128xbf16> to vector<64x128xbf16>
    %c0_4 = arith.constant 0 : index
    %c0_5 = arith.constant 0 : index
    %c0_6 = arith.constant 0 : index
    %7 = vector.load %arg3[%c0_4, %c0_5, %c0_6] : memref<9x128x128xbf16, #tpu.memory_space<vmem>>, vector<1x128x128xbf16>
    %8 = vector.shape_cast %7 : vector<1x128x128xbf16> to vector<128x128xbf16>
    %cst_7 = arith.constant dense<0.000000e+00> : vector<64x128xf32>
    %9 = tpu.matmul %6, %8, %cst_7 {dimension_numbers = #tpu.dot_dimension_numbers<[1], [0], [0], [1], [0, 0, 1, 1], [], []>} : vector<64x128xbf16>, vector<128x128xbf16>, vector<64x128xf32> -> vector<64x128xf32>
    %10 = arith.addf %3, %9 : vector<64x128xf32>
    %c1 = arith.constant 1 : index
    %c0_8 = arith.constant 0 : index
    %c0_9 = arith.constant 0 : index
    %c0_10 = arith.constant 0 : index
    %11 = vector.load %arg9[%c1, %c0_8, %c0_9, %c0_10] : memref<4x9x9x128xbf16, #tpu.memory_space<vmem>>, vector<1x8x8x128xbf16>
    %12 = vector.shape_cast %11 : vector<1x8x8x128xbf16> to vector<8x8x128xbf16>
    %13 = vector.shape_cast %12 : vector<8x8x128xbf16> to vector<64x128xbf16>
    %c1_11 = arith.constant 1 : index
    %c0_12 = arith.constant 0 : index
    %c0_13 = arith.constant 0 : index
    %14 = vector.load %arg3[%c1_11, %c0_12, %c0_13] : memref<9x128x128xbf16, #tpu.memory_space<vmem>>, vector<1x128x128xbf16>
    %15 = vector.shape_cast %14 : vector<1x128x128xbf16> to vector<128x128xbf16>
    %cst_14 = arith.constant dense<0.000000e+00> : vector<64x128xf32>
    %16 = tpu.matmul %13, %15, %cst_14 {dimension_numbers = #tpu.dot_dimension_numbers<[1], [0], [0], [1], [0, 0, 1, 1], [], []>} : vector<64x128xbf16>, vector<128x128xbf16>, vector<64x128xf32> -> vector<64x128xf32>
    %17 = arith.addf %10, %16 : vector<64x128xf32>
    %c0_15 = arith.constant 0 : index
    %c0_16 = arith.constant 0 : index
    %c1_17 = arith.constant 1 : index
    %c0_18 = arith.constant 0 : index
    %18 = vector.load %arg9[%c0_15, %c0_16, %c1_17, %c0_18] : memref<4x9x9x128xbf16, #tpu.memory_space<vmem>>, vector<1x8x8x128xbf16>
    %19 = vector.shape_cast %18 : vector<1x8x8x128xbf16> to vector<8x8x128xbf16>
    %20 = vector.shape_cast %19 : vector<8x8x128xbf16> to vector<64x128xbf16>
    %c2 = arith.constant 2 : index
    %c0_19 = arith.constant 0 : index
    %c0_20 = arith.constant 0 : index
    %21 = vector.load %arg3[%c2, %c0_19, %c0_20] : memref<9x128x128xbf16, #tpu.memory_space<vmem>>, vector<1x128x128xbf16>
    %22 = vector.shape_cast %21 : vector<1x128x128xbf16> to vector<128x128xbf16>
    %cst_21 = arith.constant dense<0.000000e+00> : vector<64x128xf32>
    %23 = tpu.matmul %20, %22, %cst_21 {dimension_numbers = #tpu.dot_dimension_numbers<[1], [0], [0], [1], [0, 0, 1, 1], [], []>} : vector<64x128xbf16>, vector<128x128xbf16>, vector<64x128xf32> -> vector<64x128xf32>
    %24 = arith.addf %17, %23 : vector<64x128xf32>
    %c2_22 = arith.constant 2 : index
    %c0_23 = arith.constant 0 : index
    %c0_24 = arith.constant 0 : index
    %c0_25 = arith.constant 0 : index
    %25 = vector.load %arg9[%c2_22, %c0_23, %c0_24, %c0_25] : memref<4x9x9x128xbf16, #tpu.memory_space<vmem>>, vector<1x8x8x128xbf16>
    %26 = vector.shape_cast %25 : vector<1x8x8x128xbf16> to vector<8x8x128xbf16>
    %27 = vector.shape_cast %26 : vector<8x8x128xbf16> to vector<64x128xbf16>
    %c3 = arith.constant 3 : index
    %c0_26 = arith.constant 0 : index
    %c0_27 = arith.constant 0 : index
    %28 = vector.load %arg3[%c3, %c0_26, %c0_27] : memref<9x128x128xbf16, #tpu.memory_space<vmem>>, vector<1x128x128xbf16>
    %29 = vector.shape_cast %28 : vector<1x128x128xbf16> to vector<128x128xbf16>
    %cst_28 = arith.constant dense<0.000000e+00> : vector<64x128xf32>
    %30 = tpu.matmul %27, %29, %cst_28 {dimension_numbers = #tpu.dot_dimension_numbers<[1], [0], [0], [1], [0, 0, 1, 1], [], []>} : vector<64x128xbf16>, vector<128x128xbf16>, vector<64x128xf32> -> vector<64x128xf32>
    %31 = arith.addf %24, %30 : vector<64x128xf32>
    %c3_29 = arith.constant 3 : index
    %c0_30 = arith.constant 0 : index
    %c0_31 = arith.constant 0 : index
    %c0_32 = arith.constant 0 : index
    %32 = vector.load %arg9[%c3_29, %c0_30, %c0_31, %c0_32] : memref<4x9x9x128xbf16, #tpu.memory_space<vmem>>, vector<1x8x8x128xbf16>
    %33 = vector.shape_cast %32 : vector<1x8x8x128xbf16> to vector<8x8x128xbf16>
    %34 = vector.shape_cast %33 : vector<8x8x128xbf16> to vector<64x128xbf16>
    %c4 = arith.constant 4 : index
    %c0_33 = arith.constant 0 : index
    %c0_34 = arith.constant 0 : index
    %35 = vector.load %arg3[%c4, %c0_33, %c0_34] : memref<9x128x128xbf16, #tpu.memory_space<vmem>>, vector<1x128x128xbf16>
    %36 = vector.shape_cast %35 : vector<1x128x128xbf16> to vector<128x128xbf16>
    %cst_35 = arith.constant dense<0.000000e+00> : vector<64x128xf32>
    %37 = tpu.matmul %34, %36, %cst_35 {dimension_numbers = #tpu.dot_dimension_numbers<[1], [0], [0], [1], [0, 0, 1, 1], [], []>} : vector<64x128xbf16>, vector<128x128xbf16>, vector<64x128xf32> -> vector<64x128xf32>
    %38 = arith.addf %31, %37 : vector<64x128xf32>
    %c2_36 = arith.constant 2 : index
    %c0_37 = arith.constant 0 : index
    %c1_38 = arith.constant 1 : index
    %c0_39 = arith.constant 0 : index
    %39 = vector.load %arg9[%c2_36, %c0_37, %c1_38, %c0_39] : memref<4x9x9x128xbf16, #tpu.memory_space<vmem>>, vector<1x8x8x128xbf16>
    %40 = vector.shape_cast %39 : vector<1x8x8x128xbf16> to vector<8x8x128xbf16>
    %41 = vector.shape_cast %40 : vector<8x8x128xbf16> to vector<64x128xbf16>
    %c5 = arith.constant 5 : index
    %c0_40 = arith.constant 0 : index
    %c0_41 = arith.constant 0 : index
    %42 = vector.load %arg3[%c5, %c0_40, %c0_41] : memref<9x128x128xbf16, #tpu.memory_space<vmem>>, vector<1x128x128xbf16>
    %43 = vector.shape_cast %42 : vector<1x128x128xbf16> to vector<128x128xbf16>
    %cst_42 = arith.constant dense<0.000000e+00> : vector<64x128xf32>
    %44 = tpu.matmul %41, %43, %cst_42 {dimension_numbers = #tpu.dot_dimension_numbers<[1], [0], [0], [1], [0, 0, 1, 1], [], []>} : vector<64x128xbf16>, vector<128x128xbf16>, vector<64x128xf32> -> vector<64x128xf32>
    %45 = arith.addf %38, %44 : vector<64x128xf32>
    %c0_43 = arith.constant 0 : index
    %c1_44 = arith.constant 1 : index
    %c0_45 = arith.constant 0 : index
    %c0_46 = arith.constant 0 : index
    %46 = vector.load %arg9[%c0_43, %c1_44, %c0_45, %c0_46] : memref<4x9x9x128xbf16, #tpu.memory_space<vmem>>, vector<1x8x8x128xbf16>
    %47 = vector.shape_cast %46 : vector<1x8x8x128xbf16> to vector<8x8x128xbf16>
    %48 = vector.shape_cast %47 : vector<8x8x128xbf16> to vector<64x128xbf16>
    %c6 = arith.constant 6 : index
    %c0_47 = arith.constant 0 : index
    %c0_48 = arith.constant 0 : index
    %49 = vector.load %arg3[%c6, %c0_47, %c0_48] : memref<9x128x128xbf16, #tpu.memory_space<vmem>>, vector<1x128x128xbf16>
    %50 = vector.shape_cast %49 : vector<1x128x128xbf16> to vector<128x128xbf16>
    %cst_49 = arith.constant dense<0.000000e+00> : vector<64x128xf32>
    %51 = tpu.matmul %48, %50, %cst_49 {dimension_numbers = #tpu.dot_dimension_numbers<[1], [0], [0], [1], [0, 0, 1, 1], [], []>} : vector<64x128xbf16>, vector<128x128xbf16>, vector<64x128xf32> -> vector<64x128xf32>
    %52 = arith.addf %45, %51 : vector<64x128xf32>
    %c1_50 = arith.constant 1 : index
    %c1_51 = arith.constant 1 : index
    %c0_52 = arith.constant 0 : index
    %c0_53 = arith.constant 0 : index
    %53 = vector.load %arg9[%c1_50, %c1_51, %c0_52, %c0_53] : memref<4x9x9x128xbf16, #tpu.memory_space<vmem>>, vector<1x8x8x128xbf16>
    %54 = vector.shape_cast %53 : vector<1x8x8x128xbf16> to vector<8x8x128xbf16>
    %55 = vector.shape_cast %54 : vector<8x8x128xbf16> to vector<64x128xbf16>
    %c7 = arith.constant 7 : index
    %c0_54 = arith.constant 0 : index
    %c0_55 = arith.constant 0 : index
    %56 = vector.load %arg3[%c7, %c0_54, %c0_55] : memref<9x128x128xbf16, #tpu.memory_space<vmem>>, vector<1x128x128xbf16>
    %57 = vector.shape_cast %56 : vector<1x128x128xbf16> to vector<128x128xbf16>
    %cst_56 = arith.constant dense<0.000000e+00> : vector<64x128xf32>
    %58 = tpu.matmul %55, %57, %cst_56 {dimension_numbers = #tpu.dot_dimension_numbers<[1], [0], [0], [1], [0, 0, 1, 1], [], []>} : vector<64x128xbf16>, vector<128x128xbf16>, vector<64x128xf32> -> vector<64x128xf32>
    %59 = arith.addf %52, %58 : vector<64x128xf32>
    %c0_57 = arith.constant 0 : index
    %c1_58 = arith.constant 1 : index
    %c1_59 = arith.constant 1 : index
    %c0_60 = arith.constant 0 : index
    %60 = vector.load %arg9[%c0_57, %c1_58, %c1_59, %c0_60] : memref<4x9x9x128xbf16, #tpu.memory_space<vmem>>, vector<1x8x8x128xbf16>
    %61 = vector.shape_cast %60 : vector<1x8x8x128xbf16> to vector<8x8x128xbf16>
    %62 = vector.shape_cast %61 : vector<8x8x128xbf16> to vector<64x128xbf16>
    %c8 = arith.constant 8 : index
    %c0_61 = arith.constant 0 : index
    %c0_62 = arith.constant 0 : index
    %63 = vector.load %arg3[%c8, %c0_61, %c0_62] : memref<9x128x128xbf16, #tpu.memory_space<vmem>>, vector<1x128x128xbf16>
    %64 = vector.shape_cast %63 : vector<1x128x128xbf16> to vector<128x128xbf16>
    %cst_63 = arith.constant dense<0.000000e+00> : vector<64x128xf32>
    %65 = tpu.matmul %62, %64, %cst_63 {dimension_numbers = #tpu.dot_dimension_numbers<[1], [0], [0], [1], [0, 0, 1, 1], [], []>} : vector<64x128xbf16>, vector<128x128xbf16>, vector<64x128xf32> -> vector<64x128xf32>
    %66 = arith.addf %59, %65 : vector<64x128xf32>
    %c0_64 = arith.constant 0 : index
    %c0_65 = arith.constant 0 : index
    %67 = vector.load %arg6[%c0_64, %c0_65] : memref<1x128xf32, #tpu.memory_space<vmem>>, vector<1x128xf32>
    %68 = vector.broadcast %67 : vector<1x128xf32> to vector<64x128xf32>
    %69 = arith.mulf %66, %68 : vector<64x128xf32>
    %c0_66 = arith.constant 0 : index
    %c0_67 = arith.constant 0 : index
    %70 = vector.load %arg7[%c0_66, %c0_67] : memref<1x128xf32, #tpu.memory_space<vmem>>, vector<1x128xf32>
    %71 = vector.broadcast %70 : vector<1x128xf32> to vector<64x128xf32>
    %72 = arith.addf %69, %71 : vector<64x128xf32>
    %cst_68 = arith.constant 0.000000e+00 : f32
    %73 = vector.broadcast %cst_68 : f32 to vector<64x128xf32>
    %74 = arith.maximumf %72, %73 : vector<64x128xf32>
    %cst_69 = arith.constant 0.000000e+00 : bf16
    %75 = vector.broadcast %cst_69 : bf16 to vector<1x10x10x128xbf16>
    %c0_70 = arith.constant 0 : index
    %c0_71 = arith.constant 0 : index
    %c0_72 = arith.constant 0 : index
    %c0_73 = arith.constant 0 : index
    %76 = vector.load %arg8[%c0_70, %c0_71, %c0_72, %c0_73] : memref<1x10x10x128xbf16, #tpu.memory_space<vmem>>, vector<1x10x10x128xbf16>
    tpu.vector_store %arg8[%c0_70, %c0_71, %c0_72, %c0_73], %75 {strides = array<i32>} : memref<1x10x10x128xbf16, #tpu.memory_space<vmem>>, vector<1x10x10x128xbf16>,
    %77 = vector.shape_cast %74 : vector<64x128xf32> to vector<8x8x128xf32>
    %78 = arith.truncf %77 : vector<8x8x128xf32> to vector<8x8x128xbf16>
    %c0_74 = arith.constant 0 : index
    %c1_75 = arith.constant 1 : index
    %c1_76 = arith.constant 1 : index
    %c0_77 = arith.constant 0 : index
    %79 = vector.load %arg8[%c0_74, %c1_75, %c1_76, %c0_77] : memref<1x10x10x128xbf16, #tpu.memory_space<vmem>>, vector<1x8x8x128xbf16>
    %80 = vector.shape_cast %79 : vector<1x8x8x128xbf16> to vector<8x8x128xbf16>
    %81 = vector.shape_cast %78 : vector<8x8x128xbf16> to vector<1x8x8x128xbf16>
    tpu.vector_store %arg8[%c0_74, %c1_75, %c1_76, %c0_77], %81 {strides = array<i32>} : memref<1x10x10x128xbf16, #tpu.memory_space<vmem>>, vector<1x8x8x128xbf16>,
    return
  }
  func.func @transform_0(%arg0: i32, %arg1: i32) -> (i32, i32, i32, i32, i32) {
    %c0_i32 = arith.constant 0 : i32
    %c0_i32_0 = arith.constant 0 : i32
    %c0_i32_1 = arith.constant 0 : i32
    %c0_i32_2 = arith.constant 0 : i32
    %c0_i32_3 = arith.constant 0 : i32
    return %arg0, %c0_i32, %c0_i32_0, %c0_i32_1, %c0_i32_2 : i32, i32, i32, i32, i32
  }
  func.func @transform_1(%arg0: i32, %arg1: i32) -> (i32, i32, i32) {
    %c0_i32 = arith.constant 0 : i32
    %c0_i32_0 = arith.constant 0 : i32
    %c0_i32_1 = arith.constant 0 : i32
    return %c0_i32, %c0_i32_0, %arg1 : i32, i32, i32
  }
  func.func @transform_2(%arg0: i32, %arg1: i32) -> (i32, i32) {
    %c0_i32 = arith.constant 0 : i32
    %c0_i32_0 = arith.constant 0 : i32
    %c0_i32_1 = arith.constant 0 : i32
    return %c0_i32, %c0_i32_0 : i32, i32
  }
  func.func @transform_3(%arg0: i32, %arg1: i32) -> (i32, i32) {
    %c0_i32 = arith.constant 0 : i32
    %c0_i32_0 = arith.constant 0 : i32
    %c0_i32_1 = arith.constant 0 : i32
    return %c0_i32, %c0_i32_0 : i32, i32
  }
  func.func @transform_4(%arg0: i32, %arg1: i32) -> (i32, i32) {
    %c0_i32 = arith.constant 0 : i32
    %c0_i32_0 = arith.constant 0 : i32
    return %c0_i32, %arg1 : i32, i32
  }
  func.func @transform_5(%arg0: i32, %arg1: i32) -> (i32, i32) {
    %c0_i32 = arith.constant 0 : i32
    %c0_i32_0 = arith.constant 0 : i32
    return %c0_i32, %arg1 : i32, i32
  }
  func.func @transform_6(%arg0: i32, %arg1: i32) -> (i32, i32, i32, i32) {
    %c0_i32 = arith.constant 0 : i32
    %c0_i32_0 = arith.constant 0 : i32
    %c0_i32_1 = arith.constant 0 : i32
    return %arg0, %c0_i32, %c0_i32_0, %arg1 : i32, i32, i32, i32
  }
}

module attributes {stable_mosaic.version = 11 : i64} {
  func.func @_conv2_proj_kernel(%arg0: i32, %arg1: i32, %arg2: memref<1x10x10x128xbf16, #tpu.memory_space<vmem>>, %arg3: memref<9x128x128xbf16, #tpu.memory_space<vmem>>, %arg4: memref<1x64x128xbf16, #tpu.memory_space<vmem>>, %arg5: memref<1x128xf32, #tpu.memory_space<vmem>>, %arg6: memref<1x128xf32, #tpu.memory_space<vmem>>, %arg7: memref<128x128xbf16, #tpu.memory_space<vmem>>, %arg8: memref<1x64x128xf32, #tpu.memory_space<vmem>>, %arg9: memref<64x128xbf16, #tpu.memory_space<vmem>>) attributes {dimension_semantics = [#tpu.dimension_semantics<parallel>, #tpu.dimension_semantics<arbitrary>], iteration_bounds = array<i64: 2, 1>, scalar_prefetch = 0 : i64, scratch_operands = 1 : i64, tpu.core_type = #tpu.core_type<tc>, window_params = [{transform_indices = @transform_0, window_bounds = array<i64: 1, 10, 10, 128>}, {transform_indices = @transform_1, window_bounds = array<i64: 9, 128, 128>}, {transform_indices = @transform_2, window_bounds = array<i64: 1, 64, 128>}, {pipeline_mode = #tpu.pipeline_mode<synchronous>, transform_indices = @transform_3, window_bounds = array<i64: 1, 128>}, {pipeline_mode = #tpu.pipeline_mode<synchronous>, transform_indices = @transform_4, window_bounds = array<i64: 1, 128>}, {transform_indices = @transform_5, window_bounds = array<i64: 128, 128>}, {transform_indices = @transform_6, window_bounds = array<i64: 1, 64, 128>}]} {
    %c0_i32 = arith.constant 0 : i32
    %0 = arith.cmpi eq, %arg1, %c0_i32 : i32
    %1 = arith.extui %0 : i1 to i32
    %c0_i32_0 = arith.constant 0 : i32
    %2 = arith.cmpi ne, %1, %c0_i32_0 : i32
    scf.if %2 {
      %c0_72 = arith.constant 0 : index
      %c0_73 = arith.constant 0 : index
      %c0_74 = arith.constant 0 : index
      %74 = vector.load %arg4[%c0_72, %c0_73, %c0_74] : memref<1x64x128xbf16, #tpu.memory_space<vmem>>, vector<1x64x128xbf16>
      %75 = vector.shape_cast %74 : vector<1x64x128xbf16> to vector<64x128xbf16>
      %76 = arith.extf %75 : vector<64x128xbf16> to vector<64x128xf32>
      %c0_75 = arith.constant 0 : index
      %c0_76 = arith.constant 0 : index
      %77 = vector.load %arg5[%c0_75, %c0_76] : memref<1x128xf32, #tpu.memory_space<vmem>>, vector<1x128xf32>
      %78 = vector.broadcast %77 : vector<1x128xf32> to vector<64x128xf32>
      %79 = arith.mulf %76, %78 : vector<64x128xf32>
      %c0_77 = arith.constant 0 : index
      %c0_78 = arith.constant 0 : index
      %80 = vector.load %arg6[%c0_77, %c0_78] : memref<1x128xf32, #tpu.memory_space<vmem>>, vector<1x128xf32>
      %81 = vector.broadcast %80 : vector<1x128xf32> to vector<64x128xf32>
      %82 = arith.addf %79, %81 : vector<64x128xf32>
      %cst_79 = arith.constant 0.000000e+00 : f32
      %83 = vector.broadcast %cst_79 : f32 to vector<64x128xf32>
      %84 = arith.maximumf %82, %83 : vector<64x128xf32>
      %85 = arith.truncf %84 : vector<64x128xf32> to vector<64x128xbf16>
      %c0_80 = arith.constant 0 : index
      %c0_81 = arith.constant 0 : index
      %86 = vector.load %arg9[%c0_80, %c0_81] : memref<64x128xbf16, #tpu.memory_space<vmem>>, vector<64x128xbf16>
      tpu.vector_store %arg9[%c0_80, %c0_81], %85 {strides = array<i32>} : memref<64x128xbf16, #tpu.memory_space<vmem>>, vector<64x128xbf16>,
    } else {
    }
    %cst = arith.constant 0.000000e+00 : f32
    %3 = vector.broadcast %cst : f32 to vector<64x128xf32>
    %c0 = arith.constant 0 : index
    %c0_1 = arith.constant 0 : index
    %c0_2 = arith.constant 0 : index
    %c0_3 = arith.constant 0 : index
    %4 = vector.load %arg2[%c0, %c0_1, %c0_2, %c0_3] : memref<1x10x10x128xbf16, #tpu.memory_space<vmem>>, vector<1x8x8x128xbf16>
    %5 = vector.shape_cast %4 : vector<1x8x8x128xbf16> to vector<8x8x128xbf16>
    %6 = vector.shape_cast %5 : vector<8x8x128xbf16> to vector<64x128xbf16>
    %c0_4 = arith.constant 0 : index
    %c0_5 = arith.constant 0 : index
    %c0_6 = arith.constant 0 : index
    %7 = vector.load %arg3[%c0_4, %c0_5, %c0_6] : memref<9x128x128xbf16, #tpu.memory_space<vmem>>, vector<1x128x128xbf16>
    %8 = vector.shape_cast %7 : vector<1x128x128xbf16> to vector<128x128xbf16>
    %cst_7 = arith.constant dense<0.000000e+00> : vector<64x128xf32>
    %9 = tpu.matmul %6, %8, %cst_7 {dimension_numbers = #tpu.dot_dimension_numbers<[1], [0], [0], [1], [0, 0, 1, 1], [], []>} : vector<64x128xbf16>, vector<128x128xbf16>, vector<64x128xf32> -> vector<64x128xf32>
    %10 = arith.addf %3, %9 : vector<64x128xf32>
    %c0_8 = arith.constant 0 : index
    %c0_9 = arith.constant 0 : index
    %c1 = arith.constant 1 : index
    %c0_10 = arith.constant 0 : index
    %11 = vector.load %arg2[%c0_8, %c0_9, %c1, %c0_10] : memref<1x10x10x128xbf16, #tpu.memory_space<vmem>>, vector<1x8x8x128xbf16>
    %12 = vector.shape_cast %11 : vector<1x8x8x128xbf16> to vector<8x8x128xbf16>
    %13 = vector.shape_cast %12 : vector<8x8x128xbf16> to vector<64x128xbf16>
    %c1_11 = arith.constant 1 : index
    %c0_12 = arith.constant 0 : index
    %c0_13 = arith.constant 0 : index
    %14 = vector.load %arg3[%c1_11, %c0_12, %c0_13] : memref<9x128x128xbf16, #tpu.memory_space<vmem>>, vector<1x128x128xbf16>
    %15 = vector.shape_cast %14 : vector<1x128x128xbf16> to vector<128x128xbf16>
    %cst_14 = arith.constant dense<0.000000e+00> : vector<64x128xf32>
    %16 = tpu.matmul %13, %15, %cst_14 {dimension_numbers = #tpu.dot_dimension_numbers<[1], [0], [0], [1], [0, 0, 1, 1], [], []>} : vector<64x128xbf16>, vector<128x128xbf16>, vector<64x128xf32> -> vector<64x128xf32>
    %17 = arith.addf %10, %16 : vector<64x128xf32>
    %c0_15 = arith.constant 0 : index
    %c0_16 = arith.constant 0 : index
    %c2 = arith.constant 2 : index
    %c0_17 = arith.constant 0 : index
    %18 = vector.load %arg2[%c0_15, %c0_16, %c2, %c0_17] : memref<1x10x10x128xbf16, #tpu.memory_space<vmem>>, vector<1x8x8x128xbf16>
    %19 = vector.shape_cast %18 : vector<1x8x8x128xbf16> to vector<8x8x128xbf16>
    %20 = vector.shape_cast %19 : vector<8x8x128xbf16> to vector<64x128xbf16>
    %c2_18 = arith.constant 2 : index
    %c0_19 = arith.constant 0 : index
    %c0_20 = arith.constant 0 : index
    %21 = vector.load %arg3[%c2_18, %c0_19, %c0_20] : memref<9x128x128xbf16, #tpu.memory_space<vmem>>, vector<1x128x128xbf16>
    %22 = vector.shape_cast %21 : vector<1x128x128xbf16> to vector<128x128xbf16>
    %cst_21 = arith.constant dense<0.000000e+00> : vector<64x128xf32>
    %23 = tpu.matmul %20, %22, %cst_21 {dimension_numbers = #tpu.dot_dimension_numbers<[1], [0], [0], [1], [0, 0, 1, 1], [], []>} : vector<64x128xbf16>, vector<128x128xbf16>, vector<64x128xf32> -> vector<64x128xf32>
    %24 = arith.addf %17, %23 : vector<64x128xf32>
    %c0_22 = arith.constant 0 : index
    %c1_23 = arith.constant 1 : index
    %c0_24 = arith.constant 0 : index
    %c0_25 = arith.constant 0 : index
    %25 = vector.load %arg2[%c0_22, %c1_23, %c0_24, %c0_25] : memref<1x10x10x128xbf16, #tpu.memory_space<vmem>>, vector<1x8x8x128xbf16>
    %26 = vector.shape_cast %25 : vector<1x8x8x128xbf16> to vector<8x8x128xbf16>
    %27 = vector.shape_cast %26 : vector<8x8x128xbf16> to vector<64x128xbf16>
    %c3 = arith.constant 3 : index
    %c0_26 = arith.constant 0 : index
    %c0_27 = arith.constant 0 : index
    %28 = vector.load %arg3[%c3, %c0_26, %c0_27] : memref<9x128x128xbf16, #tpu.memory_space<vmem>>, vector<1x128x128xbf16>
    %29 = vector.shape_cast %28 : vector<1x128x128xbf16> to vector<128x128xbf16>
    %cst_28 = arith.constant dense<0.000000e+00> : vector<64x128xf32>
    %30 = tpu.matmul %27, %29, %cst_28 {dimension_numbers = #tpu.dot_dimension_numbers<[1], [0], [0], [1], [0, 0, 1, 1], [], []>} : vector<64x128xbf16>, vector<128x128xbf16>, vector<64x128xf32> -> vector<64x128xf32>
    %31 = arith.addf %24, %30 : vector<64x128xf32>
    %c0_29 = arith.constant 0 : index
    %c1_30 = arith.constant 1 : index
    %c1_31 = arith.constant 1 : index
    %c0_32 = arith.constant 0 : index
    %32 = vector.load %arg2[%c0_29, %c1_30, %c1_31, %c0_32] : memref<1x10x10x128xbf16, #tpu.memory_space<vmem>>, vector<1x8x8x128xbf16>
    %33 = vector.shape_cast %32 : vector<1x8x8x128xbf16> to vector<8x8x128xbf16>
    %34 = vector.shape_cast %33 : vector<8x8x128xbf16> to vector<64x128xbf16>
    %c4 = arith.constant 4 : index
    %c0_33 = arith.constant 0 : index
    %c0_34 = arith.constant 0 : index
    %35 = vector.load %arg3[%c4, %c0_33, %c0_34] : memref<9x128x128xbf16, #tpu.memory_space<vmem>>, vector<1x128x128xbf16>
    %36 = vector.shape_cast %35 : vector<1x128x128xbf16> to vector<128x128xbf16>
    %cst_35 = arith.constant dense<0.000000e+00> : vector<64x128xf32>
    %37 = tpu.matmul %34, %36, %cst_35 {dimension_numbers = #tpu.dot_dimension_numbers<[1], [0], [0], [1], [0, 0, 1, 1], [], []>} : vector<64x128xbf16>, vector<128x128xbf16>, vector<64x128xf32> -> vector<64x128xf32>
    %38 = arith.addf %31, %37 : vector<64x128xf32>
    %c0_36 = arith.constant 0 : index
    %c1_37 = arith.constant 1 : index
    %c2_38 = arith.constant 2 : index
    %c0_39 = arith.constant 0 : index
    %39 = vector.load %arg2[%c0_36, %c1_37, %c2_38, %c0_39] : memref<1x10x10x128xbf16, #tpu.memory_space<vmem>>, vector<1x8x8x128xbf16>
    %40 = vector.shape_cast %39 : vector<1x8x8x128xbf16> to vector<8x8x128xbf16>
    %41 = vector.shape_cast %40 : vector<8x8x128xbf16> to vector<64x128xbf16>
    %c5 = arith.constant 5 : index
    %c0_40 = arith.constant 0 : index
    %c0_41 = arith.constant 0 : index
    %42 = vector.load %arg3[%c5, %c0_40, %c0_41] : memref<9x128x128xbf16, #tpu.memory_space<vmem>>, vector<1x128x128xbf16>
    %43 = vector.shape_cast %42 : vector<1x128x128xbf16> to vector<128x128xbf16>
    %cst_42 = arith.constant dense<0.000000e+00> : vector<64x128xf32>
    %44 = tpu.matmul %41, %43, %cst_42 {dimension_numbers = #tpu.dot_dimension_numbers<[1], [0], [0], [1], [0, 0, 1, 1], [], []>} : vector<64x128xbf16>, vector<128x128xbf16>, vector<64x128xf32> -> vector<64x128xf32>
    %45 = arith.addf %38, %44 : vector<64x128xf32>
    %c0_43 = arith.constant 0 : index
    %c2_44 = arith.constant 2 : index
    %c0_45 = arith.constant 0 : index
    %c0_46 = arith.constant 0 : index
    %46 = vector.load %arg2[%c0_43, %c2_44, %c0_45, %c0_46] : memref<1x10x10x128xbf16, #tpu.memory_space<vmem>>, vector<1x8x8x128xbf16>
    %47 = vector.shape_cast %46 : vector<1x8x8x128xbf16> to vector<8x8x128xbf16>
    %48 = vector.shape_cast %47 : vector<8x8x128xbf16> to vector<64x128xbf16>
    %c6 = arith.constant 6 : index
    %c0_47 = arith.constant 0 : index
    %c0_48 = arith.constant 0 : index
    %49 = vector.load %arg3[%c6, %c0_47, %c0_48] : memref<9x128x128xbf16, #tpu.memory_space<vmem>>, vector<1x128x128xbf16>
    %50 = vector.shape_cast %49 : vector<1x128x128xbf16> to vector<128x128xbf16>
    %cst_49 = arith.constant dense<0.000000e+00> : vector<64x128xf32>
    %51 = tpu.matmul %48, %50, %cst_49 {dimension_numbers = #tpu.dot_dimension_numbers<[1], [0], [0], [1], [0, 0, 1, 1], [], []>} : vector<64x128xbf16>, vector<128x128xbf16>, vector<64x128xf32> -> vector<64x128xf32>
    %52 = arith.addf %45, %51 : vector<64x128xf32>
    %c0_50 = arith.constant 0 : index
    %c2_51 = arith.constant 2 : index
    %c1_52 = arith.constant 1 : index
    %c0_53 = arith.constant 0 : index
    %53 = vector.load %arg2[%c0_50, %c2_51, %c1_52, %c0_53] : memref<1x10x10x128xbf16, #tpu.memory_space<vmem>>, vector<1x8x8x128xbf16>
    %54 = vector.shape_cast %53 : vector<1x8x8x128xbf16> to vector<8x8x128xbf16>
    %55 = vector.shape_cast %54 : vector<8x8x128xbf16> to vector<64x128xbf16>
    %c7 = arith.constant 7 : index
    %c0_54 = arith.constant 0 : index
    %c0_55 = arith.constant 0 : index
    %56 = vector.load %arg3[%c7, %c0_54, %c0_55] : memref<9x128x128xbf16, #tpu.memory_space<vmem>>, vector<1x128x128xbf16>
    %57 = vector.shape_cast %56 : vector<1x128x128xbf16> to vector<128x128xbf16>
    %cst_56 = arith.constant dense<0.000000e+00> : vector<64x128xf32>
    %58 = tpu.matmul %55, %57, %cst_56 {dimension_numbers = #tpu.dot_dimension_numbers<[1], [0], [0], [1], [0, 0, 1, 1], [], []>} : vector<64x128xbf16>, vector<128x128xbf16>, vector<64x128xf32> -> vector<64x128xf32>
    %59 = arith.addf %52, %58 : vector<64x128xf32>
    %c0_57 = arith.constant 0 : index
    %c2_58 = arith.constant 2 : index
    %c2_59 = arith.constant 2 : index
    %c0_60 = arith.constant 0 : index
    %60 = vector.load %arg2[%c0_57, %c2_58, %c2_59, %c0_60] : memref<1x10x10x128xbf16, #tpu.memory_space<vmem>>, vector<1x8x8x128xbf16>
    %61 = vector.shape_cast %60 : vector<1x8x8x128xbf16> to vector<8x8x128xbf16>
    %62 = vector.shape_cast %61 : vector<8x8x128xbf16> to vector<64x128xbf16>
    %c8 = arith.constant 8 : index
    %c0_61 = arith.constant 0 : index
    %c0_62 = arith.constant 0 : index
    %63 = vector.load %arg3[%c8, %c0_61, %c0_62] : memref<9x128x128xbf16, #tpu.memory_space<vmem>>, vector<1x128x128xbf16>
    %64 = vector.shape_cast %63 : vector<1x128x128xbf16> to vector<128x128xbf16>
    %cst_63 = arith.constant dense<0.000000e+00> : vector<64x128xf32>
    %65 = tpu.matmul %62, %64, %cst_63 {dimension_numbers = #tpu.dot_dimension_numbers<[1], [0], [0], [1], [0, 0, 1, 1], [], []>} : vector<64x128xbf16>, vector<128x128xbf16>, vector<64x128xf32> -> vector<64x128xf32>
    %66 = arith.addf %59, %65 : vector<64x128xf32>
    %c0_64 = arith.constant 0 : index
    %c0_65 = arith.constant 0 : index
    %67 = vector.load %arg9[%c0_64, %c0_65] : memref<64x128xbf16, #tpu.memory_space<vmem>>, vector<64x128xbf16>
    %c0_66 = arith.constant 0 : index
    %c0_67 = arith.constant 0 : index
    %68 = vector.load %arg7[%c0_66, %c0_67] : memref<128x128xbf16, #tpu.memory_space<vmem>>, vector<128x128xbf16>
    %cst_68 = arith.constant dense<0.000000e+00> : vector<64x128xf32>
    %69 = tpu.matmul %67, %68, %cst_68 {dimension_numbers = #tpu.dot_dimension_numbers<[1], [0], [0], [1], [0, 0, 1, 1], [], []>} : vector<64x128xbf16>, vector<128x128xbf16>, vector<64x128xf32> -> vector<64x128xf32>
    %70 = arith.addf %66, %69 : vector<64x128xf32>
    %c0_69 = arith.constant 0 : index
    %c0_70 = arith.constant 0 : index
    %c0_71 = arith.constant 0 : index
    %71 = vector.load %arg8[%c0_69, %c0_70, %c0_71] : memref<1x64x128xf32, #tpu.memory_space<vmem>>, vector<1x64x128xf32>
    %72 = vector.shape_cast %71 : vector<1x64x128xf32> to vector<64x128xf32>
    %73 = vector.shape_cast %70 : vector<64x128xf32> to vector<1x64x128xf32>
    tpu.vector_store %arg8[%c0_69, %c0_70, %c0_71], %73 {strides = array<i32>} : memref<1x64x128xf32, #tpu.memory_space<vmem>>, vector<1x64x128xf32>,
    return
  }
  func.func @transform_0(%arg0: i32, %arg1: i32) -> (i32, i32, i32, i32) {
    %c0_i32 = arith.constant 0 : i32
    %c0_i32_0 = arith.constant 0 : i32
    %c0_i32_1 = arith.constant 0 : i32
    %c0_i32_2 = arith.constant 0 : i32
    return %arg0, %c0_i32, %c0_i32_0, %c0_i32_1 : i32, i32, i32, i32
  }
  func.func @transform_1(%arg0: i32, %arg1: i32) -> (i32, i32, i32) {
    %c0_i32 = arith.constant 0 : i32
    %c0_i32_0 = arith.constant 0 : i32
    %c0_i32_1 = arith.constant 0 : i32
    return %c0_i32, %c0_i32_0, %arg1 : i32, i32, i32
  }
  func.func @transform_2(%arg0: i32, %arg1: i32) -> (i32, i32, i32) {
    %c0_i32 = arith.constant 0 : i32
    %c0_i32_0 = arith.constant 0 : i32
    %c0_i32_1 = arith.constant 0 : i32
    return %arg0, %c0_i32, %c0_i32_0 : i32, i32, i32
  }
  func.func @transform_3(%arg0: i32, %arg1: i32) -> (i32, i32) {
    %c0_i32 = arith.constant 0 : i32
    %c0_i32_0 = arith.constant 0 : i32
    %c0_i32_1 = arith.constant 0 : i32
    return %c0_i32, %c0_i32_0 : i32, i32
  }
  func.func @transform_4(%arg0: i32, %arg1: i32) -> (i32, i32) {
    %c0_i32 = arith.constant 0 : i32
    %c0_i32_0 = arith.constant 0 : i32
    %c0_i32_1 = arith.constant 0 : i32
    return %c0_i32, %c0_i32_0 : i32, i32
  }
  func.func @transform_5(%arg0: i32, %arg1: i32) -> (i32, i32) {
    %c0_i32 = arith.constant 0 : i32
    %c0_i32_0 = arith.constant 0 : i32
    return %c0_i32, %arg1 : i32, i32
  }
  func.func @transform_6(%arg0: i32, %arg1: i32) -> (i32, i32, i32) {
    %c0_i32 = arith.constant 0 : i32
    %c0_i32_0 = arith.constant 0 : i32
    return %arg0, %c0_i32, %arg1 : i32, i32, i32
  }
}

</mosaic_0001>

<llo_original>
// kernel: basic_block_v2_forward.2
$region0: #{basic_block_v2_forward.2}
  #allocation0 [shape = 'u32[]', space=smem, size = 0x4, offset = 0x4, fixed_abs, tag = 'smem constant byte address 0x4 - core index']
  #allocation1 [shape = 'u32[72,128]{1,0:T(1,128)}', space=vmem, size = 0x9000, scoped, tag = 'internal scratch']
  #allocation2 [shape = 'bf16[4,9,9,128]{3,2,1,0:T(8,128)(2,1)}', space=vmem, size = 0x24000, scoped, tag = 'scratch operand']
  %s0 = inlined_call_operand.vmem [shape: bf16[2,4,9,9,128], index: 0, kind: input, shape index: {}]
  %s1 = inlined_call_operand.vmem [shape: bf16[9,128,128], index: 1, kind: input, shape index: {}]
  %s2 = inlined_call_operand.vmem [shape: f32[1,128], index: 2, kind: input, shape index: {}]
  %s3 = inlined_call_operand.vmem [shape: f32[1,128], index: 3, kind: input, shape index: {}]
  %s4 = inlined_call_operand.vmem [shape: f32[1,128], index: 4, kind: input, shape index: {}]
  %s5 = inlined_call_operand.vmem [shape: f32[1,128], index: 5, kind: input, shape index: {}]
  %s6 = inlined_call_operand.vmem [shape: bf16[2,10,10,128], index: 6, kind: output, shape index: {}]
  %s7 = sld [smem:[#allocation0]]
  $region61: #{basic_block_v2_forward.2} parent=0
    _
  %s9 = ssub.s32 1, %s7
  %s10 = scalar_select 0, %s9, %s7
  loop: start=0, step=1, limit=4
  $region2: #{basic_block_v2_forward.2} parent=0 // loop_pre_header
    _
  $region3: #{basic_block_v2_forward.2} parent=0 // loop_header
    %s12 = sphi 0, %s16
    %p13 = scmp.ge.s32.totalorder %s12, 4
    %s19 = sphi 0, %s31
    %s20 = sphi 0, %s27
    %s21 = sphi 0, %s19
    %s22 = sphi 0, %s20
    %s23 = sphi 0, %s21
    %s24 = sphi 0, %s22
    %s34 = sphi 0, %s36
    %s37 = sphi 0, %s34
    %s38 = sphi 0, %s37
    %s54 = sphi 0, %s38
    %s60 = sphi 0, %s62
    %s63 = sphi 0, %s60
    %s64 = sphi 0, %s63
    %s80 = sphi 0, %s64
    %s84 = sphi 0, %s84
    %s86 = sphi 0, %s84
    %s87 = sphi 0, %s86
    %s101 = sphi 0, %s87
    %s105 = sphi 0, %s105
    %s107 = sphi 0, %s105
    %s108 = sphi 0, %s107
    %s122 = sphi 0, %s108
    %s128 = sphi 0, %s130
    %s131 = sphi 0, %s128
    %s132 = sphi 0, %s131
    %s148 = sphi 0, %s132
    %s154 = sphi 0, %s156
    %s157 = sphi 0, %s154
    %s158 = sphi 0, %s157
    %s174 = sphi 0, %s158
    %s182 = sphi 0, %s184
    %s185 = sphi 0, %s182
    %s186 = sphi 0, %s185
    %s202 = sphi 0, %s186
  $region4: #{basic_block_v2_forward.2} parent=0 // loop_header_branch
    %15 = sbr.rel (%p13) target = $region8
  $region5: #{basic_block_v2_forward.2} parent=0 // loop_body
    %s17 = ssub.s32 %s12, 1
    %s18 = ssub.s32 %s12, 2
    %s25 = sadd.s32 1, %s20
    %p26 = scmp.ge.s32.totalorder %s25, 1
    %s27 = scalar_select %p26, 0, %s25
    %s28 = sadd.s32 1, %s19
    %s29 = scalar_select %p26, %s28, %s19
    %p30 = scmp.ge.s32.totalorder %s29, 2
    %s31 = scalar_select %p30, 0, %s29
    %s32 = ssub.s32 %s19, %s31
    %p33 = scmp.eq.s32.totalorder %s32, 0
    %s35 = sadd.s32 %s34, 1
    %s36 = scalar_select %p33, %s34, %s35
    %p39 = pneg %p33
    %p40 = scmp.eq.s32.totalorder %s12, 1
    %p41 = por %p39, %p40
    %p42 = scmp.ne.s32.totalorder %s34, %s37
    %p43 = scmp.eq.s32.totalorder %s12, 0
    %p44 = por %p42, %p43
    %p45 = scmp.ne.s32.totalorder %s34, %s37
    %p46 = scmp.eq.s32.totalorder %s17, 1
    %p47 = por %p45, %p46
    %p48 = scmp.ne.s32.totalorder %s37, %s38
    %p49 = scmp.eq.s32.totalorder %s17, 0
    %p50 = por %p48, %p49
    %p51 = scmp.ne.s32.totalorder %s37, %s38
    %p52 = scmp.eq.s32.totalorder %s18, 1
    %p53 = por %p51, %p52
    %p55 = scmp.ne.s32.totalorder %s38, %s54
    %p56 = scmp.eq.s32.totalorder %s18, 0
    %p57 = por %p55, %p56
    %s58 = ssub.s32 %s20, %s27
    %p59 = scmp.eq.s32.totalorder %s58, 0
    %s61 = sadd.s32 %s60, 1
    %s62 = scalar_select %p59, %s60, %s61
    %p65 = pneg %p59
    %p66 = scmp.eq.s32.totalorder %s12, 1
    %p67 = por %p65, %p66
    %p68 = scmp.ne.s32.totalorder %s60, %s63
    %p69 = scmp.eq.s32.totalorder %s12, 0
    %p70 = por %p68, %p69
    %p71 = scmp.ne.s32.totalorder %s60, %s63
    %p72 = scmp.eq.s32.totalorder %s17, 1
    %p73 = por %p71, %p72
    %p74 = scmp.ne.s32.totalorder %s63, %s64
    %p75 = scmp.eq.s32.totalorder %s17, 0
    %p76 = por %p74, %p75
    %p77 = scmp.ne.s32.totalorder %s63, %s64
    %p78 = scmp.eq.s32.totalorder %s18, 1
    %p79 = por %p77, %p78
    %p81 = scmp.ne.s32.totalorder %s64, %s80
    %p82 = scmp.eq.s32.totalorder %s18, 0
    %p83 = por %p81, %p82
    %s85 = sadd.s32 %s84, 1
    %p88 = scmp.eq.s32.totalorder %s12, 1
    %p89 = scmp.ne.s32.totalorder %s84, %s86
    %p90 = scmp.eq.s32.totalorder %s12, 0
    %p91 = por %p89, %p90
    %p92 = scmp.ne.s32.totalorder %s84, %s86
    %p93 = scmp.eq.s32.totalorder %s17, 1
    %p94 = por %p92, %p93
    %p95 = scmp.ne.s32.totalorder %s86, %s87
    %p96 = scmp.eq.s32.totalorder %s17, 0
    %p97 = por %p95, %p96
    %p98 = scmp.ne.s32.totalorder %s86, %s87
    %p99 = scmp.eq.s32.totalorder %s18, 1
    %p100 = por %p98, %p99
    %p102 = scmp.ne.s32.totalorder %s87, %s101
    %p103 = scmp.eq.s32.totalorder %s18, 0
    %p104 = por %p102, %p103
    %s106 = sadd.s32 %s105, 1
    %p109 = scmp.eq.s32.totalorder %s12, 1
    %p110 = scmp.ne.s32.totalorder %s105, %s107
    %p111 = scmp.eq.s32.totalorder %s12, 0
    %p112 = por %p110, %p111
    %p113 = scmp.ne.s32.totalorder %s105, %s107
    %p114 = scmp.eq.s32.totalorder %s17, 1
    %p115 = por %p113, %p114
    %p116 = scmp.ne.s32.totalorder %s107, %s108
    %p117 = scmp.eq.s32.totalorder %s17, 0
    %p118 = por %p116, %p117
    %p119 = scmp.ne.s32.totalorder %s107, %s108
    %p120 = scmp.eq.s32.totalorder %s18, 1
    %p121 = por %p119, %p120
    %p123 = scmp.ne.s32.totalorder %s108, %s122
    %p124 = scmp.eq.s32.totalorder %s18, 0
    %p125 = por %p123, %p124
    %s126 = ssub.s32 %s20, %s27
    %p127 = scmp.eq.s32.totalorder %s126, 0
    %s129 = sadd.s32 %s128, 1
    %s130 = scalar_select %p127, %s128, %s129
    %p133 = pneg %p127
    %p134 = scmp.eq.s32.totalorder %s12, 1
    %p135 = por %p133, %p134
    %p136 = scmp.ne.s32.totalorder %s128, %s131
    %p137 = scmp.eq.s32.totalorder %s12, 0
    %p138 = por %p136, %p137
    %p139 = scmp.ne.s32.totalorder %s128, %s131
    %p140 = scmp.eq.s32.totalorder %s17, 1
    %p141 = por %p139, %p140
    %p142 = scmp.ne.s32.totalorder %s131, %s132
    %p143 = scmp.eq.s32.totalorder %s17, 0
    %p144 = por %p142, %p143
    %p145 = scmp.ne.s32.totalorder %s131, %s132
    %p146 = scmp.eq.s32.totalorder %s18, 1
    %p147 = por %p145, %p146
    %p149 = scmp.ne.s32.totalorder %s132, %s148
    %p150 = scmp.eq.s32.totalorder %s18, 0
    %p151 = por %p149, %p150
    %s152 = ssub.s32 %s20, %s27
    %p153 = scmp.eq.s32.totalorder %s152, 0
    %s155 = sadd.s32 %s154, 1
    %s156 = scalar_select %p153, %s154, %s155
    %p159 = pneg %p153
    %p160 = scmp.eq.s32.totalorder %s12, 1
    %p161 = por %p159, %p160
    %p162 = scmp.ne.s32.totalorder %s154, %s157
    %p163 = scmp.eq.s32.totalorder %s12, 0
    %p164 = por %p162, %p163
    %p165 = scmp.ne.s32.totalorder %s154, %s157
    %p166 = scmp.eq.s32.totalorder %s17, 1
    %p167 = por %p165, %p166
    %p168 = scmp.ne.s32.totalorder %s157, %s158
    %p169 = scmp.eq.s32.totalorder %s17, 0
    %p170 = por %p168, %p169
    %p171 = scmp.ne.s32.totalorder %s157, %s158
    %p172 = scmp.eq.s32.totalorder %s18, 1
    %p173 = por %p171, %p172
    %p175 = scmp.ne.s32.totalorder %s158, %s174
    %p176 = scmp.eq.s32.totalorder %s18, 0
    %p177 = por %p175, %p176
    %s178 = ssub.s32 %s19, %s31
    %s179 = ssub.s32 %s20, %s27
    %s180 = sor.u32 %s178, %s179
    %p181 = scmp.eq.s32.totalorder %s180, 0
    %s183 = sadd.s32 %s182, 1
    %s184 = scalar_select %p181, %s182, %s183
    %p187 = pneg %p181
    %p188 = scmp.eq.s32.totalorder %s12, 1
    %p189 = por %p187, %p188
    %p190 = scmp.ne.s32.totalorder %s182, %s185
    %p191 = scmp.eq.s32.totalorder %s12, 0
    %p192 = por %p190, %p191
    %p193 = scmp.ne.s32.totalorder %s182, %s185
    %p194 = scmp.eq.s32.totalorder %s17, 1
    %p195 = por %p193, %p194
    %p196 = scmp.ne.s32.totalorder %s185, %s186
    %p197 = scmp.eq.s32.totalorder %s17, 0
    %p198 = por %p196, %p197
    %p199 = scmp.ne.s32.totalorder %s185, %s186
    %p200 = scmp.eq.s32.totalorder %s18, 1
    %p201 = por %p199, %p200
    %p203 = scmp.ne.s32.totalorder %s186, %s202
    %p204 = scmp.eq.s32.totalorder %s18, 0
    %p205 = por %p203, %p204
    %p206 = scmp.le.s32.totalorder 1, %s12
    %p207 = scmp.lt.s32.totalorder %s12, 3
    %p208 = pnand %p206, %p207
    %p209 = pneg %p208
    // Predicated region
    $region9: #{basic_block_v2_forward.2} parent=5 // pred_check
      _
    $region10: #{basic_block_v2_forward.2} parent=5 // pred_check_branch
      %211 = sbr.rel (%p208) target = $region12
    $region11: #{basic_block_v2_forward.2} parent=5 // pred_region
      %s212 = ssub.s32 %s12, 1
      // Predicated region
      $region13: #{basic_block_v2_forward.2} parent=11 // pred_check
        %p213 = pneg %p76
      $region14: #{basic_block_v2_forward.2} parent=11 // pred_check_branch
        %215 = sbr.rel (%p213) target = $region16
      $region15: #{basic_block_v2_forward.2} parent=11 // pred_region
        %p216 = scmp.lt.s32.totalorder %s22, 0
        %s217 = scalar_select %p216, %s22, 0
        %s218 = smul.addr %s217, 4
        %s219 = scalar_lea.vmem %s1, %s218
      $region16: #{basic_block_v2_forward.2} parent=11 // pred_fallthru
        _
      // Predicated region
      $region17: #{basic_block_v2_forward.2} parent=11 // pred_check
        %p220 = pneg %p97
      $region18: #{basic_block_v2_forward.2} parent=11 // pred_check_branch
        %222 = sbr.rel (%p220) target = $region20
      $region19: #{basic_block_v2_forward.2} parent=11 // pred_region
        _
      $region20: #{basic_block_v2_forward.2} parent=11 // pred_fallthru
        _
      // Predicated region
      $region21: #{basic_block_v2_forward.2} parent=11 // pred_check
        %p223 = pneg %p118
      $region22: #{basic_block_v2_forward.2} parent=11 // pred_check_branch
        %225 = sbr.rel (%p223) target = $region24
      $region23: #{basic_block_v2_forward.2} parent=11 // pred_region
        _
      $region24: #{basic_block_v2_forward.2} parent=11 // pred_fallthru
        _
      // Predicated region
      $region25: #{basic_block_v2_forward.2} parent=11 // pred_check
        %p226 = pneg %p144
      $region26: #{basic_block_v2_forward.2} parent=11 // pred_check_branch
        %228 = sbr.rel (%p226) target = $region28
      $region27: #{basic_block_v2_forward.2} parent=11 // pred_region
        %p229 = scmp.lt.s32.totalorder %s22, 0
        %s230 = scalar_select %p229, %s22, 0
        %s231 = scalar_lea.vmem %s4, %s230
      $region28: #{basic_block_v2_forward.2} parent=11 // pred_fallthru
        _
      // Predicated region
      $region29: #{basic_block_v2_forward.2} parent=11 // pred_check
        %p232 = pneg %p170
      $region30: #{basic_block_v2_forward.2} parent=11 // pred_check_branch
        %234 = sbr.rel (%p232) target = $region32
      $region31: #{basic_block_v2_forward.2} parent=11 // pred_region
        %p235 = scmp.lt.s32.totalorder %s22, 0
        %s236 = scalar_select %p235, %s22, 0
        %s237 = scalar_lea.vmem %s5, %s236
      $region32: #{basic_block_v2_forward.2} parent=11 // pred_fallthru
        _
    $region12: #{basic_block_v2_forward.2} parent=5 // pred_fallthru
      _
    %p238 = scmp.lt.s32.totalorder %s12, 2
    // Predicated region
    $region33: #{basic_block_v2_forward.2} parent=5 // pred_check
      %p239 = pneg %p238
    $region34: #{basic_block_v2_forward.2} parent=5 // pred_check_branch
      %241 = sbr.rel (%p239) target = $region36
    $region35: #{basic_block_v2_forward.2} parent=5 // pred_region
      // Predicated region
      $region37: #{basic_block_v2_forward.2} parent=35 // pred_check
        %p242 = pneg %p44
      $region38: #{basic_block_v2_forward.2} parent=35 // pred_check_branch
        %244 = sbr.rel (%p242) target = $region40
      $region39: #{basic_block_v2_forward.2} parent=35 // pred_region
        %p245 = scmp.lt.s32.totalorder %s19, 1
        %s246 = scalar_select %p245, %s19, 1
        %s247 = smul.addr %s246, 72
        %s248 = smul.addr %s247, 4
        %s249 = scalar_lea.vmem %s0, %s248
      $region40: #{basic_block_v2_forward.2} parent=35 // pred_fallthru
        _
    $region36: #{basic_block_v2_forward.2} parent=5 // pred_fallthru
      _
    %p250 = scmp.le.s32.totalorder 1, %s12
    %p251 = scmp.lt.s32.totalorder %s12, 3
    %p252 = pnand %p250, %p251
    %p253 = pneg %p252
    // Predicated region
    $region41: #{basic_block_v2_forward.2} parent=5 // pred_check
      _
    $region42: #{basic_block_v2_forward.2} parent=5 // pred_check_branch
      %255 = sbr.rel (%p252) target = $region44
    $region43: #{basic_block_v2_forward.2} parent=5 // pred_region
      %s256 = ssub.s32 %s12, 1
      %p257 = scmp.lt.s32.totalorder %s21, 1
      %s258 = scalar_select %p257, %s21, 1
      %s259 = smul.addr %s258, 72
      %s260 = smul.addr %s259, 4
      %s261 = scalar_lea.vmem %s0, %s260
      %p262 = pneg %p50
      %p263 = pneg %p47
      %p264 = scmp.lt.s32.totalorder %s22, 0
      %s265 = scalar_select %p264, %s22, 0
      %s266 = smul.addr %s265, 4
      %s267 = scalar_lea.vmem %s1, %s266
      %p268 = pneg %p76
      %p269 = pneg %p73
      %p270 = pneg %p97
      %p271 = pneg %p94
      %p272 = pneg %p118
      %p273 = pneg %p115
      %p274 = scmp.lt.s32.totalorder %s22, 0
      %s275 = scalar_select %p274, %s22, 0
      %s276 = scalar_lea.vmem %s4, %s275
      %p277 = pneg %p144
      %p278 = pneg %p141
      %p279 = scmp.lt.s32.totalorder %s22, 0
      %s280 = scalar_select %p279, %s22, 0
      %s281 = scalar_lea.vmem %s5, %s280
      %p282 = pneg %p170
      %p283 = pneg %p167
      %p284 = pneg %p198
      %p285 = pneg %p195
      %p286 = scmp.lt.s32.totalorder %s21, 1
      %s287 = scalar_select %p286, %s21, 1
      %p288 = scmp.lt.s32.totalorder %s22, 0
      %s289 = scalar_select %p288, %s22, 0
      %s290 = smul.addr %s287, 20
      %s291 = sadd.s32 %s289, %s290
      %s292 = smul.addr %s291, 4
      %s293 = scalar_lea.vmem %s6, %s292
      %p294 = scmp.lt.s32.totalorder %s21, 1
      %s295 = scalar_select %p294, %s21, 1
      %s296 = smul.addr %s295, 72
      %s297 = smul.addr %s296, 4
      %s298 = scalar_lea.vmem %s0, %s297
      %p299 = scmp.lt.s32.totalorder %s22, 0
      %s300 = scalar_select %p299, %s22, 0
      %s301 = smul.addr %s300, 4
      %s302 = scalar_lea.vmem %s1, %s301
      %p303 = scmp.lt.s32.totalorder %s22, 0
      %s304 = scalar_select %p303, %s22, 0
      %s305 = scalar_lea.vmem %s4, %s304
      %p306 = scmp.lt.s32.totalorder %s22, 0
      %s307 = scalar_select %p306, %s22, 0
      %s308 = scalar_lea.vmem %s5, %s307
      %p309 = scmp.lt.s32.totalorder %s21, 1
      %s310 = scalar_select %p309, %s21, 1
      %p311 = scmp.lt.s32.totalorder %s22, 0
      %s312 = scalar_select %p311, %s22, 0
      %s313 = smul.addr %s310, 20
      %s314 = sadd.s32 %s312, %s313
      %s315 = smul.addr %s314, 4
      %s316 = scalar_lea.vmem %s6, %s315
      %p318 = scmp.eq.s32.totalorder %s22, 0
      // Predicated region
      $region45: #{basic_block_v2_forward.2} parent=43 // pred_check
        %p319 = pneg %p318
      $region46: #{basic_block_v2_forward.2} parent=43 // pred_check_branch
        %321 = sbr.rel (%p319) target = $region48
      $region47: #{basic_block_v2_forward.2} parent=43 // pred_region
        %v322 = vld [vmem:[%s2] sm:$0x1]
        %v323 = vld [vmem:[%s3] sm:$0x1]
        %v324 = vld [vmem:[%s298] sm:$0xf]
        %v325 = vld [vmem:[%s298 + $0x4] sm:$0x1]
        %v326 = vld [vmem:[%s298 + $0x8] sm:$0xf]
        %v327 = vld [vmem:[%s298 + $0xc] sm:$0x1]
        %v328 = vld [vmem:[%s298 + $0x10] sm:$0xf]
        %v329 = vld [vmem:[%s298 + $0x14] sm:$0x1]
        %v330 = vld [vmem:[%s298 + $0x18] sm:$0xf]
        %v331 = vld [vmem:[%s298 + $0x1c] sm:$0x1]
        %v332 = vld [vmem:[%s298 + $0x20] sm:$0xf]
        %v333 = vld [vmem:[%s298 + $0x24] sm:$0x1]
        %v334 = vld [vmem:[%s298 + $0x28] sm:$0xf]
        %v335 = vld [vmem:[%s298 + $0x2c] sm:$0x1]
        %v336 = vld [vmem:[%s298 + $0x30] sm:$0xf]
        %v337 = vld [vmem:[%s298 + $0x34] sm:$0x1]
        %v338 = vld [vmem:[%s298 + $0x38] sm:$0xf]
        %v339 = vld [vmem:[%s298 + $0x3c] sm:$0x1]
        %v340 = vld [vmem:[%s298 + $0x40] sm:$0xf]
        %v341 = vld [vmem:[%s298 + $0x44] sm:$0x1]
        %v342 = vunpack.c.l.bf16 %v324
        %v343 = vunpack.c.l.bf16 %v325
        %v344 = vunpack.c.l.bf16 %v326
        %v345 = vunpack.c.l.bf16 %v327
        %v346 = vunpack.c.l.bf16 %v328
        %v347 = vunpack.c.l.bf16 %v329
        %v348 = vunpack.c.l.bf16 %v330
        %v349 = vunpack.c.l.bf16 %v331
        %v350 = vunpack.c.l.bf16 %v332
        %v351 = vunpack.c.l.bf16 %v333
        %v352 = vunpack.c.l.bf16 %v334
        %v353 = vunpack.c.l.bf16 %v335
        %v354 = vunpack.c.l.bf16 %v336
        %v355 = vunpack.c.l.bf16 %v337
        %v356 = vunpack.c.l.bf16 %v338
        %v357 = vunpack.c.l.bf16 %v339
        %v358 = vunpack.c.l.bf16 %v340
        %v359 = vunpack.c.l.bf16 %v341
        %v361 = vperm.slane %v322, 0
        %v363 = vmul.f32 %v342, %v361
        %v364 = vmul.f32 %v343, %v361
        %v365 = vmul.f32 %v344, %v361
        %v366 = vmul.f32 %v345, %v361
        %v367 = vmul.f32 %v346, %v361
        %v368 = vmul.f32 %v347, %v361
        %v369 = vmul.f32 %v348, %v361
        %v370 = vmul.f32 %v349, %v361
        %v371 = vmul.f32 %v350, %v361
        %v372 = vmul.f32 %v351, %v361
        %v373 = vmul.f32 %v352, %v361
        %v374 = vmul.f32 %v353, %v361
        %v375 = vmul.f32 %v354, %v361
        %v376 = vmul.f32 %v355, %v361
        %v377 = vmul.f32 %v356, %v361
        %v378 = vmul.f32 %v357, %v361
        %v379 = vmul.f32 %v358, %v361
        %v380 = vmul.f32 %v359, %v361
        %v382 = vperm.slane %v323, 0
        %v384 = vadd.f32 %v363, %v382
        %v385 = vadd.f32 %v364, %v382
        %v386 = vadd.f32 %v365, %v382
        %v387 = vadd.f32 %v366, %v382
        %v388 = vadd.f32 %v367, %v382
        %v389 = vadd.f32 %v368, %v382
        %v390 = vadd.f32 %v369, %v382
        %v391 = vadd.f32 %v370, %v382
        %v392 = vadd.f32 %v371, %v382
        %v393 = vadd.f32 %v372, %v382
        %v394 = vadd.f32 %v373, %v382
        %v395 = vadd.f32 %v374, %v382
        %v396 = vadd.f32 %v375, %v382
        %v397 = vadd.f32 %v376, %v382
        %v398 = vadd.f32 %v377, %v382
        %v399 = vadd.f32 %v378, %v382
        %v400 = vadd.f32 %v379, %v382
        %v401 = vadd.f32 %v380, %v382
        %v402 = vmax.f32 %v384, 0.0
        %v403 = vmax.f32 %v385, 0.0
        %v404 = vmax.f32 %v386, 0.0
        %v405 = vmax.f32 %v387, 0.0
        %v406 = vmax.f32 %v388, 0.0
        %v407 = vmax.f32 %v389, 0.0
        %v408 = vmax.f32 %v390, 0.0
        %v409 = vmax.f32 %v391, 0.0
        %v410 = vmax.f32 %v392, 0.0
        %v411 = vmax.f32 %v393, 0.0
        %v412 = vmax.f32 %v394, 0.0
        %v413 = vmax.f32 %v395, 0.0
        %v414 = vmax.f32 %v396, 0.0
        %v415 = vmax.f32 %v397, 0.0
        %v416 = vmax.f32 %v398, 0.0
        %v417 = vmax.f32 %v399, 0.0
        %v418 = vmax.f32 %v400, 0.0
        %v419 = vmax.f32 %v401, 0.0
        %v420 = vpack.c.bf16 %v402, %v402
        %v421 = vpack.c.bf16 %v403, %v403
        %v422 = vpack.c.bf16 %v404, %v404
        %v423 = vpack.c.bf16 %v405, %v405
        %v424 = vpack.c.bf16 %v406, %v406
        %v425 = vpack.c.bf16 %v407, %v407
        %v426 = vpack.c.bf16 %v408, %v408
        %v427 = vpack.c.bf16 %v409, %v409
        %v428 = vpack.c.bf16 %v410, %v410
        %v429 = vpack.c.bf16 %v411, %v411
        %v430 = vpack.c.bf16 %v412, %v412
        %v431 = vpack.c.bf16 %v413, %v413
        %v432 = vpack.c.bf16 %v414, %v414
        %v433 = vpack.c.bf16 %v415, %v415
        %v434 = vpack.c.bf16 %v416, %v416
        %v435 = vpack.c.bf16 %v417, %v417
        %v436 = vpack.c.bf16 %v418, %v418
        %v437 = vpack.c.bf16 %v419, %v419
        %438 = vst [vmem:[#allocation2] sm:$0xf] %v420
        %vm439 = vcmask 1040384
        %vm440 = vsmask.f32 256
        %vm441 = vmand %vm439, %vm440
        %v442 = vld [vmem:[#allocation2 + $0x4] sm:$0x1]
        %v443 = vsel %vm441, %v421, %v442
        %444 = vst [vmem:[#allocation2 + $0x4] sm:$0x1] %v443
        %445 = vst [vmem:[#allocation2 + $0x8] sm:$0xf] %v422
        %v446 = vld [vmem:[#allocation2 + $0xc] sm:$0x1]
        %v447 = vsel %vm441, %v423, %v446
        %448 = vst [vmem:[#allocation2 + $0xc] sm:$0x1] %v447
        %449 = vst [vmem:[#allocation2 + $0x10] sm:$0xf] %v424
        %v450 = vld [vmem:[#allocation2 + $0x14] sm:$0x1]
        %v451 = vsel %vm441, %v425, %v450
        %452 = vst [vmem:[#allocation2 + $0x14] sm:$0x1] %v451
        %453 = vst [vmem:[#allocation2 + $0x18] sm:$0xf] %v426
        %v454 = vld [vmem:[#allocation2 + $0x1c] sm:$0x1]
        %v455 = vsel %vm441, %v427, %v454
        %456 = vst [vmem:[#allocation2 + $0x1c] sm:$0x1] %v455
        %457 = vst [vmem:[#allocation2 + $0x20] sm:$0xf] %v428
        %v458 = vld [vmem:[#allocation2 + $0x24] sm:$0x1]
        %v459 = vsel %vm441, %v429, %v458
        %460 = vst [vmem:[#allocation2 + $0x24] sm:$0x1] %v459
        %461 = vst [vmem:[#allocation2 + $0x28] sm:$0xf] %v430
        %v462 = vld [vmem:[#allocation2 + $0x2c] sm:$0x1]
        %v463 = vsel %vm441, %v431, %v462
        %464 = vst [vmem:[#allocation2 + $0x2c] sm:$0x1] %v463
        %465 = vst [vmem:[#allocation2 + $0x30] sm:$0xf] %v432
        %v466 = vld [vmem:[#allocation2 + $0x34] sm:$0x1]
        %v467 = vsel %vm441, %v433, %v466
        %468 = vst [vmem:[#allocation2 + $0x34] sm:$0x1] %v467
        %469 = vst [vmem:[#allocation2 + $0x38] sm:$0xf] %v434
        %v470 = vld [vmem:[#allocation2 + $0x3c] sm:$0x1]
        %v471 = vsel %vm441, %v435, %v470
        %472 = vst [vmem:[#allocation2 + $0x3c] sm:$0x1] %v471
        %473 = vst [vmem:[#allocation2 + $0x40] sm:$0xf] %v436
        %v474 = vld [vmem:[#allocation2 + $0x44] sm:$0x1]
        %v475 = vsel %vm441, %v437, %v474
        %476 = vst [vmem:[#allocation2 + $0x44] sm:$0x1] %v475
        %s477 = scalar_lea.vmem %s298, 72
        %v478 = vld [vmem:[%s477] sm:$0xf]
        %v479 = vld [vmem:[%s477 + $0x4] sm:$0x1]
        %v480 = vld [vmem:[%s477 + $0x8] sm:$0xf]
        %v481 = vld [vmem:[%s477 + $0xc] sm:$0x1]
        %v482 = vld [vmem:[%s477 + $0x10] sm:$0xf]
        %v483 = vld [vmem:[%s477 + $0x14] sm:$0x1]
        %v484 = vld [vmem:[%s477 + $0x18] sm:$0xf]
        %v485 = vld [vmem:[%s477 + $0x1c] sm:$0x1]
        %v486 = vld [vmem:[%s477 + $0x20] sm:$0xf]
        %v487 = vld [vmem:[%s477 + $0x24] sm:$0x1]
        %v488 = vld [vmem:[%s477 + $0x28] sm:$0xf]
        %v489 = vld [vmem:[%s477 + $0x2c] sm:$0x1]
        %v490 = vld [vmem:[%s477 + $0x30] sm:$0xf]
        %v491 = vld [vmem:[%s477 + $0x34] sm:$0x1]
        %v492 = vld [vmem:[%s477 + $0x38] sm:$0xf]
        %v493 = vld [vmem:[%s477 + $0x3c] sm:$0x1]
        %v494 = vld [vmem:[%s477 + $0x40] sm:$0xf]
        %v495 = vld [vmem:[%s477 + $0x44] sm:$0x1]
        %v496 = vunpack.c.l.bf16 %v478
        %v497 = vunpack.c.l.bf16 %v479
        %v498 = vunpack.c.l.bf16 %v480
        %v499 = vunpack.c.l.bf16 %v481
        %v500 = vunpack.c.l.bf16 %v482
        %v501 = vunpack.c.l.bf16 %v483
        %v502 = vunpack.c.l.bf16 %v484
        %v503 = vunpack.c.l.bf16 %v485
        %v504 = vunpack.c.l.bf16 %v486
        %v505 = vunpack.c.l.bf16 %v487
        %v506 = vunpack.c.l.bf16 %v488
        %v507 = vunpack.c.l.bf16 %v489
        %v508 = vunpack.c.l.bf16 %v490
        %v509 = vunpack.c.l.bf16 %v491
        %v510 = vunpack.c.l.bf16 %v492
        %v511 = vunpack.c.l.bf16 %v493
        %v512 = vunpack.c.l.bf16 %v494
        %v513 = vunpack.c.l.bf16 %v495
        %v514 = vmul.f32 %v496, %v361
        %v515 = vmul.f32 %v497, %v361
        %v516 = vmul.f32 %v498, %v361
        %v517 = vmul.f32 %v499, %v361
        %v518 = vmul.f32 %v500, %v361
        %v519 = vmul.f32 %v501, %v361
        %v520 = vmul.f32 %v502, %v361
        %v521 = vmul.f32 %v503, %v361
        %v522 = vmul.f32 %v504, %v361
        %v523 = vmul.f32 %v505, %v361
        %v524 = vmul.f32 %v506, %v361
        %v525 = vmul.f32 %v507, %v361
        %v526 = vmul.f32 %v508, %v361
        %v527 = vmul.f32 %v509, %v361
        %v528 = vmul.f32 %v510, %v361
        %v529 = vmul.f32 %v511, %v361
        %v530 = vmul.f32 %v512, %v361
        %v531 = vmul.f32 %v513, %v361
        %v532 = vadd.f32 %v514, %v382
        %v533 = vadd.f32 %v515, %v382
        %v534 = vadd.f32 %v516, %v382
        %v535 = vadd.f32 %v517, %v382
        %v536 = vadd.f32 %v518, %v382
        %v537 = vadd.f32 %v519, %v382
        %v538 = vadd.f32 %v520, %v382
        %v539 = vadd.f32 %v521, %v382
        %v540 = vadd.f32 %v522, %v382
        %v541 = vadd.f32 %v523, %v382
        %v542 = vadd.f32 %v524, %v382
        %v543 = vadd.f32 %v525, %v382
        %v544 = vadd.f32 %v526, %v382
        %v545 = vadd.f32 %v527, %v382
        %v546 = vadd.f32 %v528, %v382
        %v547 = vadd.f32 %v529, %v382
        %v548 = vadd.f32 %v530, %v382
        %v549 = vadd.f32 %v531, %v382
        %v550 = vmax.f32 %v532, 0.0
        %v551 = vmax.f32 %v533, 0.0
        %v552 = vmax.f32 %v534, 0.0
        %v553 = vmax.f32 %v535, 0.0
        %v554 = vmax.f32 %v536, 0.0
        %v555 = vmax.f32 %v537, 0.0
        %v556 = vmax.f32 %v538, 0.0
        %v557 = vmax.f32 %v539, 0.0
        %v558 = vmax.f32 %v540, 0.0
        %v559 = vmax.f32 %v541, 0.0
        %v560 = vmax.f32 %v542, 0.0
        %v561 = vmax.f32 %v543, 0.0
        %v562 = vmax.f32 %v544, 0.0
        %v563 = vmax.f32 %v545, 0.0
        %v564 = vmax.f32 %v546, 0.0
        %v565 = vmax.f32 %v547, 0.0
        %v566 = vmax.f32 %v548, 0.0
        %v567 = vmax.f32 %v549, 0.0
        %v568 = vpack.c.bf16 %v550, %v550
        %v569 = vpack.c.bf16 %v551, %v551
        %v570 = vpack.c.bf16 %v552, %v552
        %v571 = vpack.c.bf16 %v553, %v553
        %v572 = vpack.c.bf16 %v554, %v554
        %v573 = vpack.c.bf16 %v555, %v555
        %v574 = vpack.c.bf16 %v556, %v556
        %v575 = vpack.c.bf16 %v557, %v557
        %v576 = vpack.c.bf16 %v558, %v558
        %v577 = vpack.c.bf16 %v559, %v559
        %v578 = vpack.c.bf16 %v560, %v560
        %v579 = vpack.c.bf16 %v561, %v561
        %v580 = vpack.c.bf16 %v562, %v562
        %v581 = vpack.c.bf16 %v563, %v563
        %v582 = vpack.c.bf16 %v564, %v564
        %v583 = vpack.c.bf16 %v565, %v565
        %v584 = vpack.c.bf16 %v566, %v566
        %v585 = vpack.c.bf16 %v567, %v567
        %s586 = scalar_lea.vmem [#allocation2], 72
        %587 = vst [vmem:[%s586] sm:$0xf] %v568
        %v588 = vld [vmem:[%s586 + $0x4] sm:$0x1]
        %v589 = vsel %vm441, %v569, %v588
        %590 = vst [vmem:[%s586 + $0x4] sm:$0x1] %v589
        %591 = vst [vmem:[%s586 + $0x8] sm:$0xf] %v570
        %v592 = vld [vmem:[%s586 + $0xc] sm:$0x1]
        %v593 = vsel %vm441, %v571, %v592
        %594 = vst [vmem:[%s586 + $0xc] sm:$0x1] %v593
        %595 = vst [vmem:[%s586 + $0x10] sm:$0xf] %v572
        %v596 = vld [vmem:[%s586 + $0x14] sm:$0x1]
        %v597 = vsel %vm441, %v573, %v596
        %598 = vst [vmem:[%s586 + $0x14] sm:$0x1] %v597
        %599 = vst [vmem:[%s586 + $0x18] sm:$0xf] %v574
        %v600 = vld [vmem:[%s586 + $0x1c] sm:$0x1]
        %v601 = vsel %vm441, %v575, %v600
        %602 = vst [vmem:[%s586 + $0x1c] sm:$0x1] %v601
        %603 = vst [vmem:[%s586 + $0x20] sm:$0xf] %v576
        %v604 = vld [vmem:[%s586 + $0x24] sm:$0x1]
        %v605 = vsel %vm441, %v577, %v604
        %606 = vst [vmem:[%s586 + $0x24] sm:$0x1] %v605
        %607 = vst [vmem:[%s586 + $0x28] sm:$0xf] %v578
        %v608 = vld [vmem:[%s586 + $0x2c] sm:$0x1]
        %v609 = vsel %vm441, %v579, %v608
        %610 = vst [vmem:[%s586 + $0x2c] sm:$0x1] %v609
        %611 = vst [vmem:[%s586 + $0x30] sm:$0xf] %v580
        %v612 = vld [vmem:[%s586 + $0x34] sm:$0x1]
        %v613 = vsel %vm441, %v581, %v612
        %614 = vst [vmem:[%s586 + $0x34] sm:$0x1] %v613
        %615 = vst [vmem:[%s586 + $0x38] sm:$0xf] %v582
        %v616 = vld [vmem:[%s586 + $0x3c] sm:$0x1]
        %v617 = vsel %vm441, %v583, %v616
        %618 = vst [vmem:[%s586 + $0x3c] sm:$0x1] %v617
        %619 = vst [vmem:[%s586 + $0x40] sm:$0xf] %v584
        %v620 = vld [vmem:[%s586 + $0x44] sm:$0x1]
        %v621 = vsel %vm441, %v585, %v620
        %622 = vst [vmem:[%s586 + $0x44] sm:$0x1] %v621
        %s623 = scalar_lea.vmem %s298, 144
        %v624 = vld [vmem:[%s623] sm:$0xf]
        %v625 = vld [vmem:[%s623 + $0x4] sm:$0x1]
        %v626 = vld [vmem:[%s623 + $0x8] sm:$0xf]
        %v627 = vld [vmem:[%s623 + $0xc] sm:$0x1]
        %v628 = vld [vmem:[%s623 + $0x10] sm:$0xf]
        %v629 = vld [vmem:[%s623 + $0x14] sm:$0x1]
        %v630 = vld [vmem:[%s623 + $0x18] sm:$0xf]
        %v631 = vld [vmem:[%s623 + $0x1c] sm:$0x1]
        %v632 = vld [vmem:[%s623 + $0x20] sm:$0xf]
        %v633 = vld [vmem:[%s623 + $0x24] sm:$0x1]
        %v634 = vld [vmem:[%s623 + $0x28] sm:$0xf]
        %v635 = vld [vmem:[%s623 + $0x2c] sm:$0x1]
        %v636 = vld [vmem:[%s623 + $0x30] sm:$0xf]
        %v637 = vld [vmem:[%s623 + $0x34] sm:$0x1]
        %v638 = vld [vmem:[%s623 + $0x38] sm:$0xf]
        %v639 = vld [vmem:[%s623 + $0x3c] sm:$0x1]
        %v640 = vld [vmem:[%s623 + $0x40] sm:$0xf]
        %v641 = vld [vmem:[%s623 + $0x44] sm:$0x1]
        %v642 = vunpack.c.l.bf16 %v624
        %v643 = vunpack.c.l.bf16 %v625
        %v644 = vunpack.c.l.bf16 %v626
        %v645 = vunpack.c.l.bf16 %v627
        %v646 = vunpack.c.l.bf16 %v628
        %v647 = vunpack.c.l.bf16 %v629
        %v648 = vunpack.c.l.bf16 %v630
        %v649 = vunpack.c.l.bf16 %v631
        %v650 = vunpack.c.l.bf16 %v632
        %v651 = vunpack.c.l.bf16 %v633
        %v652 = vunpack.c.l.bf16 %v634
        %v653 = vunpack.c.l.bf16 %v635
        %v654 = vunpack.c.l.bf16 %v636
        %v655 = vunpack.c.l.bf16 %v637
        %v656 = vunpack.c.l.bf16 %v638
        %v657 = vunpack.c.l.bf16 %v639
        %v658 = vunpack.c.l.bf16 %v640
        %v659 = vunpack.c.l.bf16 %v641
        %v660 = vmul.f32 %v642, %v361
        %v661 = vmul.f32 %v643, %v361
        %v662 = vmul.f32 %v644, %v361
        %v663 = vmul.f32 %v645, %v361
        %v664 = vmul.f32 %v646, %v361
        %v665 = vmul.f32 %v647, %v361
        %v666 = vmul.f32 %v648, %v361
        %v667 = vmul.f32 %v649, %v361
        %v668 = vmul.f32 %v650, %v361
        %v669 = vmul.f32 %v651, %v361
        %v670 = vmul.f32 %v652, %v361
        %v671 = vmul.f32 %v653, %v361
        %v672 = vmul.f32 %v654, %v361
        %v673 = vmul.f32 %v655, %v361
        %v674 = vmul.f32 %v656, %v361
        %v675 = vmul.f32 %v657, %v361
        %v676 = vmul.f32 %v658, %v361
        %v677 = vmul.f32 %v659, %v361
        %v678 = vadd.f32 %v660, %v382
        %v679 = vadd.f32 %v661, %v382
        %v680 = vadd.f32 %v662, %v382
        %v681 = vadd.f32 %v663, %v382
        %v682 = vadd.f32 %v664, %v382
        %v683 = vadd.f32 %v665, %v382
        %v684 = vadd.f32 %v666, %v382
        %v685 = vadd.f32 %v667, %v382
        %v686 = vadd.f32 %v668, %v382
        %v687 = vadd.f32 %v669, %v382
        %v688 = vadd.f32 %v670, %v382
        %v689 = vadd.f32 %v671, %v382
        %v690 = vadd.f32 %v672, %v382
        %v691 = vadd.f32 %v673, %v382
        %v692 = vadd.f32 %v674, %v382
        %v693 = vadd.f32 %v675, %v382
        %v694 = vadd.f32 %v676, %v382
        %v695 = vadd.f32 %v677, %v382
        %v696 = vmax.f32 %v678, 0.0
        %v697 = vmax.f32 %v679, 0.0
        %v698 = vmax.f32 %v680, 0.0
        %v699 = vmax.f32 %v681, 0.0
        %v700 = vmax.f32 %v682, 0.0
        %v701 = vmax.f32 %v683, 0.0
        %v702 = vmax.f32 %v684, 0.0
        %v703 = vmax.f32 %v685, 0.0
        %v704 = vmax.f32 %v686, 0.0
        %v705 = vmax.f32 %v687, 0.0
        %v706 = vmax.f32 %v688, 0.0
        %v707 = vmax.f32 %v689, 0.0
        %v708 = vmax.f32 %v690, 0.0
        %v709 = vmax.f32 %v691, 0.0
        %v710 = vmax.f32 %v692, 0.0
        %v711 = vmax.f32 %v693, 0.0
        %v712 = vmax.f32 %v694, 0.0
        %v713 = vmax.f32 %v695, 0.0
        %v714 = vpack.c.bf16 %v696, %v696
        %v715 = vpack.c.bf16 %v697, %v697
        %v716 = vpack.c.bf16 %v698, %v698
        %v717 = vpack.c.bf16 %v699, %v699
        %v718 = vpack.c.bf16 %v700, %v700
        %v719 = vpack.c.bf16 %v701, %v701
        %v720 = vpack.c.bf16 %v702, %v702
        %v721 = vpack.c.bf16 %v703, %v703
        %v722 = vpack.c.bf16 %v704, %v704
        %v723 = vpack.c.bf16 %v705, %v705
        %v724 = vpack.c.bf16 %v706, %v706
        %v725 = vpack.c.bf16 %v707, %v707
        %v726 = vpack.c.bf16 %v708, %v708
        %v727 = vpack.c.bf16 %v709, %v709
        %v728 = vpack.c.bf16 %v710, %v710
        %v729 = vpack.c.bf16 %v711, %v711
        %v730 = vpack.c.bf16 %v712, %v712
        %v731 = vpack.c.bf16 %v713, %v713
        %s732 = scalar_lea.vmem [#allocation2], 144
        %733 = vst [vmem:[%s732] sm:$0xf] %v714
        %v734 = vld [vmem:[%s732 + $0x4] sm:$0x1]
        %v735 = vsel %vm441, %v715, %v734
        %736 = vst [vmem:[%s732 + $0x4] sm:$0x1] %v735
        %737 = vst [vmem:[%s732 + $0x8] sm:$0xf] %v716
        %v738 = vld [vmem:[%s732 + $0xc] sm:$0x1]
        %v739 = vsel %vm441, %v717, %v738
        %740 = vst [vmem:[%s732 + $0xc] sm:$0x1] %v739
        %741 = vst [vmem:[%s732 + $0x10] sm:$0xf] %v718
        %v742 = vld [vmem:[%s732 + $0x14] sm:$0x1]
        %v743 = vsel %vm441, %v719, %v742
        %744 = vst [vmem:[%s732 + $0x14] sm:$0x1] %v743
        %745 = vst [vmem:[%s732 + $0x18] sm:$0xf] %v720
        %v746 = vld [vmem:[%s732 + $0x1c] sm:$0x1]
        %v747 = vsel %vm441, %v721, %v746
        %748 = vst [vmem:[%s732 + $0x1c] sm:$0x1] %v747
        %749 = vst [vmem:[%s732 + $0x20] sm:$0xf] %v722
        %v750 = vld [vmem:[%s732 + $0x24] sm:$0x1]
        %v751 = vsel %vm441, %v723, %v750
        %752 = vst [vmem:[%s732 + $0x24] sm:$0x1] %v751
        %753 = vst [vmem:[%s732 + $0x28] sm:$0xf] %v724
        %v754 = vld [vmem:[%s732 + $0x2c] sm:$0x1]
        %v755 = vsel %vm441, %v725, %v754
        %756 = vst [vmem:[%s732 + $0x2c] sm:$0x1] %v755
        %757 = vst [vmem:[%s732 + $0x30] sm:$0xf] %v726
        %v758 = vld [vmem:[%s732 + $0x34] sm:$0x1]
        %v759 = vsel %vm441, %v727, %v758
        %760 = vst [vmem:[%s732 + $0x34] sm:$0x1] %v759
        %761 = vst [vmem:[%s732 + $0x38] sm:$0xf] %v728
        %v762 = vld [vmem:[%s732 + $0x3c] sm:$0x1]
        %v763 = vsel %vm441, %v729, %v762
        %764 = vst [vmem:[%s732 + $0x3c] sm:$0x1] %v763
        %765 = vst [vmem:[%s732 + $0x40] sm:$0xf] %v730
        %v766 = vld [vmem:[%s732 + $0x44] sm:$0x1]
        %v767 = vsel %vm441, %v731, %v766
        %768 = vst [vmem:[%s732 + $0x44] sm:$0x1] %v767
        %s769 = scalar_lea.vmem %s298, 216
        %v770 = vld [vmem:[%s769] sm:$0xf]
        %v771 = vld [vmem:[%s769 + $0x4] sm:$0x1]
        %v772 = vld [vmem:[%s769 + $0x8] sm:$0xf]
        %v773 = vld [vmem:[%s769 + $0xc] sm:$0x1]
        %v774 = vld [vmem:[%s769 + $0x10] sm:$0xf]
        %v775 = vld [vmem:[%s769 + $0x14] sm:$0x1]
        %v776 = vld [vmem:[%s769 + $0x18] sm:$0xf]
        %v777 = vld [vmem:[%s769 + $0x1c] sm:$0x1]
        %v778 = vld [vmem:[%s769 + $0x20] sm:$0xf]
        %v779 = vld [vmem:[%s769 + $0x24] sm:$0x1]
        %v780 = vld [vmem:[%s769 + $0x28] sm:$0xf]
        %v781 = vld [vmem:[%s769 + $0x2c] sm:$0x1]
        %v782 = vld [vmem:[%s769 + $0x30] sm:$0xf]
        %v783 = vld [vmem:[%s769 + $0x34] sm:$0x1]
        %v784 = vld [vmem:[%s769 + $0x38] sm:$0xf]
        %v785 = vld [vmem:[%s769 + $0x3c] sm:$0x1]
        %v786 = vld [vmem:[%s769 + $0x40] sm:$0xf]
        %v787 = vld [vmem:[%s769 + $0x44] sm:$0x1]
        %v788 = vunpack.c.l.bf16 %v770
        %v789 = vunpack.c.l.bf16 %v771
        %v790 = vunpack.c.l.bf16 %v772
        %v791 = vunpack.c.l.bf16 %v773
        %v792 = vunpack.c.l.bf16 %v774
        %v793 = vunpack.c.l.bf16 %v775
        %v794 = vunpack.c.l.bf16 %v776
        %v795 = vunpack.c.l.bf16 %v777
        %v796 = vunpack.c.l.bf16 %v778
        %v797 = vunpack.c.l.bf16 %v779
        %v798 = vunpack.c.l.bf16 %v780
        %v799 = vunpack.c.l.bf16 %v781
        %v800 = vunpack.c.l.bf16 %v782
        %v801 = vunpack.c.l.bf16 %v783
        %v802 = vunpack.c.l.bf16 %v784
        %v803 = vunpack.c.l.bf16 %v785
        %v804 = vunpack.c.l.bf16 %v786
        %v805 = vunpack.c.l.bf16 %v787
        %v806 = vmul.f32 %v788, %v361
        %v807 = vmul.f32 %v789, %v361
        %v808 = vmul.f32 %v790, %v361
        %v809 = vmul.f32 %v791, %v361
        %v810 = vmul.f32 %v792, %v361
        %v811 = vmul.f32 %v793, %v361
        %v812 = vmul.f32 %v794, %v361
        %v813 = vmul.f32 %v795, %v361
        %v814 = vmul.f32 %v796, %v361
        %v815 = vmul.f32 %v797, %v361
        %v816 = vmul.f32 %v798, %v361
        %v817 = vmul.f32 %v799, %v361
        %v818 = vmul.f32 %v800, %v361
        %v819 = vmul.f32 %v801, %v361
        %v820 = vmul.f32 %v802, %v361
        %v821 = vmul.f32 %v803, %v361
        %v822 = vmul.f32 %v804, %v361
        %v823 = vmul.f32 %v805, %v361
        %v824 = vadd.f32 %v806, %v382
        %v825 = vadd.f32 %v807, %v382
        %v826 = vadd.f32 %v808, %v382
        %v827 = vadd.f32 %v809, %v382
        %v828 = vadd.f32 %v810, %v382
        %v829 = vadd.f32 %v811, %v382
        %v830 = vadd.f32 %v812, %v382
        %v831 = vadd.f32 %v813, %v382
        %v832 = vadd.f32 %v814, %v382
        %v833 = vadd.f32 %v815, %v382
        %v834 = vadd.f32 %v816, %v382
        %v835 = vadd.f32 %v817, %v382
        %v836 = vadd.f32 %v818, %v382
        %v837 = vadd.f32 %v819, %v382
        %v838 = vadd.f32 %v820, %v382
        %v839 = vadd.f32 %v821, %v382
        %v840 = vadd.f32 %v822, %v382
        %v841 = vadd.f32 %v823, %v382
        %v842 = vmax.f32 %v824, 0.0
        %v843 = vmax.f32 %v825, 0.0
        %v844 = vmax.f32 %v826, 0.0
        %v845 = vmax.f32 %v827, 0.0
        %v846 = vmax.f32 %v828, 0.0
        %v847 = vmax.f32 %v829, 0.0
        %v848 = vmax.f32 %v830, 0.0
        %v849 = vmax.f32 %v831, 0.0
        %v850 = vmax.f32 %v832, 0.0
        %v851 = vmax.f32 %v833, 0.0
        %v852 = vmax.f32 %v834, 0.0
        %v853 = vmax.f32 %v835, 0.0
        %v854 = vmax.f32 %v836, 0.0
        %v855 = vmax.f32 %v837, 0.0
        %v856 = vmax.f32 %v838, 0.0
        %v857 = vmax.f32 %v839, 0.0
        %v858 = vmax.f32 %v840, 0.0
        %v859 = vmax.f32 %v841, 0.0
        %v860 = vpack.c.bf16 %v842, %v842
        %v861 = vpack.c.bf16 %v843, %v843
        %v862 = vpack.c.bf16 %v844, %v844
        %v863 = vpack.c.bf16 %v845, %v845
        %v864 = vpack.c.bf16 %v846, %v846
        %v865 = vpack.c.bf16 %v847, %v847
        %v866 = vpack.c.bf16 %v848, %v848
        %v867 = vpack.c.bf16 %v849, %v849
        %v868 = vpack.c.bf16 %v850, %v850
        %v869 = vpack.c.bf16 %v851, %v851
        %v870 = vpack.c.bf16 %v852, %v852
        %v871 = vpack.c.bf16 %v853, %v853
        %v872 = vpack.c.bf16 %v854, %v854
        %v873 = vpack.c.bf16 %v855, %v855
        %v874 = vpack.c.bf16 %v856, %v856
        %v875 = vpack.c.bf16 %v857, %v857
        %v876 = vpack.c.bf16 %v858, %v858
        %v877 = vpack.c.bf16 %v859, %v859
        %s878 = scalar_lea.vmem [#allocation2], 216
        %879 = vst [vmem:[%s878] sm:$0xf] %v860
        %v880 = vld [vmem:[%s878 + $0x4] sm:$0x1]
        %v881 = vsel %vm441, %v861, %v880
        %882 = vst [vmem:[%s878 + $0x4] sm:$0x1] %v881
        %883 = vst [vmem:[%s878 + $0x8] sm:$0xf] %v862
        %v884 = vld [vmem:[%s878 + $0xc] sm:$0x1]
        %v885 = vsel %vm441, %v863, %v884
        %886 = vst [vmem:[%s878 + $0xc] sm:$0x1] %v885
        %887 = vst [vmem:[%s878 + $0x10] sm:$0xf] %v864
        %v888 = vld [vmem:[%s878 + $0x14] sm:$0x1]
        %v889 = vsel %vm441, %v865, %v888
        %890 = vst [vmem:[%s878 + $0x14] sm:$0x1] %v889
        %891 = vst [vmem:[%s878 + $0x18] sm:$0xf] %v866
        %v892 = vld [vmem:[%s878 + $0x1c] sm:$0x1]
        %v893 = vsel %vm441, %v867, %v892
        %894 = vst [vmem:[%s878 + $0x1c] sm:$0x1] %v893
        %895 = vst [vmem:[%s878 + $0x20] sm:$0xf] %v868
        %v896 = vld [vmem:[%s878 + $0x24] sm:$0x1]
        %v897 = vsel %vm441, %v869, %v896
        %898 = vst [vmem:[%s878 + $0x24] sm:$0x1] %v897
        %899 = vst [vmem:[%s878 + $0x28] sm:$0xf] %v870
        %v900 = vld [vmem:[%s878 + $0x2c] sm:$0x1]
        %v901 = vsel %vm441, %v871, %v900
        %902 = vst [vmem:[%s878 + $0x2c] sm:$0x1] %v901
        %903 = vst [vmem:[%s878 + $0x30] sm:$0xf] %v872
        %v904 = vld [vmem:[%s878 + $0x34] sm:$0x1]
        %v905 = vsel %vm441, %v873, %v904
        %906 = vst [vmem:[%s878 + $0x34] sm:$0x1] %v905
        %907 = vst [vmem:[%s878 + $0x38] sm:$0xf] %v874
        %v908 = vld [vmem:[%s878 + $0x3c] sm:$0x1]
        %v909 = vsel %vm441, %v875, %v908
        %910 = vst [vmem:[%s878 + $0x3c] sm:$0x1] %v909
        %911 = vst [vmem:[%s878 + $0x40] sm:$0xf] %v876
        %v912 = vld [vmem:[%s878 + $0x44] sm:$0x1]
        %v913 = vsel %vm441, %v877, %v912
        %914 = vst [vmem:[%s878 + $0x44] sm:$0x1] %v913
      $region48: #{basic_block_v2_forward.2} parent=43 // pred_fallthru
        _
      %v915 = vld [vmem:[#allocation2] sm:$0xf]
      %v916 = vld [vmem:[#allocation2 + $0x8] sm:$0xf]
      %v917 = vld [vmem:[#allocation2 + $0x10] sm:$0xf]
      %v918 = vld [vmem:[#allocation2 + $0x18] sm:$0xf]
      %v919 = vld [vmem:[#allocation2 + $0x20] sm:$0xf]
      %v920 = vld [vmem:[#allocation2 + $0x28] sm:$0xf]
      %v921 = vld [vmem:[#allocation2 + $0x30] sm:$0xf]
      %v922 = vld [vmem:[#allocation2 + $0x38] sm:$0xf]
      %v923 = vld [vmem:[%s302] sm:$0xf]
      %v924 = vld [vmem:[%s302 + $0x4] sm:$0xf]
      %v925 = vld [vmem:[%s302 + $0x8] sm:$0xf]
      %v926 = vld [vmem:[%s302 + $0xc] sm:$0xf]
      %v927 = vld [vmem:[%s302 + $0x10] sm:$0xf]
      %v928 = vld [vmem:[%s302 + $0x14] sm:$0xf]
      %v929 = vld [vmem:[%s302 + $0x18] sm:$0xf]
      %v930 = vld [vmem:[%s302 + $0x1c] sm:$0xf]
      %v931 = vld [vmem:[%s302 + $0x20] sm:$0xf]
      %v932 = vld [vmem:[%s302 + $0x24] sm:$0xf]
      %v933 = vld [vmem:[%s302 + $0x28] sm:$0xf]
      %v934 = vld [vmem:[%s302 + $0x2c] sm:$0xf]
      %v935 = vld [vmem:[%s302 + $0x30] sm:$0xf]
      %v936 = vld [vmem:[%s302 + $0x34] sm:$0xf]
      %v937 = vld [vmem:[%s302 + $0x38] sm:$0xf]
      %v938 = vld [vmem:[%s302 + $0x3c] sm:$0xf]
      %s939 = scalar_lea.vmem [#allocation2], 72
      %v940 = vld [vmem:[%s939] sm:$0xf]
      %v941 = vld [vmem:[%s939 + $0x8] sm:$0xf]
      %v942 = vld [vmem:[%s939 + $0x10] sm:$0xf]
      %v943 = vld [vmem:[%s939 + $0x18] sm:$0xf]
      %v944 = vld [vmem:[%s939 + $0x20] sm:$0xf]
      %v945 = vld [vmem:[%s939 + $0x28] sm:$0xf]
      %v946 = vld [vmem:[%s939 + $0x30] sm:$0xf]
      %v947 = vld [vmem:[%s939 + $0x38] sm:$0xf]
      %s948 = scalar_lea.vmem %s302, 64
      %v949 = vld [vmem:[%s948] sm:$0xf]
      %v950 = vld [vmem:[%s948 + $0x4] sm:$0xf]
      %v951 = vld [vmem:[%s948 + $0x8] sm:$0xf]
      %v952 = vld [vmem:[%s948 + $0xc] sm:$0xf]
      %v953 = vld [vmem:[%s948 + $0x10] sm:$0xf]
      %v954 = vld [vmem:[%s948 + $0x14] sm:$0xf]
      %v955 = vld [vmem:[%s948 + $0x18] sm:$0xf]
      %v956 = vld [vmem:[%s948 + $0x1c] sm:$0xf]
      %v957 = vld [vmem:[%s948 + $0x20] sm:$0xf]
      %v958 = vld [vmem:[%s948 + $0x24] sm:$0xf]
      %v959 = vld [vmem:[%s948 + $0x28] sm:$0xf]
      %v960 = vld [vmem:[%s948 + $0x2c] sm:$0xf]
      %v961 = vld [vmem:[%s948 + $0x30] sm:$0xf]
      %v962 = vld [vmem:[%s948 + $0x34] sm:$0xf]
      %v963 = vld [vmem:[%s948 + $0x38] sm:$0xf]
      %v964 = vld [vmem:[%s948 + $0x3c] sm:$0xf]
      %v973 = vunpack.c.l.b16 %v940
      %v974 = vunpack.c.l.b16 %v941
      %v975 = vunpack.c.l.b16 %v942
      %v976 = vunpack.c.l.b16 %v943
      %v977 = vunpack.c.l.b16 %v944
      %v978 = vunpack.c.l.b16 %v945
      %v979 = vunpack.c.l.b16 %v946
      %v980 = vunpack.c.l.b16 %v947
      %v981 = vpack.c.b16 %v974, %v973
      %v982 = vpack.c.b16 %v976, %v975
      %v983 = vpack.c.b16 %v978, %v977
      %v984 = vpack.c.b16 %v980, %v979
      %v1005 = vunpack.c.l.b16 %v949
      %v1006 = vunpack.c.l.b16 %v950
      %v1007 = vunpack.c.l.b16 %v951
      %v1008 = vunpack.c.l.b16 %v952
      %v1009 = vunpack.c.l.b16 %v953
      %v1010 = vunpack.c.l.b16 %v954
      %v1011 = vunpack.c.l.b16 %v955
      %v1012 = vunpack.c.l.b16 %v956
      %v1013 = vunpack.c.l.b16 %v957
      %v1014 = vunpack.c.l.b16 %v958
      %v1015 = vunpack.c.l.b16 %v959
      %v1016 = vunpack.c.l.b16 %v960
      %v1017 = vunpack.c.l.b16 %v961
      %v1018 = vunpack.c.l.b16 %v962
      %v1019 = vunpack.c.l.b16 %v963
      %v1020 = vunpack.c.l.b16 %v964
      %v1021 = vpack.c.b16 %v1006, %v1005
      %v1022 = vpack.c.b16 %v1008, %v1007
      %v1023 = vpack.c.b16 %v1010, %v1009
      %v1024 = vpack.c.b16 %v1012, %v1011
      %v1025 = vpack.c.b16 %v1014, %v1013
      %v1026 = vpack.c.b16 %v1016, %v1015
      %v1027 = vpack.c.b16 %v1018, %v1017
      %v1028 = vpack.c.b16 %v1020, %v1019
      %1037 = vmatpush.bf16.msra.mxu0 %v1028
      %1038 = vmatpush.bf16.msra.mxu0 %v1027
      %1039 = vmatpush.bf16.msra.mxu0 %v1026
      %1040 = vmatpush.bf16.msra.mxu0 %v1025
      %1041 = vmatpush.bf16.msra.mxu0 %v1024
      %1042 = vmatpush.bf16.msra.mxu0 %v1023
      %1043 = vmatpush.bf16.msra.mxu0 %v1022
      %1044 = vmatpush.bf16.msra.mxu0 %v1021
      %1045 = vmatmul.bf16.gmra.mxu0 %v981
      %v1046 = vpop.f32.mrf.mxu0
      %v1047 = vadd.f32 0.0, %v1046
      %v1048 = vpop.f32.mrf.mxu0
      %v1049 = vadd.f32 0.0, %v1048
      %1050 = vmatmul.bf16.gmra.mxu0 %v982
      %v1051 = vpop.f32.mrf.mxu0
      %v1052 = vadd.f32 0.0, %v1051
      %v1053 = vpop.f32.mrf.mxu0
      %v1054 = vadd.f32 0.0, %v1053
      %1055 = vmatmul.bf16.gmra.mxu0 %v983
      %v1056 = vpop.f32.mrf.mxu0
      %v1057 = vadd.f32 0.0, %v1056
      %v1058 = vpop.f32.mrf.mxu0
      %v1059 = vadd.f32 0.0, %v1058
      %1060 = vmatmul.bf16.gmra.mxu0 %v984
      %v1061 = vpop.f32.mrf.mxu0
      %v1062 = vadd.f32 0.0, %v1061
      %v1063 = vpop.f32.mrf.mxu0
      %v1064 = vadd.f32 0.0, %v1063
      %1065 = vdwg.mxu0
      %v1074 = vunpack.c.l.b16 %v915
      %v1075 = vunpack.c.l.b16 %v916
      %v1076 = vunpack.c.l.b16 %v917
      %v1077 = vunpack.c.l.b16 %v918
      %v1078 = vunpack.c.l.b16 %v919
      %v1079 = vunpack.c.l.b16 %v920
      %v1080 = vunpack.c.l.b16 %v921
      %v1081 = vunpack.c.l.b16 %v922
      %v1082 = vpack.c.b16 %v1075, %v1074
      %v1083 = vpack.c.b16 %v1077, %v1076
      %v1084 = vpack.c.b16 %v1079, %v1078
      %v1085 = vpack.c.b16 %v1081, %v1080
      %v1106 = vunpack.c.l.b16 %v923
      %v1107 = vunpack.c.l.b16 %v924
      %v1108 = vunpack.c.l.b16 %v925
      %v1109 = vunpack.c.l.b16 %v926
      %v1110 = vunpack.c.l.b16 %v927
      %v1111 = vunpack.c.l.b16 %v928
      %v1112 = vunpack.c.l.b16 %v929
      %v1113 = vunpack.c.l.b16 %v930
      %v1114 = vunpack.c.l.b16 %v931
      %v1115 = vunpack.c.l.b16 %v932
      %v1116 = vunpack.c.l.b16 %v933
      %v1117 = vunpack.c.l.b16 %v934
      %v1118 = vunpack.c.l.b16 %v935
      %v1119 = vunpack.c.l.b16 %v936
      %v1120 = vunpack.c.l.b16 %v937
      %v1121 = vunpack.c.l.b16 %v938
      %v1122 = vpack.c.b16 %v1107, %v1106
      %v1123 = vpack.c.b16 %v1109, %v1108
      %v1124 = vpack.c.b16 %v1111, %v1110
      %v1125 = vpack.c.b16 %v1113, %v1112
      %v1126 = vpack.c.b16 %v1115, %v1114
      %v1127 = vpack.c.b16 %v1117, %v1116
      %v1128 = vpack.c.b16 %v1119, %v1118
      %v1129 = vpack.c.b16 %v1121, %v1120
      %1138 = vmatpush.bf16.msra.mxu0 %v1129
      %1139 = vmatpush.bf16.msra.mxu0 %v1128
      %1140 = vmatpush.bf16.msra.mxu0 %v1127
      %1141 = vmatpush.bf16.msra.mxu0 %v1126
      %1142 = vmatpush.bf16.msra.mxu0 %v1125
      %1143 = vmatpush.bf16.msra.mxu0 %v1124
      %1144 = vmatpush.bf16.msra.mxu0 %v1123
      %1145 = vmatpush.bf16.msra.mxu0 %v1122
      %1146 = vmatmul.bf16.gmra.mxu0 %v1082
      %v1147 = vpop.f32.mrf.mxu0
      %v1148 = vadd.f32 %v1047, %v1147
      %v1149 = vpop.f32.mrf.mxu0
      %v1150 = vadd.f32 %v1049, %v1149
      %1151 = vmatmul.bf16.gmra.mxu0 %v1083
      %v1152 = vpop.f32.mrf.mxu0
      %v1153 = vadd.f32 %v1052, %v1152
      %v1154 = vpop.f32.mrf.mxu0
      %v1155 = vadd.f32 %v1054, %v1154
      %1156 = vmatmul.bf16.gmra.mxu0 %v1084
      %v1157 = vpop.f32.mrf.mxu0
      %v1158 = vadd.f32 %v1057, %v1157
      %v1159 = vpop.f32.mrf.mxu0
      %v1160 = vadd.f32 %v1059, %v1159
      %1161 = vmatmul.bf16.gmra.mxu0 %v1085
      %v1162 = vpop.f32.mrf.mxu0
      %v1163 = vadd.f32 %v1062, %v1162
      %v1164 = vpop.f32.mrf.mxu0
      %v1165 = vadd.f32 %v1064, %v1164
      %1166 = vdwg.mxu0
      %v1167 = vld [vmem:[#allocation2] sm:$0xf]
      %v1168 = vld [vmem:[#allocation2 + $0x4] sm:$0x1]
      %v1169 = vld [vmem:[#allocation2 + $0x8] sm:$0xf]
      %v1170 = vld [vmem:[#allocation2 + $0xc] sm:$0x1]
      %v1171 = vld [vmem:[#allocation2 + $0x10] sm:$0xf]
      %v1172 = vld [vmem:[#allocation2 + $0x14] sm:$0x1]
      %v1173 = vld [vmem:[#allocation2 + $0x18] sm:$0xf]
      %v1174 = vld [vmem:[#allocation2 + $0x1c] sm:$0x1]
      %v1175 = vld [vmem:[#allocation2 + $0x20] sm:$0xf]
      %v1176 = vld [vmem:[#allocation2 + $0x24] sm:$0x1]
      %v1177 = vld [vmem:[#allocation2 + $0x28] sm:$0xf]
      %v1178 = vld [vmem:[#allocation2 + $0x2c] sm:$0x1]
      %v1179 = vld [vmem:[#allocation2 + $0x30] sm:$0xf]
      %v1180 = vld [vmem:[#allocation2 + $0x34] sm:$0x1]
      %v1181 = vld [vmem:[#allocation2 + $0x38] sm:$0xf]
      %v1182 = vld [vmem:[#allocation2 + $0x3c] sm:$0x1]
      %vm1183 = vsmask.f32 3328
      %vm1184 = vsmask.f32 7440
      %vm1185 = vmor %vm1183, %vm1184
      %v1187 = vshrl.u32 %v1167, 16
      %v1189 = vrot.slane %v1187, 4
      %v1190 = vshll.u32 %v1167, 16
      %v1192 = vrot.slane %v1190, 5
      %v1193 = vor.u32 %v1189, %v1192
      %v1194 = vrot.slane %v1193, 4
      %v1196 = vshll.u32 %v1168, 16
      %v1198 = vrot.slane %v1196, 5
      %v1199 = vsel %vm1185, %v1194, %v1198
      %v1201 = vshrl.u32 %v1169, 16
      %v1203 = vrot.slane %v1201, 4
      %v1204 = vshll.u32 %v1169, 16
      %v1206 = vrot.slane %v1204, 5
      %v1207 = vor.u32 %v1203, %v1206
      %v1208 = vrot.slane %v1207, 4
      %v1210 = vshll.u32 %v1170, 16
      %v1212 = vrot.slane %v1210, 5
      %v1213 = vsel %vm1185, %v1208, %v1212
      %v1215 = vshrl.u32 %v1171, 16
      %v1217 = vrot.slane %v1215, 4
      %v1218 = vshll.u32 %v1171, 16
      %v1220 = vrot.slane %v1218, 5
      %v1221 = vor.u32 %v1217, %v1220
      %v1222 = vrot.slane %v1221, 4
      %v1224 = vshll.u32 %v1172, 16
      %v1226 = vrot.slane %v1224, 5
      %v1227 = vsel %vm1185, %v1222, %v1226
      %v1229 = vshrl.u32 %v1173, 16
      %v1231 = vrot.slane %v1229, 4
      %v1232 = vshll.u32 %v1173, 16
      %v1234 = vrot.slane %v1232, 5
      %v1235 = vor.u32 %v1231, %v1234
      %v1236 = vrot.slane %v1235, 4
      %v1238 = vshll.u32 %v1174, 16
      %v1240 = vrot.slane %v1238, 5
      %v1241 = vsel %vm1185, %v1236, %v1240
      %v1243 = vshrl.u32 %v1175, 16
      %v1245 = vrot.slane %v1243, 4
      %v1246 = vshll.u32 %v1175, 16
      %v1248 = vrot.slane %v1246, 5
      %v1249 = vor.u32 %v1245, %v1248
      %v1250 = vrot.slane %v1249, 4
      %v1252 = vshll.u32 %v1176, 16
      %v1254 = vrot.slane %v1252, 5
      %v1255 = vsel %vm1185, %v1250, %v1254
      %v1257 = vshrl.u32 %v1177, 16
      %v1259 = vrot.slane %v1257, 4
      %v1260 = vshll.u32 %v1177, 16
      %v1262 = vrot.slane %v1260, 5
      %v1263 = vor.u32 %v1259, %v1262
      %v1264 = vrot.slane %v1263, 4
      %v1266 = vshll.u32 %v1178, 16
      %v1268 = vrot.slane %v1266, 5
      %v1269 = vsel %vm1185, %v1264, %v1268
      %v1271 = vshrl.u32 %v1179, 16
      %v1273 = vrot.slane %v1271, 4
      %v1274 = vshll.u32 %v1179, 16
      %v1276 = vrot.slane %v1274, 5
      %v1277 = vor.u32 %v1273, %v1276
      %v1278 = vrot.slane %v1277, 4
      %v1280 = vshll.u32 %v1180, 16
      %v1282 = vrot.slane %v1280, 5
      %v1283 = vsel %vm1185, %v1278, %v1282
      %v1285 = vshrl.u32 %v1181, 16
      %v1287 = vrot.slane %v1285, 4
      %v1288 = vshll.u32 %v1181, 16
      %v1290 = vrot.slane %v1288, 5
      %v1291 = vor.u32 %v1287, %v1290
      %v1292 = vrot.slane %v1291, 4
      %v1294 = vshll.u32 %v1182, 16
      %v1296 = vrot.slane %v1294, 5
      %v1297 = vsel %vm1185, %v1292, %v1296
      %s1298 = scalar_lea.vmem %s302, 128
      %v1299 = vld [vmem:[%s1298] sm:$0xf]
      %v1300 = vld [vmem:[%s1298 + $0x4] sm:$0xf]
      %v1301 = vld [vmem:[%s1298 + $0x8] sm:$0xf]
      %v1302 = vld [vmem:[%s1298 + $0xc] sm:$0xf]
      %v1303 = vld [vmem:[%s1298 + $0x10] sm:$0xf]
      %v1304 = vld [vmem:[%s1298 + $0x14] sm:$0xf]
      %v1305 = vld [vmem:[%s1298 + $0x18] sm:$0xf]
      %v1306 = vld [vmem:[%s1298 + $0x1c] sm:$0xf]
      %v1307 = vld [vmem:[%s1298 + $0x20] sm:$0xf]
      %v1308 = vld [vmem:[%s1298 + $0x24] sm:$0xf]
      %v1309 = vld [vmem:[%s1298 + $0x28] sm:$0xf]
      %v1310 = vld [vmem:[%s1298 + $0x2c] sm:$0xf]
      %v1311 = vld [vmem:[%s1298 + $0x30] sm:$0xf]
      %v1312 = vld [vmem:[%s1298 + $0x34] sm:$0xf]
      %v1313 = vld [vmem:[%s1298 + $0x38] sm:$0xf]
      %v1314 = vld [vmem:[%s1298 + $0x3c] sm:$0xf]
      %v1315 = vunpack.c.l.b16 %v1199
      %v1316 = vunpack.c.l.b16 %v1213
      %v1317 = vunpack.c.l.b16 %v1227
      %v1318 = vunpack.c.l.b16 %v1241
      %v1319 = vunpack.c.l.b16 %v1255
      %v1320 = vunpack.c.l.b16 %v1269
      %v1321 = vunpack.c.l.b16 %v1283
      %v1322 = vunpack.c.l.b16 %v1297
      %v1323 = vpack.c.b16 %v1316, %v1315
      %v1324 = vpack.c.b16 %v1318, %v1317
      %v1325 = vpack.c.b16 %v1320, %v1319
      %v1326 = vpack.c.b16 %v1322, %v1321
      %v1347 = vunpack.c.l.b16 %v1299
      %v1348 = vunpack.c.l.b16 %v1300
      %v1349 = vunpack.c.l.b16 %v1301
      %v1350 = vunpack.c.l.b16 %v1302
      %v1351 = vunpack.c.l.b16 %v1303
      %v1352 = vunpack.c.l.b16 %v1304
      %v1353 = vunpack.c.l.b16 %v1305
      %v1354 = vunpack.c.l.b16 %v1306
      %v1355 = vunpack.c.l.b16 %v1307
      %v1356 = vunpack.c.l.b16 %v1308
      %v1357 = vunpack.c.l.b16 %v1309
      %v1358 = vunpack.c.l.b16 %v1310
      %v1359 = vunpack.c.l.b16 %v1311
      %v1360 = vunpack.c.l.b16 %v1312
      %v1361 = vunpack.c.l.b16 %v1313
      %v1362 = vunpack.c.l.b16 %v1314
      %v1363 = vpack.c.b16 %v1348, %v1347
      %v1364 = vpack.c.b16 %v1350, %v1349
      %v1365 = vpack.c.b16 %v1352, %v1351
      %v1366 = vpack.c.b16 %v1354, %v1353
      %v1367 = vpack.c.b16 %v1356, %v1355
      %v1368 = vpack.c.b16 %v1358, %v1357
      %v1369 = vpack.c.b16 %v1360, %v1359
      %v1370 = vpack.c.b16 %v1362, %v1361
      %1379 = vmatpush.bf16.msra.mxu0 %v1370
      %1380 = vmatpush.bf16.msra.mxu0 %v1369
      %1381 = vmatpush.bf16.msra.mxu0 %v1368
      %1382 = vmatpush.bf16.msra.mxu0 %v1367
      %1383 = vmatpush.bf16.msra.mxu0 %v1366
      %1384 = vmatpush.bf16.msra.mxu0 %v1365
      %1385 = vmatpush.bf16.msra.mxu0 %v1364
      %1386 = vmatpush.bf16.msra.mxu0 %v1363
      %1387 = vmatmul.bf16.gmra.mxu0 %v1323
      %v1388 = vpop.f32.mrf.mxu0
      %v1389 = vadd.f32 0.0, %v1388
      %v1390 = vpop.f32.mrf.mxu0
      %v1391 = vadd.f32 0.0, %v1390
      %1392 = vmatmul.bf16.gmra.mxu0 %v1324
      %v1393 = vpop.f32.mrf.mxu0
      %v1394 = vadd.f32 0.0, %v1393
      %v1395 = vpop.f32.mrf.mxu0
      %v1396 = vadd.f32 0.0, %v1395
      %1397 = vmatmul.bf16.gmra.mxu0 %v1325
      %v1398 = vpop.f32.mrf.mxu0
      %v1399 = vadd.f32 0.0, %v1398
      %v1400 = vpop.f32.mrf.mxu0
      %v1401 = vadd.f32 0.0, %v1400
      %1402 = vmatmul.bf16.gmra.mxu0 %v1326
      %v1403 = vpop.f32.mrf.mxu0
      %v1404 = vadd.f32 0.0, %v1403
      %v1405 = vpop.f32.mrf.mxu0
      %v1406 = vadd.f32 0.0, %v1405
      %1407 = vdwg.mxu0
      %v1408 = vadd.f32 %v1148, %v1389
      %v1409 = vadd.f32 %v1150, %v1391
      %v1410 = vadd.f32 %v1153, %v1394
      %v1411 = vadd.f32 %v1155, %v1396
      %v1412 = vadd.f32 %v1158, %v1399
      %v1413 = vadd.f32 %v1160, %v1401
      %v1414 = vadd.f32 %v1163, %v1404
      %v1415 = vadd.f32 %v1165, %v1406
      %s1416 = scalar_lea.vmem [#allocation2], 144
      %v1417 = vld [vmem:[%s1416] sm:$0xf]
      %v1418 = vld [vmem:[%s1416 + $0x8] sm:$0xf]
      %v1419 = vld [vmem:[%s1416 + $0x10] sm:$0xf]
      %v1420 = vld [vmem:[%s1416 + $0x18] sm:$0xf]
      %v1421 = vld [vmem:[%s1416 + $0x20] sm:$0xf]
      %v1422 = vld [vmem:[%s1416 + $0x28] sm:$0xf]
      %v1423 = vld [vmem:[%s1416 + $0x30] sm:$0xf]
      %v1424 = vld [vmem:[%s1416 + $0x38] sm:$0xf]
      %s1425 = scalar_lea.vmem %s302, 192
      %v1426 = vld [vmem:[%s1425] sm:$0xf]
      %v1427 = vld [vmem:[%s1425 + $0x4] sm:$0xf]
      %v1428 = vld [vmem:[%s1425 + $0x8] sm:$0xf]
      %v1429 = vld [vmem:[%s1425 + $0xc] sm:$0xf]
      %v1430 = vld [vmem:[%s1425 + $0x10] sm:$0xf]
      %v1431 = vld [vmem:[%s1425 + $0x14] sm:$0xf]
      %v1432 = vld [vmem:[%s1425 + $0x18] sm:$0xf]
      %v1433 = vld [vmem:[%s1425 + $0x1c] sm:$0xf]
      %v1434 = vld [vmem:[%s1425 + $0x20] sm:$0xf]
      %v1435 = vld [vmem:[%s1425 + $0x24] sm:$0xf]
      %v1436 = vld [vmem:[%s1425 + $0x28] sm:$0xf]
      %v1437 = vld [vmem:[%s1425 + $0x2c] sm:$0xf]
      %v1438 = vld [vmem:[%s1425 + $0x30] sm:$0xf]
      %v1439 = vld [vmem:[%s1425 + $0x34] sm:$0xf]
      %v1440 = vld [vmem:[%s1425 + $0x38] sm:$0xf]
      %v1441 = vld [vmem:[%s1425 + $0x3c] sm:$0xf]
      %v1450 = vunpack.c.l.b16 %v1417
      %v1451 = vunpack.c.l.b16 %v1418
      %v1452 = vunpack.c.l.b16 %v1419
      %v1453 = vunpack.c.l.b16 %v1420
      %v1454 = vunpack.c.l.b16 %v1421
      %v1455 = vunpack.c.l.b16 %v1422
      %v1456 = vunpack.c.l.b16 %v1423
      %v1457 = vunpack.c.l.b16 %v1424
      %v1458 = vpack.c.b16 %v1451, %v1450
      %v1459 = vpack.c.b16 %v1453, %v1452
      %v1460 = vpack.c.b16 %v1455, %v1454
      %v1461 = vpack.c.b16 %v1457, %v1456
      %v1482 = vunpack.c.l.b16 %v1426
      %v1483 = vunpack.c.l.b16 %v1427
      %v1484 = vunpack.c.l.b16 %v1428
      %v1485 = vunpack.c.l.b16 %v1429
      %v1486 = vunpack.c.l.b16 %v1430
      %v1487 = vunpack.c.l.b16 %v1431
      %v1488 = vunpack.c.l.b16 %v1432
      %v1489 = vunpack.c.l.b16 %v1433
      %v1490 = vunpack.c.l.b16 %v1434
      %v1491 = vunpack.c.l.b16 %v1435
      %v1492 = vunpack.c.l.b16 %v1436
      %v1493 = vunpack.c.l.b16 %v1437
      %v1494 = vunpack.c.l.b16 %v1438
      %v1495 = vunpack.c.l.b16 %v1439
      %v1496 = vunpack.c.l.b16 %v1440
      %v1497 = vunpack.c.l.b16 %v1441
      %v1498 = vpack.c.b16 %v1483, %v1482
      %v1499 = vpack.c.b16 %v1485, %v1484
      %v1500 = vpack.c.b16 %v1487, %v1486
      %v1501 = vpack.c.b16 %v1489, %v1488
      %v1502 = vpack.c.b16 %v1491, %v1490
      %v1503 = vpack.c.b16 %v1493, %v1492
      %v1504 = vpack.c.b16 %v1495, %v1494
      %v1505 = vpack.c.b16 %v1497, %v1496
      %1514 = vmatpush.bf16.msra.mxu0 %v1505
      %1515 = vmatpush.bf16.msra.mxu0 %v1504
      %1516 = vmatpush.bf16.msra.mxu0 %v1503
      %1517 = vmatpush.bf16.msra.mxu0 %v1502
      %1518 = vmatpush.bf16.msra.mxu0 %v1501
      %1519 = vmatpush.bf16.msra.mxu0 %v1500
      %1520 = vmatpush.bf16.msra.mxu0 %v1499
      %1521 = vmatpush.bf16.msra.mxu0 %v1498
      %1522 = vmatmul.bf16.gmra.mxu0 %v1458
      %v1523 = vpop.f32.mrf.mxu0
      %v1524 = vadd.f32 0.0, %v1523
      %v1525 = vpop.f32.mrf.mxu0
      %v1526 = vadd.f32 0.0, %v1525
      %1527 = vmatmul.bf16.gmra.mxu0 %v1459
      %v1528 = vpop.f32.mrf.mxu0
      %v1529 = vadd.f32 0.0, %v1528
      %v1530 = vpop.f32.mrf.mxu0
      %v1531 = vadd.f32 0.0, %v1530
      %1532 = vmatmul.bf16.gmra.mxu0 %v1460
      %v1533 = vpop.f32.mrf.mxu0
      %v1534 = vadd.f32 0.0, %v1533
      %v1535 = vpop.f32.mrf.mxu0
      %v1536 = vadd.f32 0.0, %v1535
      %1537 = vmatmul.bf16.gmra.mxu0 %v1461
      %v1538 = vpop.f32.mrf.mxu0
      %v1539 = vadd.f32 0.0, %v1538
      %v1540 = vpop.f32.mrf.mxu0
      %v1541 = vadd.f32 0.0, %v1540
      %1542 = vdwg.mxu0
      %v1543 = vadd.f32 %v1408, %v1524
      %v1544 = vadd.f32 %v1409, %v1526
      %v1545 = vadd.f32 %v1410, %v1529
      %v1546 = vadd.f32 %v1411, %v1531
      %v1547 = vadd.f32 %v1412, %v1534
      %v1548 = vadd.f32 %v1413, %v1536
      %v1549 = vadd.f32 %v1414, %v1539
      %v1550 = vadd.f32 %v1415, %v1541
      %s1551 = scalar_lea.vmem [#allocation2], 216
      %v1552 = vld [vmem:[%s1551] sm:$0xf]
      %v1553 = vld [vmem:[%s1551 + $0x8] sm:$0xf]
      %v1554 = vld [vmem:[%s1551 + $0x10] sm:$0xf]
      %v1555 = vld [vmem:[%s1551 + $0x18] sm:$0xf]
      %v1556 = vld [vmem:[%s1551 + $0x20] sm:$0xf]
      %v1557 = vld [vmem:[%s1551 + $0x28] sm:$0xf]
      %v1558 = vld [vmem:[%s1551 + $0x30] sm:$0xf]
      %v1559 = vld [vmem:[%s1551 + $0x38] sm:$0xf]
      %s1560 = scalar_lea.vmem %s302, 256
      %v1561 = vld [vmem:[%s1560] sm:$0xf]
      %v1562 = vld [vmem:[%s1560 + $0x4] sm:$0xf]
      %v1563 = vld [vmem:[%s1560 + $0x8] sm:$0xf]
      %v1564 = vld [vmem:[%s1560 + $0xc] sm:$0xf]
      %v1565 = vld [vmem:[%s1560 + $0x10] sm:$0xf]
      %v1566 = vld [vmem:[%s1560 + $0x14] sm:$0xf]
      %v1567 = vld [vmem:[%s1560 + $0x18] sm:$0xf]
      %v1568 = vld [vmem:[%s1560 + $0x1c] sm:$0xf]
      %v1569 = vld [vmem:[%s1560 + $0x20] sm:$0xf]
      %v1570 = vld [vmem:[%s1560 + $0x24] sm:$0xf]
      %v1571 = vld [vmem:[%s1560 + $0x28] sm:$0xf]
      %v1572 = vld [vmem:[%s1560 + $0x2c] sm:$0xf]
      %v1573 = vld [vmem:[%s1560 + $0x30] sm:$0xf]
      %v1574 = vld [vmem:[%s1560 + $0x34] sm:$0xf]
      %v1575 = vld [vmem:[%s1560 + $0x38] sm:$0xf]
      %v1576 = vld [vmem:[%s1560 + $0x3c] sm:$0xf]
      %v1585 = vunpack.c.l.b16 %v1552
      %v1586 = vunpack.c.l.b16 %v1553
      %v1587 = vunpack.c.l.b16 %v1554
      %v1588 = vunpack.c.l.b16 %v1555
      %v1589 = vunpack.c.l.b16 %v1556
      %v1590 = vunpack.c.l.b16 %v1557
      %v1591 = vunpack.c.l.b16 %v1558
      %v1592 = vunpack.c.l.b16 %v1559
      %v1593 = vpack.c.b16 %v1586, %v1585
      %v1594 = vpack.c.b16 %v1588, %v1587
      %v1595 = vpack.c.b16 %v1590, %v1589
      %v1596 = vpack.c.b16 %v1592, %v1591
      %v1617 = vunpack.c.l.b16 %v1561
      %v1618 = vunpack.c.l.b16 %v1562
      %v1619 = vunpack.c.l.b16 %v1563
      %v1620 = vunpack.c.l.b16 %v1564
      %v1621 = vunpack.c.l.b16 %v1565
      %v1622 = vunpack.c.l.b16 %v1566
      %v1623 = vunpack.c.l.b16 %v1567
      %v1624 = vunpack.c.l.b16 %v1568
      %v1625 = vunpack.c.l.b16 %v1569
      %v1626 = vunpack.c.l.b16 %v1570
      %v1627 = vunpack.c.l.b16 %v1571
      %v1628 = vunpack.c.l.b16 %v1572
      %v1629 = vunpack.c.l.b16 %v1573
      %v1630 = vunpack.c.l.b16 %v1574
      %v1631 = vunpack.c.l.b16 %v1575
      %v1632 = vunpack.c.l.b16 %v1576
      %v1633 = vpack.c.b16 %v1618, %v1617
      %v1634 = vpack.c.b16 %v1620, %v1619
      %v1635 = vpack.c.b16 %v1622, %v1621
      %v1636 = vpack.c.b16 %v1624, %v1623
      %v1637 = vpack.c.b16 %v1626, %v1625
      %v1638 = vpack.c.b16 %v1628, %v1627
      %v1639 = vpack.c.b16 %v1630, %v1629
      %v1640 = vpack.c.b16 %v1632, %v1631
      %1649 = vmatpush.bf16.msra.mxu0 %v1640
      %1650 = vmatpush.bf16.msra.mxu0 %v1639
      %1651 = vmatpush.bf16.msra.mxu0 %v1638
      %1652 = vmatpush.bf16.msra.mxu0 %v1637
      %1653 = vmatpush.bf16.msra.mxu0 %v1636
      %1654 = vmatpush.bf16.msra.mxu0 %v1635
      %1655 = vmatpush.bf16.msra.mxu0 %v1634
      %1656 = vmatpush.bf16.msra.mxu0 %v1633
      %1657 = vmatmul.bf16.gmra.mxu0 %v1593
      %v1658 = vpop.f32.mrf.mxu0
      %v1659 = vadd.f32 0.0, %v1658
      %v1660 = vpop.f32.mrf.mxu0
      %v1661 = vadd.f32 0.0, %v1660
      %1662 = vmatmul.bf16.gmra.mxu0 %v1594
      %v1663 = vpop.f32.mrf.mxu0
      %v1664 = vadd.f32 0.0, %v1663
      %v1665 = vpop.f32.mrf.mxu0
      %v1666 = vadd.f32 0.0, %v1665
      %1667 = vmatmul.bf16.gmra.mxu0 %v1595
      %v1668 = vpop.f32.mrf.mxu0
      %v1669 = vadd.f32 0.0, %v1668
      %v1670 = vpop.f32.mrf.mxu0
      %v1671 = vadd.f32 0.0, %v1670
      %1672 = vmatmul.bf16.gmra.mxu0 %v1596
      %v1673 = vpop.f32.mrf.mxu0
      %v1674 = vadd.f32 0.0, %v1673
      %v1675 = vpop.f32.mrf.mxu0
      %v1676 = vadd.f32 0.0, %v1675
      %1677 = vdwg.mxu0
      %v1678 = vadd.f32 %v1543, %v1659
      %v1679 = vadd.f32 %v1544, %v1661
      %v1680 = vadd.f32 %v1545, %v1664
      %v1681 = vadd.f32 %v1546, %v1666
      %v1682 = vadd.f32 %v1547, %v1669
      %v1683 = vadd.f32 %v1548, %v1671
      %v1684 = vadd.f32 %v1549, %v1674
      %v1685 = vadd.f32 %v1550, %v1676
      %v1686 = vld [vmem:[%s1416] sm:$0xf]
      %v1687 = vld [vmem:[%s1416 + $0x4] sm:$0x1]
      %v1688 = vld [vmem:[%s1416 + $0x8] sm:$0xf]
      %v1689 = vld [vmem:[%s1416 + $0xc] sm:$0x1]
      %v1690 = vld [vmem:[%s1416 + $0x10] sm:$0xf]
      %v1691 = vld [vmem:[%s1416 + $0x14] sm:$0x1]
      %v1692 = vld [vmem:[%s1416 + $0x18] sm:$0xf]
      %v1693 = vld [vmem:[%s1416 + $0x1c] sm:$0x1]
      %v1694 = vld [vmem:[%s1416 + $0x20] sm:$0xf]
      %v1695 = vld [vmem:[%s1416 + $0x24] sm:$0x1]
      %v1696 = vld [vmem:[%s1416 + $0x28] sm:$0xf]
      %v1697 = vld [vmem:[%s1416 + $0x2c] sm:$0x1]
      %v1698 = vld [vmem:[%s1416 + $0x30] sm:$0xf]
      %v1699 = vld [vmem:[%s1416 + $0x34] sm:$0x1]
      %v1700 = vld [vmem:[%s1416 + $0x38] sm:$0xf]
      %v1701 = vld [vmem:[%s1416 + $0x3c] sm:$0x1]
      %v1703 = vshrl.u32 %v1686, 16
      %v1705 = vrot.slane %v1703, 4
      %v1706 = vshll.u32 %v1686, 16
      %v1708 = vrot.slane %v1706, 5
      %v1709 = vor.u32 %v1705, %v1708
      %v1710 = vrot.slane %v1709, 4
      %v1712 = vshll.u32 %v1687, 16
      %v1714 = vrot.slane %v1712, 5
      %v1715 = vsel %vm1185, %v1710, %v1714
      %v1717 = vshrl.u32 %v1688, 16
      %v1719 = vrot.slane %v1717, 4
      %v1720 = vshll.u32 %v1688, 16
      %v1722 = vrot.slane %v1720, 5
      %v1723 = vor.u32 %v1719, %v1722
      %v1724 = vrot.slane %v1723, 4
      %v1726 = vshll.u32 %v1689, 16
      %v1728 = vrot.slane %v1726, 5
      %v1729 = vsel %vm1185, %v1724, %v1728
      %v1731 = vshrl.u32 %v1690, 16
      %v1733 = vrot.slane %v1731, 4
      %v1734 = vshll.u32 %v1690, 16
      %v1736 = vrot.slane %v1734, 5
      %v1737 = vor.u32 %v1733, %v1736
      %v1738 = vrot.slane %v1737, 4
      %v1740 = vshll.u32 %v1691, 16
      %v1742 = vrot.slane %v1740, 5
      %v1743 = vsel %vm1185, %v1738, %v1742
      %v1745 = vshrl.u32 %v1692, 16
      %v1747 = vrot.slane %v1745, 4
      %v1748 = vshll.u32 %v1692, 16
      %v1750 = vrot.slane %v1748, 5
      %v1751 = vor.u32 %v1747, %v1750
      %v1752 = vrot.slane %v1751, 4
      %v1754 = vshll.u32 %v1693, 16
      %v1756 = vrot.slane %v1754, 5
      %v1757 = vsel %vm1185, %v1752, %v1756
      %v1759 = vshrl.u32 %v1694, 16
      %v1761 = vrot.slane %v1759, 4
      %v1762 = vshll.u32 %v1694, 16
      %v1764 = vrot.slane %v1762, 5
      %v1765 = vor.u32 %v1761, %v1764
      %v1766 = vrot.slane %v1765, 4
      %v1768 = vshll.u32 %v1695, 16
      %v1770 = vrot.slane %v1768, 5
      %v1771 = vsel %vm1185, %v1766, %v1770
      %v1773 = vshrl.u32 %v1696, 16
      %v1775 = vrot.slane %v1773, 4
      %v1776 = vshll.u32 %v1696, 16
      %v1778 = vrot.slane %v1776, 5
      %v1779 = vor.u32 %v1775, %v1778
      %v1780 = vrot.slane %v1779, 4
      %v1782 = vshll.u32 %v1697, 16
      %v1784 = vrot.slane %v1782, 5
      %v1785 = vsel %vm1185, %v1780, %v1784
      %v1787 = vshrl.u32 %v1698, 16
      %v1789 = vrot.slane %v1787, 4
      %v1790 = vshll.u32 %v1698, 16
      %v1792 = vrot.slane %v1790, 5
      %v1793 = vor.u32 %v1789, %v1792
      %v1794 = vrot.slane %v1793, 4
      %v1796 = vshll.u32 %v1699, 16
      %v1798 = vrot.slane %v1796, 5
      %v1799 = vsel %vm1185, %v1794, %v1798
      %v1801 = vshrl.u32 %v1700, 16
      %v1803 = vrot.slane %v1801, 4
      %v1804 = vshll.u32 %v1700, 16
      %v1806 = vrot.slane %v1804, 5
      %v1807 = vor.u32 %v1803, %v1806
      %v1808 = vrot.slane %v1807, 4
      %v1810 = vshll.u32 %v1701, 16
      %v1812 = vrot.slane %v1810, 5
      %v1813 = vsel %vm1185, %v1808, %v1812
      %s1814 = scalar_lea.vmem %s302, 320
      %v1815 = vld [vmem:[%s1814] sm:$0xf]
      %v1816 = vld [vmem:[%s1814 + $0x4] sm:$0xf]
      %v1817 = vld [vmem:[%s1814 + $0x8] sm:$0xf]
      %v1818 = vld [vmem:[%s1814 + $0xc] sm:$0xf]
      %v1819 = vld [vmem:[%s1814 + $0x10] sm:$0xf]
      %v1820 = vld [vmem:[%s1814 + $0x14] sm:$0xf]
      %v1821 = vld [vmem:[%s1814 + $0x18] sm:$0xf]
      %v1822 = vld [vmem:[%s1814 + $0x1c] sm:$0xf]
      %v1823 = vld [vmem:[%s1814 + $0x20] sm:$0xf]
      %v1824 = vld [vmem:[%s1814 + $0x24] sm:$0xf]
      %v1825 = vld [vmem:[%s1814 + $0x28] sm:$0xf]
      %v1826 = vld [vmem:[%s1814 + $0x2c] sm:$0xf]
      %v1827 = vld [vmem:[%s1814 + $0x30] sm:$0xf]
      %v1828 = vld [vmem:[%s1814 + $0x34] sm:$0xf]
      %v1829 = vld [vmem:[%s1814 + $0x38] sm:$0xf]
      %v1830 = vld [vmem:[%s1814 + $0x3c] sm:$0xf]
      %v1831 = vunpack.c.l.b16 %v1715
      %v1832 = vunpack.c.l.b16 %v1729
      %v1833 = vunpack.c.l.b16 %v1743
      %v1834 = vunpack.c.l.b16 %v1757
      %v1835 = vunpack.c.l.b16 %v1771
      %v1836 = vunpack.c.l.b16 %v1785
      %v1837 = vunpack.c.l.b16 %v1799
      %v1838 = vunpack.c.l.b16 %v1813
      %v1839 = vpack.c.b16 %v1832, %v1831
      %v1840 = vpack.c.b16 %v1834, %v1833
      %v1841 = vpack.c.b16 %v1836, %v1835
      %v1842 = vpack.c.b16 %v1838, %v1837
      %v1863 = vunpack.c.l.b16 %v1815
      %v1864 = vunpack.c.l.b16 %v1816
      %v1865 = vunpack.c.l.b16 %v1817
      %v1866 = vunpack.c.l.b16 %v1818
      %v1867 = vunpack.c.l.b16 %v1819
      %v1868 = vunpack.c.l.b16 %v1820
      %v1869 = vunpack.c.l.b16 %v1821
      %v1870 = vunpack.c.l.b16 %v1822
      %v1871 = vunpack.c.l.b16 %v1823
      %v1872 = vunpack.c.l.b16 %v1824
      %v1873 = vunpack.c.l.b16 %v1825
      %v1874 = vunpack.c.l.b16 %v1826
      %v1875 = vunpack.c.l.b16 %v1827
      %v1876 = vunpack.c.l.b16 %v1828
      %v1877 = vunpack.c.l.b16 %v1829
      %v1878 = vunpack.c.l.b16 %v1830
      %v1879 = vpack.c.b16 %v1864, %v1863
      %v1880 = vpack.c.b16 %v1866, %v1865
      %v1881 = vpack.c.b16 %v1868, %v1867
      %v1882 = vpack.c.b16 %v1870, %v1869
      %v1883 = vpack.c.b16 %v1872, %v1871
      %v1884 = vpack.c.b16 %v1874, %v1873
      %v1885 = vpack.c.b16 %v1876, %v1875
      %v1886 = vpack.c.b16 %v1878, %v1877
      %1895 = vmatpush.bf16.msra.mxu0 %v1886
      %1896 = vmatpush.bf16.msra.mxu0 %v1885
      %1897 = vmatpush.bf16.msra.mxu0 %v1884
      %1898 = vmatpush.bf16.msra.mxu0 %v1883
      %1899 = vmatpush.bf16.msra.mxu0 %v1882
      %1900 = vmatpush.bf16.msra.mxu0 %v1881
      %1901 = vmatpush.bf16.msra.mxu0 %v1880
      %1902 = vmatpush.bf16.msra.mxu0 %v1879
      %1903 = vmatmul.bf16.gmra.mxu0 %v1839
      %v1904 = vpop.f32.mrf.mxu0
      %v1905 = vadd.f32 0.0, %v1904
      %v1906 = vpop.f32.mrf.mxu0
      %v1907 = vadd.f32 0.0, %v1906
      %1908 = vmatmul.bf16.gmra.mxu0 %v1840
      %v1909 = vpop.f32.mrf.mxu0
      %v1910 = vadd.f32 0.0, %v1909
      %v1911 = vpop.f32.mrf.mxu0
      %v1912 = vadd.f32 0.0, %v1911
      %1913 = vmatmul.bf16.gmra.mxu0 %v1841
      %v1914 = vpop.f32.mrf.mxu0
      %v1915 = vadd.f32 0.0, %v1914
      %v1916 = vpop.f32.mrf.mxu0
      %v1917 = vadd.f32 0.0, %v1916
      %1918 = vmatmul.bf16.gmra.mxu0 %v1842
      %v1919 = vpop.f32.mrf.mxu0
      %v1920 = vadd.f32 0.0, %v1919
      %v1921 = vpop.f32.mrf.mxu0
      %v1922 = vadd.f32 0.0, %v1921
      %1923 = vdwg.mxu0
      %v1924 = vadd.f32 %v1678, %v1905
      %v1925 = vadd.f32 %v1679, %v1907
      %v1926 = vadd.f32 %v1680, %v1910
      %v1927 = vadd.f32 %v1681, %v1912
      %v1928 = vadd.f32 %v1682, %v1915
      %v1929 = vadd.f32 %v1683, %v1917
      %v1930 = vadd.f32 %v1684, %v1920
      %v1931 = vadd.f32 %v1685, %v1922
      %s1932 = scalar_lea.vmem [#allocation2], 8
      %v1933 = vld [vmem:[%s1932] sm:$0xf]
      %v1934 = vld [vmem:[%s1932 + $0x8] sm:$0xf]
      %v1935 = vld [vmem:[%s1932 + $0x10] sm:$0xf]
      %v1936 = vld [vmem:[%s1932 + $0x18] sm:$0xf]
      %v1937 = vld [vmem:[%s1932 + $0x20] sm:$0xf]
      %v1938 = vld [vmem:[%s1932 + $0x28] sm:$0xf]
      %v1939 = vld [vmem:[%s1932 + $0x30] sm:$0xf]
      %v1940 = vld [vmem:[%s1932 + $0x38] sm:$0xf]
      %s1941 = scalar_lea.vmem %s302, 384
      %v1942 = vld [vmem:[%s1941] sm:$0xf]
      %v1943 = vld [vmem:[%s1941 + $0x4] sm:$0xf]
      %v1944 = vld [vmem:[%s1941 + $0x8] sm:$0xf]
      %v1945 = vld [vmem:[%s1941 + $0xc] sm:$0xf]
      %v1946 = vld [vmem:[%s1941 + $0x10] sm:$0xf]
      %v1947 = vld [vmem:[%s1941 + $0x14] sm:$0xf]
      %v1948 = vld [vmem:[%s1941 + $0x18] sm:$0xf]
      %v1949 = vld [vmem:[%s1941 + $0x1c] sm:$0xf]
      %v1950 = vld [vmem:[%s1941 + $0x20] sm:$0xf]
      %v1951 = vld [vmem:[%s1941 + $0x24] sm:$0xf]
      %v1952 = vld [vmem:[%s1941 + $0x28] sm:$0xf]
      %v1953 = vld [vmem:[%s1941 + $0x2c] sm:$0xf]
      %v1954 = vld [vmem:[%s1941 + $0x30] sm:$0xf]
      %v1955 = vld [vmem:[%s1941 + $0x34] sm:$0xf]
      %v1956 = vld [vmem:[%s1941 + $0x38] sm:$0xf]
      %v1957 = vld [vmem:[%s1941 + $0x3c] sm:$0xf]
      %v1966 = vunpack.c.l.b16 %v1933
      %v1967 = vunpack.c.l.b16 %v1934
      %v1968 = vunpack.c.l.b16 %v1935
      %v1969 = vunpack.c.l.b16 %v1936
      %v1970 = vunpack.c.l.b16 %v1937
      %v1971 = vunpack.c.l.b16 %v1938
      %v1972 = vunpack.c.l.b16 %v1939
      %v1973 = vunpack.c.l.b16 %v1940
      %v1974 = vpack.c.b16 %v1967, %v1966
      %v1975 = vpack.c.b16 %v1969, %v1968
      %v1976 = vpack.c.b16 %v1971, %v1970
      %v1977 = vpack.c.b16 %v1973, %v1972
      %v1998 = vunpack.c.l.b16 %v1942
      %v1999 = vunpack.c.l.b16 %v1943
      %v2000 = vunpack.c.l.b16 %v1944
      %v2001 = vunpack.c.l.b16 %v1945
      %v2002 = vunpack.c.l.b16 %v1946
      %v2003 = vunpack.c.l.b16 %v1947
      %v2004 = vunpack.c.l.b16 %v1948
      %v2005 = vunpack.c.l.b16 %v1949
      %v2006 = vunpack.c.l.b16 %v1950
      %v2007 = vunpack.c.l.b16 %v1951
      %v2008 = vunpack.c.l.b16 %v1952
      %v2009 = vunpack.c.l.b16 %v1953
      %v2010 = vunpack.c.l.b16 %v1954
      %v2011 = vunpack.c.l.b16 %v1955
      %v2012 = vunpack.c.l.b16 %v1956
      %v2013 = vunpack.c.l.b16 %v1957
      %v2014 = vpack.c.b16 %v1999, %v1998
      %v2015 = vpack.c.b16 %v2001, %v2000
      %v2016 = vpack.c.b16 %v2003, %v2002
      %v2017 = vpack.c.b16 %v2005, %v2004
      %v2018 = vpack.c.b16 %v2007, %v2006
      %v2019 = vpack.c.b16 %v2009, %v2008
      %v2020 = vpack.c.b16 %v2011, %v2010
      %v2021 = vpack.c.b16 %v2013, %v2012
      %2030 = vmatpush.bf16.msra.mxu0 %v2021
      %2031 = vmatpush.bf16.msra.mxu0 %v2020
      %2032 = vmatpush.bf16.msra.mxu0 %v2019
      %2033 = vmatpush.bf16.msra.mxu0 %v2018
      %2034 = vmatpush.bf16.msra.mxu0 %v2017
      %2035 = vmatpush.bf16.msra.mxu0 %v2016
      %2036 = vmatpush.bf16.msra.mxu0 %v2015
      %2037 = vmatpush.bf16.msra.mxu0 %v2014
      %2038 = vmatmul.bf16.gmra.mxu0 %v1974
      %v2039 = vpop.f32.mrf.mxu0
      %v2040 = vadd.f32 0.0, %v2039
      %v2041 = vpop.f32.mrf.mxu0
      %v2042 = vadd.f32 0.0, %v2041
      %2043 = vmatmul.bf16.gmra.mxu0 %v1975
      %v2044 = vpop.f32.mrf.mxu0
      %v2045 = vadd.f32 0.0, %v2044
      %v2046 = vpop.f32.mrf.mxu0
      %v2047 = vadd.f32 0.0, %v2046
      %2048 = vmatmul.bf16.gmra.mxu0 %v1976
      %v2049 = vpop.f32.mrf.mxu0
      %v2050 = vadd.f32 0.0, %v2049
      %v2051 = vpop.f32.mrf.mxu0
      %v2052 = vadd.f32 0.0, %v2051
      %2053 = vmatmul.bf16.gmra.mxu0 %v1977
      %v2054 = vpop.f32.mrf.mxu0
      %v2055 = vadd.f32 0.0, %v2054
      %v2056 = vpop.f32.mrf.mxu0
      %v2057 = vadd.f32 0.0, %v2056
      %2058 = vdwg.mxu0
      %v2059 = vadd.f32 %v1924, %v2040
      %v2060 = vadd.f32 %v1925, %v2042
      %v2061 = vadd.f32 %v1926, %v2045
      %v2062 = vadd.f32 %v1927, %v2047
      %v2063 = vadd.f32 %v1928, %v2050
      %v2064 = vadd.f32 %v1929, %v2052
      %v2065 = vadd.f32 %v1930, %v2055
      %v2066 = vadd.f32 %v1931, %v2057
      %s2067 = scalar_lea.vmem [#allocation2], 80
      %v2068 = vld [vmem:[%s2067] sm:$0xf]
      %v2069 = vld [vmem:[%s2067 + $0x8] sm:$0xf]
      %v2070 = vld [vmem:[%s2067 + $0x10] sm:$0xf]
      %v2071 = vld [vmem:[%s2067 + $0x18] sm:$0xf]
      %v2072 = vld [vmem:[%s2067 + $0x20] sm:$0xf]
      %v2073 = vld [vmem:[%s2067 + $0x28] sm:$0xf]
      %v2074 = vld [vmem:[%s2067 + $0x30] sm:$0xf]
      %v2075 = vld [vmem:[%s2067 + $0x38] sm:$0xf]
      %s2076 = scalar_lea.vmem %s302, 448
      %v2077 = vld [vmem:[%s2076] sm:$0xf]
      %v2078 = vld [vmem:[%s2076 + $0x4] sm:$0xf]
      %v2079 = vld [vmem:[%s2076 + $0x8] sm:$0xf]
      %v2080 = vld [vmem:[%s2076 + $0xc] sm:$0xf]
      %v2081 = vld [vmem:[%s2076 + $0x10] sm:$0xf]
      %v2082 = vld [vmem:[%s2076 + $0x14] sm:$0xf]
      %v2083 = vld [vmem:[%s2076 + $0x18] sm:$0xf]
      %v2084 = vld [vmem:[%s2076 + $0x1c] sm:$0xf]
      %v2085 = vld [vmem:[%s2076 + $0x20] sm:$0xf]
      %v2086 = vld [vmem:[%s2076 + $0x24] sm:$0xf]
      %v2087 = vld [vmem:[%s2076 + $0x28] sm:$0xf]
      %v2088 = vld [vmem:[%s2076 + $0x2c] sm:$0xf]
      %v2089 = vld [vmem:[%s2076 + $0x30] sm:$0xf]
      %v2090 = vld [vmem:[%s2076 + $0x34] sm:$0xf]
      %v2091 = vld [vmem:[%s2076 + $0x38] sm:$0xf]
      %v2092 = vld [vmem:[%s2076 + $0x3c] sm:$0xf]
      %v2101 = vunpack.c.l.b16 %v2068
      %v2102 = vunpack.c.l.b16 %v2069
      %v2103 = vunpack.c.l.b16 %v2070
      %v2104 = vunpack.c.l.b16 %v2071
      %v2105 = vunpack.c.l.b16 %v2072
      %v2106 = vunpack.c.l.b16 %v2073
      %v2107 = vunpack.c.l.b16 %v2074
      %v2108 = vunpack.c.l.b16 %v2075
      %v2109 = vpack.c.b16 %v2102, %v2101
      %v2110 = vpack.c.b16 %v2104, %v2103
      %v2111 = vpack.c.b16 %v2106, %v2105
      %v2112 = vpack.c.b16 %v2108, %v2107
      %v2133 = vunpack.c.l.b16 %v2077
      %v2134 = vunpack.c.l.b16 %v2078
      %v2135 = vunpack.c.l.b16 %v2079
      %v2136 = vunpack.c.l.b16 %v2080
      %v2137 = vunpack.c.l.b16 %v2081
      %v2138 = vunpack.c.l.b16 %v2082
      %v2139 = vunpack.c.l.b16 %v2083
      %v2140 = vunpack.c.l.b16 %v2084
      %v2141 = vunpack.c.l.b16 %v2085
      %v2142 = vunpack.c.l.b16 %v2086
      %v2143 = vunpack.c.l.b16 %v2087
      %v2144 = vunpack.c.l.b16 %v2088
      %v2145 = vunpack.c.l.b16 %v2089
      %v2146 = vunpack.c.l.b16 %v2090
      %v2147 = vunpack.c.l.b16 %v2091
      %v2148 = vunpack.c.l.b16 %v2092
      %v2149 = vpack.c.b16 %v2134, %v2133
      %v2150 = vpack.c.b16 %v2136, %v2135
      %v2151 = vpack.c.b16 %v2138, %v2137
      %v2152 = vpack.c.b16 %v2140, %v2139
      %v2153 = vpack.c.b16 %v2142, %v2141
      %v2154 = vpack.c.b16 %v2144, %v2143
      %v2155 = vpack.c.b16 %v2146, %v2145
      %v2156 = vpack.c.b16 %v2148, %v2147
      %2165 = vmatpush.bf16.msra.mxu0 %v2156
      %2166 = vmatpush.bf16.msra.mxu0 %v2155
      %2167 = vmatpush.bf16.msra.mxu0 %v2154
      %2168 = vmatpush.bf16.msra.mxu0 %v2153
      %2169 = vmatpush.bf16.msra.mxu0 %v2152
      %2170 = vmatpush.bf16.msra.mxu0 %v2151
      %2171 = vmatpush.bf16.msra.mxu0 %v2150
      %2172 = vmatpush.bf16.msra.mxu0 %v2149
      %2173 = vmatmul.bf16.gmra.mxu0 %v2109
      %v2174 = vpop.f32.mrf.mxu0
      %v2175 = vadd.f32 0.0, %v2174
      %v2176 = vpop.f32.mrf.mxu0
      %v2177 = vadd.f32 0.0, %v2176
      %2178 = vmatmul.bf16.gmra.mxu0 %v2110
      %v2179 = vpop.f32.mrf.mxu0
      %v2180 = vadd.f32 0.0, %v2179
      %v2181 = vpop.f32.mrf.mxu0
      %v2182 = vadd.f32 0.0, %v2181
      %2183 = vmatmul.bf16.gmra.mxu0 %v2111
      %v2184 = vpop.f32.mrf.mxu0
      %v2185 = vadd.f32 0.0, %v2184
      %v2186 = vpop.f32.mrf.mxu0
      %v2187 = vadd.f32 0.0, %v2186
      %2188 = vmatmul.bf16.gmra.mxu0 %v2112
      %v2189 = vpop.f32.mrf.mxu0
      %v2190 = vadd.f32 0.0, %v2189
      %v2191 = vpop.f32.mrf.mxu0
      %v2192 = vadd.f32 0.0, %v2191
      %2193 = vdwg.mxu0
      %v2194 = vadd.f32 %v2059, %v2175
      %v2195 = vadd.f32 %v2060, %v2177
      %v2196 = vadd.f32 %v2061, %v2180
      %v2197 = vadd.f32 %v2062, %v2182
      %v2198 = vadd.f32 %v2063, %v2185
      %v2199 = vadd.f32 %v2064, %v2187
      %v2200 = vadd.f32 %v2065, %v2190
      %v2201 = vadd.f32 %v2066, %v2192
      %v2202 = vld [vmem:[%s1932] sm:$0xf]
      %v2203 = vld [vmem:[%s1932 + $0x4] sm:$0x1]
      %v2204 = vld [vmem:[%s1932 + $0x8] sm:$0xf]
      %v2205 = vld [vmem:[%s1932 + $0xc] sm:$0x1]
      %v2206 = vld [vmem:[%s1932 + $0x10] sm:$0xf]
      %v2207 = vld [vmem:[%s1932 + $0x14] sm:$0x1]
      %v2208 = vld [vmem:[%s1932 + $0x18] sm:$0xf]
      %v2209 = vld [vmem:[%s1932 + $0x1c] sm:$0x1]
      %v2210 = vld [vmem:[%s1932 + $0x20] sm:$0xf]
      %v2211 = vld [vmem:[%s1932 + $0x24] sm:$0x1]
      %v2212 = vld [vmem:[%s1932 + $0x28] sm:$0xf]
      %v2213 = vld [vmem:[%s1932 + $0x2c] sm:$0x1]
      %v2214 = vld [vmem:[%s1932 + $0x30] sm:$0xf]
      %v2215 = vld [vmem:[%s1932 + $0x34] sm:$0x1]
      %v2216 = vld [vmem:[%s1932 + $0x38] sm:$0xf]
      %v2217 = vld [vmem:[%s1932 + $0x3c] sm:$0x1]
      %v2219 = vshrl.u32 %v2202, 16
      %v2221 = vrot.slane %v2219, 4
      %v2222 = vshll.u32 %v2202, 16
      %v2224 = vrot.slane %v2222, 5
      %v2225 = vor.u32 %v2221, %v2224
      %v2226 = vrot.slane %v2225, 4
      %v2228 = vshll.u32 %v2203, 16
      %v2230 = vrot.slane %v2228, 5
      %v2231 = vsel %vm1185, %v2226, %v2230
      %v2233 = vshrl.u32 %v2204, 16
      %v2235 = vrot.slane %v2233, 4
      %v2236 = vshll.u32 %v2204, 16
      %v2238 = vrot.slane %v2236, 5
      %v2239 = vor.u32 %v2235, %v2238
      %v2240 = vrot.slane %v2239, 4
      %v2242 = vshll.u32 %v2205, 16
      %v2244 = vrot.slane %v2242, 5
      %v2245 = vsel %vm1185, %v2240, %v2244
      %v2247 = vshrl.u32 %v2206, 16
      %v2249 = vrot.slane %v2247, 4
      %v2250 = vshll.u32 %v2206, 16
      %v2252 = vrot.slane %v2250, 5
      %v2253 = vor.u32 %v2249, %v2252
      %v2254 = vrot.slane %v2253, 4
      %v2256 = vshll.u32 %v2207, 16
      %v2258 = vrot.slane %v2256, 5
      %v2259 = vsel %vm1185, %v2254, %v2258
      %v2261 = vshrl.u32 %v2208, 16
      %v2263 = vrot.slane %v2261, 4
      %v2264 = vshll.u32 %v2208, 16
      %v2266 = vrot.slane %v2264, 5
      %v2267 = vor.u32 %v2263, %v2266
      %v2268 = vrot.slane %v2267, 4
      %v2270 = vshll.u32 %v2209, 16
      %v2272 = vrot.slane %v2270, 5
      %v2273 = vsel %vm1185, %v2268, %v2272
      %v2275 = vshrl.u32 %v2210, 16
      %v2277 = vrot.slane %v2275, 4
      %v2278 = vshll.u32 %v2210, 16
      %v2280 = vrot.slane %v2278, 5
      %v2281 = vor.u32 %v2277, %v2280
      %v2282 = vrot.slane %v2281, 4
      %v2284 = vshll.u32 %v2211, 16
      %v2286 = vrot.slane %v2284, 5
      %v2287 = vsel %vm1185, %v2282, %v2286
      %v2289 = vshrl.u32 %v2212, 16
      %v2291 = vrot.slane %v2289, 4
      %v2292 = vshll.u32 %v2212, 16
      %v2294 = vrot.slane %v2292, 5
      %v2295 = vor.u32 %v2291, %v2294
      %v2296 = vrot.slane %v2295, 4
      %v2298 = vshll.u32 %v2213, 16
      %v2300 = vrot.slane %v2298, 5
      %v2301 = vsel %vm1185, %v2296, %v2300
      %v2303 = vshrl.u32 %v2214, 16
      %v2305 = vrot.slane %v2303, 4
      %v2306 = vshll.u32 %v2214, 16
      %v2308 = vrot.slane %v2306, 5
      %v2309 = vor.u32 %v2305, %v2308
      %v2310 = vrot.slane %v2309, 4
      %v2312 = vshll.u32 %v2215, 16
      %v2314 = vrot.slane %v2312, 5
      %v2315 = vsel %vm1185, %v2310, %v2314
      %v2317 = vshrl.u32 %v2216, 16
      %v2319 = vrot.slane %v2317, 4
      %v2320 = vshll.u32 %v2216, 16
      %v2322 = vrot.slane %v2320, 5
      %v2323 = vor.u32 %v2319, %v2322
      %v2324 = vrot.slane %v2323, 4
      %v2326 = vshll.u32 %v2217, 16
      %v2328 = vrot.slane %v2326, 5
      %v2329 = vsel %vm1185, %v2324, %v2328
      %s2330 = scalar_lea.vmem %s302, 512
      %v2331 = vld [vmem:[%s2330] sm:$0xf]
      %v2332 = vld [vmem:[%s2330 + $0x4] sm:$0xf]
      %v2333 = vld [vmem:[%s2330 + $0x8] sm:$0xf]
      %v2334 = vld [vmem:[%s2330 + $0xc] sm:$0xf]
      %v2335 = vld [vmem:[%s2330 + $0x10] sm:$0xf]
      %v2336 = vld [vmem:[%s2330 + $0x14] sm:$0xf]
      %v2337 = vld [vmem:[%s2330 + $0x18] sm:$0xf]
      %v2338 = vld [vmem:[%s2330 + $0x1c] sm:$0xf]
      %v2339 = vld [vmem:[%s2330 + $0x20] sm:$0xf]
      %v2340 = vld [vmem:[%s2330 + $0x24] sm:$0xf]
      %v2341 = vld [vmem:[%s2330 + $0x28] sm:$0xf]
      %v2342 = vld [vmem:[%s2330 + $0x2c] sm:$0xf]
      %v2343 = vld [vmem:[%s2330 + $0x30] sm:$0xf]
      %v2344 = vld [vmem:[%s2330 + $0x34] sm:$0xf]
      %v2345 = vld [vmem:[%s2330 + $0x38] sm:$0xf]
      %v2346 = vld [vmem:[%s2330 + $0x3c] sm:$0xf]
      %v2347 = vunpack.c.l.b16 %v2231
      %v2348 = vunpack.c.l.b16 %v2245
      %v2349 = vunpack.c.l.b16 %v2259
      %v2350 = vunpack.c.l.b16 %v2273
      %v2351 = vunpack.c.l.b16 %v2287
      %v2352 = vunpack.c.l.b16 %v2301
      %v2353 = vunpack.c.l.b16 %v2315
      %v2354 = vunpack.c.l.b16 %v2329
      %v2355 = vpack.c.b16 %v2348, %v2347
      %v2356 = vpack.c.b16 %v2350, %v2349
      %v2357 = vpack.c.b16 %v2352, %v2351
      %v2358 = vpack.c.b16 %v2354, %v2353
      %v2379 = vunpack.c.l.b16 %v2331
      %v2380 = vunpack.c.l.b16 %v2332
      %v2381 = vunpack.c.l.b16 %v2333
      %v2382 = vunpack.c.l.b16 %v2334
      %v2383 = vunpack.c.l.b16 %v2335
      %v2384 = vunpack.c.l.b16 %v2336
      %v2385 = vunpack.c.l.b16 %v2337
      %v2386 = vunpack.c.l.b16 %v2338
      %v2387 = vunpack.c.l.b16 %v2339
      %v2388 = vunpack.c.l.b16 %v2340
      %v2389 = vunpack.c.l.b16 %v2341
      %v2390 = vunpack.c.l.b16 %v2342
      %v2391 = vunpack.c.l.b16 %v2343
      %v2392 = vunpack.c.l.b16 %v2344
      %v2393 = vunpack.c.l.b16 %v2345
      %v2394 = vunpack.c.l.b16 %v2346
      %v2395 = vpack.c.b16 %v2380, %v2379
      %v2396 = vpack.c.b16 %v2382, %v2381
      %v2397 = vpack.c.b16 %v2384, %v2383
      %v2398 = vpack.c.b16 %v2386, %v2385
      %v2399 = vpack.c.b16 %v2388, %v2387
      %v2400 = vpack.c.b16 %v2390, %v2389
      %v2401 = vpack.c.b16 %v2392, %v2391
      %v2402 = vpack.c.b16 %v2394, %v2393
      %2411 = vmatpush.bf16.msra.mxu0 %v2402
      %2412 = vmatpush.bf16.msra.mxu0 %v2401
      %2413 = vmatpush.bf16.msra.mxu0 %v2400
      %2414 = vmatpush.bf16.msra.mxu0 %v2399
      %2415 = vmatpush.bf16.msra.mxu0 %v2398
      %2416 = vmatpush.bf16.msra.mxu0 %v2397
      %2417 = vmatpush.bf16.msra.mxu0 %v2396
      %2418 = vmatpush.bf16.msra.mxu0 %v2395
      %2419 = vmatmul.bf16.gmra.mxu0 %v2355
      %v2420 = vpop.f32.mrf.mxu0
      %v2421 = vadd.f32 0.0, %v2420
      %v2422 = vpop.f32.mrf.mxu0
      %v2423 = vadd.f32 0.0, %v2422
      %2424 = vmatmul.bf16.gmra.mxu0 %v2356
      %v2425 = vpop.f32.mrf.mxu0
      %v2426 = vadd.f32 0.0, %v2425
      %v2427 = vpop.f32.mrf.mxu0
      %v2428 = vadd.f32 0.0, %v2427
      %2429 = vmatmul.bf16.gmra.mxu0 %v2357
      %v2430 = vpop.f32.mrf.mxu0
      %v2431 = vadd.f32 0.0, %v2430
      %v2432 = vpop.f32.mrf.mxu0
      %v2433 = vadd.f32 0.0, %v2432
      %2434 = vmatmul.bf16.gmra.mxu0 %v2358
      %v2435 = vpop.f32.mrf.mxu0
      %v2436 = vadd.f32 0.0, %v2435
      %v2437 = vpop.f32.mrf.mxu0
      %v2438 = vadd.f32 0.0, %v2437
      %2439 = vdwg.mxu0
      %v2440 = vadd.f32 %v2194, %v2421
      %v2441 = vadd.f32 %v2195, %v2423
      %v2442 = vadd.f32 %v2196, %v2426
      %v2443 = vadd.f32 %v2197, %v2428
      %v2444 = vadd.f32 %v2198, %v2431
      %v2445 = vadd.f32 %v2199, %v2433
      %v2446 = vadd.f32 %v2200, %v2436
      %v2447 = vadd.f32 %v2201, %v2438
      %v2448 = vld [vmem:[%s305] sm:$0x1]
      %v2450 = vperm.slane %v2448, 0
      %v2452 = vmul.f32 %v2440, %v2450
      %v2453 = vmul.f32 %v2441, %v2450
      %v2454 = vmul.f32 %v2442, %v2450
      %v2455 = vmul.f32 %v2443, %v2450
      %v2456 = vmul.f32 %v2444, %v2450
      %v2457 = vmul.f32 %v2445, %v2450
      %v2458 = vmul.f32 %v2446, %v2450
      %v2459 = vmul.f32 %v2447, %v2450
      %v2460 = vld [vmem:[%s308] sm:$0x1]
      %v2462 = vperm.slane %v2460, 0
      %v2464 = vadd.f32 %v2452, %v2462
      %v2465 = vadd.f32 %v2453, %v2462
      %v2466 = vadd.f32 %v2454, %v2462
      %v2467 = vadd.f32 %v2455, %v2462
      %v2468 = vadd.f32 %v2456, %v2462
      %v2469 = vadd.f32 %v2457, %v2462
      %v2470 = vadd.f32 %v2458, %v2462
      %v2471 = vadd.f32 %v2459, %v2462
      %v2472 = vmax.f32 %v2464, 0.0
      %v2473 = vmax.f32 %v2465, 0.0
      %v2474 = vmax.f32 %v2466, 0.0
      %v2475 = vmax.f32 %v2467, 0.0
      %v2476 = vmax.f32 %v2468, 0.0
      %v2477 = vmax.f32 %v2469, 0.0
      %v2478 = vmax.f32 %v2470, 0.0
      %v2479 = vmax.f32 %v2471, 0.0
      %2480 = vst [vmem:[%s316] sm:$0xf] 0
      %2481 = vst [vmem:[%s316 + $0x4] sm:$0x1] 0
      %2482 = vst [vmem:[%s316 + $0x8] sm:$0xf] 0
      %2483 = vst [vmem:[%s316 + $0xc] sm:$0x1] 0
      %2484 = vst [vmem:[%s316 + $0x10] sm:$0xf] 0
      %2485 = vst [vmem:[%s316 + $0x14] sm:$0x1] 0
      %2486 = vst [vmem:[%s316 + $0x18] sm:$0xf] 0
      %2487 = vst [vmem:[%s316 + $0x1c] sm:$0x1] 0
      %2488 = vst [vmem:[%s316 + $0x20] sm:$0xf] 0
      %2489 = vst [vmem:[%s316 + $0x24] sm:$0x1] 0
      %2490 = vst [vmem:[%s316 + $0x28] sm:$0xf] 0
      %2491 = vst [vmem:[%s316 + $0x2c] sm:$0x1] 0
      %2492 = vst [vmem:[%s316 + $0x30] sm:$0xf] 0
      %2493 = vst [vmem:[%s316 + $0x34] sm:$0x1] 0
      %2494 = vst [vmem:[%s316 + $0x38] sm:$0xf] 0
      %2495 = vst [vmem:[%s316 + $0x3c] sm:$0x1] 0
      %2496 = vst [vmem:[%s316 + $0x40] sm:$0xf] 0
      %2497 = vst [vmem:[%s316 + $0x44] sm:$0x1] 0
      %2498 = vst [vmem:[%s316 + $0x48] sm:$0xf] 0
      %2499 = vst [vmem:[%s316 + $0x4c] sm:$0x1] 0
      %v2500 = vpack.c.bf16 %v2472, %v2472
      %v2501 = vpack.c.bf16 %v2473, %v2473
      %v2502 = vpack.c.bf16 %v2474, %v2474
      %v2503 = vpack.c.bf16 %v2475, %v2475
      %v2504 = vpack.c.bf16 %v2476, %v2476
      %v2505 = vpack.c.bf16 %v2477, %v2477
      %v2506 = vpack.c.bf16 %v2478, %v2478
      %v2507 = vpack.c.bf16 %v2479, %v2479
      %v2509 = vshrl.u32 %v2500, 16
      %v2511 = vrot.slane %v2509, 7
      %v2512 = vshll.u32 %v2500, 16
      %v2514 = vor.u32 %v2511, %v2512
      %v2515 = vrot.slane %v2511, 4
      %v2517 = vshrl.u32 %v2501, 16
      %v2519 = vrot.slane %v2517, 7
      %v2520 = vshll.u32 %v2501, 16
      %v2522 = vor.u32 %v2519, %v2520
      %v2523 = vrot.slane %v2519, 4
      %v2525 = vshrl.u32 %v2502, 16
      %v2527 = vrot.slane %v2525, 7
      %v2528 = vshll.u32 %v2502, 16
      %v2530 = vor.u32 %v2527, %v2528
      %v2531 = vrot.slane %v2527, 4
      %v2533 = vshrl.u32 %v2503, 16
      %v2535 = vrot.slane %v2533, 7
      %v2536 = vshll.u32 %v2503, 16
      %v2538 = vor.u32 %v2535, %v2536
      %v2539 = vrot.slane %v2535, 4
      %v2541 = vshrl.u32 %v2504, 16
      %v2543 = vrot.slane %v2541, 7
      %v2544 = vshll.u32 %v2504, 16
      %v2546 = vor.u32 %v2543, %v2544
      %v2547 = vrot.slane %v2543, 4
      %v2549 = vshrl.u32 %v2505, 16
      %v2551 = vrot.slane %v2549, 7
      %v2552 = vshll.u32 %v2505, 16
      %v2554 = vor.u32 %v2551, %v2552
      %v2555 = vrot.slane %v2551, 4
      %v2557 = vshrl.u32 %v2506, 16
      %v2559 = vrot.slane %v2557, 7
      %v2560 = vshll.u32 %v2506, 16
      %v2562 = vor.u32 %v2559, %v2560
      %v2563 = vrot.slane %v2559, 4
      %v2565 = vshrl.u32 %v2507, 16
      %v2567 = vrot.slane %v2565, 7
      %v2568 = vshll.u32 %v2507, 16
      %v2570 = vor.u32 %v2567, %v2568
      %v2571 = vrot.slane %v2567, 4
      %s2588 = scalar_lea.vmem %s316, 8
      %vm2589 = vcmask 1043456
      %vm2590 = vsmask.f32 7938
      %vm2591 = vmand %vm2589, %vm2590
      %v2592 = vld [vmem:[%s2588] sm:$0xf]
      %v2593 = vsel %vm2591, %v2514, %v2592
      %2594 = vst [vmem:[%s2588] sm:$0xf] %v2593
      %vm2595 = vcmask 1040384
      %vm2596 = vsmask.f32 256
      %vm2597 = vmand %vm2595, %vm2596
      %v2598 = vld [vmem:[%s2588 + $0x4] sm:$0x1]
      %v2599 = vsel %vm2597, %v2515, %v2598
      %2600 = vst [vmem:[%s2588 + $0x4] sm:$0x1] %v2599
      %v2601 = vld [vmem:[%s2588 + $0x8] sm:$0xf]
      %v2602 = vsel %vm2591, %v2522, %v2601
      %2603 = vst [vmem:[%s2588 + $0x8] sm:$0xf] %v2602
      %v2604 = vld [vmem:[%s2588 + $0xc] sm:$0x1]
      %v2605 = vsel %vm2597, %v2523, %v2604
      %2606 = vst [vmem:[%s2588 + $0xc] sm:$0x1] %v2605
      %v2607 = vld [vmem:[%s2588 + $0x10] sm:$0xf]
      %v2608 = vsel %vm2591, %v2530, %v2607
      %2609 = vst [vmem:[%s2588 + $0x10] sm:$0xf] %v2608
      %v2610 = vld [vmem:[%s2588 + $0x14] sm:$0x1]
      %v2611 = vsel %vm2597, %v2531, %v2610
      %2612 = vst [vmem:[%s2588 + $0x14] sm:$0x1] %v2611
      %v2613 = vld [vmem:[%s2588 + $0x18] sm:$0xf]
      %v2614 = vsel %vm2591, %v2538, %v2613
      %2615 = vst [vmem:[%s2588 + $0x18] sm:$0xf] %v2614
      %v2616 = vld [vmem:[%s2588 + $0x1c] sm:$0x1]
      %v2617 = vsel %vm2597, %v2539, %v2616
      %2618 = vst [vmem:[%s2588 + $0x1c] sm:$0x1] %v2617
      %v2619 = vld [vmem:[%s2588 + $0x20] sm:$0xf]
      %v2620 = vsel %vm2591, %v2546, %v2619
      %2621 = vst [vmem:[%s2588 + $0x20] sm:$0xf] %v2620
      %v2622 = vld [vmem:[%s2588 + $0x24] sm:$0x1]
      %v2623 = vsel %vm2597, %v2547, %v2622
      %2624 = vst [vmem:[%s2588 + $0x24] sm:$0x1] %v2623
      %v2625 = vld [vmem:[%s2588 + $0x28] sm:$0xf]
      %v2626 = vsel %vm2591, %v2554, %v2625
      %2627 = vst [vmem:[%s2588 + $0x28] sm:$0xf] %v2626
      %v2628 = vld [vmem:[%s2588 + $0x2c] sm:$0x1]
      %v2629 = vsel %vm2597, %v2555, %v2628
      %2630 = vst [vmem:[%s2588 + $0x2c] sm:$0x1] %v2629
      %v2631 = vld [vmem:[%s2588 + $0x30] sm:$0xf]
      %v2632 = vsel %vm2591, %v2562, %v2631
      %2633 = vst [vmem:[%s2588 + $0x30] sm:$0xf] %v2632
      %v2634 = vld [vmem:[%s2588 + $0x34] sm:$0x1]
      %v2635 = vsel %vm2597, %v2563, %v2634
      %2636 = vst [vmem:[%s2588 + $0x34] sm:$0x1] %v2635
      %v2637 = vld [vmem:[%s2588 + $0x38] sm:$0xf]
      %v2638 = vsel %vm2591, %v2570, %v2637
      %2639 = vst [vmem:[%s2588 + $0x38] sm:$0xf] %v2638
      %v2640 = vld [vmem:[%s2588 + $0x3c] sm:$0x1]
      %v2641 = vsel %vm2597, %v2571, %v2640
      %2642 = vst [vmem:[%s2588 + $0x3c] sm:$0x1] %v2641
      %p2643 = scmp.lt.s32.totalorder %s21, 1
      %s2644 = scalar_select %p2643, %s21, 1
      %p2645 = scmp.lt.s32.totalorder %s22, 0
      %s2646 = scalar_select %p2645, %s22, 0
      %s2647 = smul.addr %s2644, 20
      %s2648 = sadd.s32 %s2646, %s2647
      %s2649 = smul.addr %s2648, 4
      %s2650 = scalar_lea.vmem %s6, %s2649
      // Predicated region
      $region49: #{basic_block_v2_forward.2} parent=43 // pred_check
        %p2651 = pneg %p195
      $region50: #{basic_block_v2_forward.2} parent=43 // pred_check_branch
        %2653 = sbr.rel (%p2651) target = $region52
      $region51: #{basic_block_v2_forward.2} parent=43 // pred_region
        _
      $region52: #{basic_block_v2_forward.2} parent=43 // pred_fallthru
        _
    $region44: #{basic_block_v2_forward.2} parent=5 // pred_fallthru
      _
    %p2654 = scmp.le.s32.totalorder 2, %s12
    // Predicated region
    $region53: #{basic_block_v2_forward.2} parent=5 // pred_check
      %p2655 = pneg %p2654
    $region54: #{basic_block_v2_forward.2} parent=5 // pred_check_branch
      %2657 = sbr.rel (%p2655) target = $region56
    $region55: #{basic_block_v2_forward.2} parent=5 // pred_region
      %s2658 = ssub.s32 %s12, 2
      // Predicated region
      $region57: #{basic_block_v2_forward.2} parent=55 // pred_check
        %p2659 = pneg %p201
      $region58: #{basic_block_v2_forward.2} parent=55 // pred_check_branch
        %2661 = sbr.rel (%p2659) target = $region60
      $region59: #{basic_block_v2_forward.2} parent=55 // pred_region
        %p2662 = scmp.lt.s32.totalorder %s23, 1
        %s2663 = scalar_select %p2662, %s23, 1
        %p2664 = scmp.lt.s32.totalorder %s24, 0
        %s2665 = scalar_select %p2664, %s24, 0
        %s2666 = smul.addr %s2663, 20
        %s2667 = sadd.s32 %s2665, %s2666
        %s2668 = smul.addr %s2667, 4
        %s2669 = scalar_lea.vmem %s6, %s2668
      $region60: #{basic_block_v2_forward.2} parent=55 // pred_fallthru
        _
    $region56: #{basic_block_v2_forward.2} parent=5 // pred_fallthru
      _
  $region6: #{basic_block_v2_forward.2} parent=0 // loop_footer
    %s16 = sadd.s32 1, %s12
  $region7: #{basic_block_v2_forward.2} parent=0 // loop_footer_branch
    %11 = sbr.rel target = $region3
  $region8: #{basic_block_v2_forward.2} parent=0 // loop_exit
    _

// kernel: basic_block_v2_forward.3
$region0: #{basic_block_v2_forward.3}
  #allocation0 [shape = 'u32[]', space=smem, size = 0x4, offset = 0x4, fixed_abs, tag = 'smem constant byte address 0x4 - core index']
  #allocation1 [shape = 'u32[72,128]{1,0:T(1,128)}', space=vmem, size = 0x9000, scoped, tag = 'internal scratch']
  #allocation2 [shape = 'bf16[64,128]{1,0:T(8,128)(2,1)}', space=vmem, size = 0x4000, scoped, tag = 'scratch operand']
  %s0 = inlined_call_operand.vmem [shape: bf16[2,10,10,128], index: 0, kind: input, shape index: {}]
  %s1 = inlined_call_operand.vmem [shape: bf16[9,128,128], index: 1, kind: input, shape index: {}]
  %s2 = inlined_call_operand.vmem [shape: bf16[2,64,128], index: 2, kind: input, shape index: {}]
  %s3 = inlined_call_operand.vmem [shape: f32[1,128], index: 3, kind: input, shape index: {}]
  %s4 = inlined_call_operand.vmem [shape: f32[1,128], index: 4, kind: input, shape index: {}]
  %s5 = inlined_call_operand.vmem [shape: bf16[128,128], index: 5, kind: input, shape index: {}]
  %s6 = inlined_call_operand.vmem [shape: f32[2,64,128], index: 6, kind: output, shape index: {}]
  %s7 = sld [smem:[#allocation0]]
  $region61: #{basic_block_v2_forward.3} parent=0
    _
  %s9 = ssub.s32 1, %s7
  %s10 = scalar_select 0, %s9, %s7
  loop: start=0, step=1, limit=4
  $region2: #{basic_block_v2_forward.3} parent=0 // loop_pre_header
    _
  $region3: #{basic_block_v2_forward.3} parent=0 // loop_header
    %s12 = sphi 0, %s16
    %p13 = scmp.ge.s32.totalorder %s12, 4
    %s19 = sphi 0, %s31
    %s20 = sphi 0, %s27
    %s21 = sphi 0, %s19
    %s22 = sphi 0, %s20
    %s23 = sphi 0, %s21
    %s24 = sphi 0, %s22
    %s34 = sphi 0, %s36
    %s37 = sphi 0, %s34
    %s38 = sphi 0, %s37
    %s54 = sphi 0, %s38
    %s60 = sphi 0, %s62
    %s63 = sphi 0, %s60
    %s64 = sphi 0, %s63
    %s80 = sphi 0, %s64
    %s86 = sphi 0, %s88
    %s89 = sphi 0, %s86
    %s90 = sphi 0, %s89
    %s106 = sphi 0, %s90
    %s110 = sphi 0, %s110
    %s112 = sphi 0, %s110
    %s113 = sphi 0, %s112
    %s127 = sphi 0, %s113
    %s131 = sphi 0, %s131
    %s133 = sphi 0, %s131
    %s134 = sphi 0, %s133
    %s148 = sphi 0, %s134
    %s154 = sphi 0, %s156
    %s157 = sphi 0, %s154
    %s158 = sphi 0, %s157
    %s174 = sphi 0, %s158
    %s182 = sphi 0, %s184
    %s185 = sphi 0, %s182
    %s186 = sphi 0, %s185
    %s202 = sphi 0, %s186
  $region4: #{basic_block_v2_forward.3} parent=0 // loop_header_branch
    %15 = sbr.rel (%p13) target = $region8
  $region5: #{basic_block_v2_forward.3} parent=0 // loop_body
    %s17 = ssub.s32 %s12, 1
    %s18 = ssub.s32 %s12, 2
    %s25 = sadd.s32 1, %s20
    %p26 = scmp.ge.s32.totalorder %s25, 1
    %s27 = scalar_select %p26, 0, %s25
    %s28 = sadd.s32 1, %s19
    %s29 = scalar_select %p26, %s28, %s19
    %p30 = scmp.ge.s32.totalorder %s29, 2
    %s31 = scalar_select %p30, 0, %s29
    %s32 = ssub.s32 %s19, %s31
    %p33 = scmp.eq.s32.totalorder %s32, 0
    %s35 = sadd.s32 %s34, 1
    %s36 = scalar_select %p33, %s34, %s35
    %p39 = pneg %p33
    %p40 = scmp.eq.s32.totalorder %s12, 1
    %p41 = por %p39, %p40
    %p42 = scmp.ne.s32.totalorder %s34, %s37
    %p43 = scmp.eq.s32.totalorder %s12, 0
    %p44 = por %p42, %p43
    %p45 = scmp.ne.s32.totalorder %s34, %s37
    %p46 = scmp.eq.s32.totalorder %s17, 1
    %p47 = por %p45, %p46
    %p48 = scmp.ne.s32.totalorder %s37, %s38
    %p49 = scmp.eq.s32.totalorder %s17, 0
    %p50 = por %p48, %p49
    %p51 = scmp.ne.s32.totalorder %s37, %s38
    %p52 = scmp.eq.s32.totalorder %s18, 1
    %p53 = por %p51, %p52
    %p55 = scmp.ne.s32.totalorder %s38, %s54
    %p56 = scmp.eq.s32.totalorder %s18, 0
    %p57 = por %p55, %p56
    %s58 = ssub.s32 %s20, %s27
    %p59 = scmp.eq.s32.totalorder %s58, 0
    %s61 = sadd.s32 %s60, 1
    %s62 = scalar_select %p59, %s60, %s61
    %p65 = pneg %p59
    %p66 = scmp.eq.s32.totalorder %s12, 1
    %p67 = por %p65, %p66
    %p68 = scmp.ne.s32.totalorder %s60, %s63
    %p69 = scmp.eq.s32.totalorder %s12, 0
    %p70 = por %p68, %p69
    %p71 = scmp.ne.s32.totalorder %s60, %s63
    %p72 = scmp.eq.s32.totalorder %s17, 1
    %p73 = por %p71, %p72
    %p74 = scmp.ne.s32.totalorder %s63, %s64
    %p75 = scmp.eq.s32.totalorder %s17, 0
    %p76 = por %p74, %p75
    %p77 = scmp.ne.s32.totalorder %s63, %s64
    %p78 = scmp.eq.s32.totalorder %s18, 1
    %p79 = por %p77, %p78
    %p81 = scmp.ne.s32.totalorder %s64, %s80
    %p82 = scmp.eq.s32.totalorder %s18, 0
    %p83 = por %p81, %p82
    %s84 = ssub.s32 %s19, %s31
    %p85 = scmp.eq.s32.totalorder %s84, 0
    %s87 = sadd.s32 %s86, 1
    %s88 = scalar_select %p85, %s86, %s87
    %p91 = pneg %p85
    %p92 = scmp.eq.s32.totalorder %s12, 1
    %p93 = por %p91, %p92
    %p94 = scmp.ne.s32.totalorder %s86, %s89
    %p95 = scmp.eq.s32.totalorder %s12, 0
    %p96 = por %p94, %p95
    %p97 = scmp.ne.s32.totalorder %s86, %s89
    %p98 = scmp.eq.s32.totalorder %s17, 1
    %p99 = por %p97, %p98
    %p100 = scmp.ne.s32.totalorder %s89, %s90
    %p101 = scmp.eq.s32.totalorder %s17, 0
    %p102 = por %p100, %p101
    %p103 = scmp.ne.s32.totalorder %s89, %s90
    %p104 = scmp.eq.s32.totalorder %s18, 1
    %p105 = por %p103, %p104
    %p107 = scmp.ne.s32.totalorder %s90, %s106
    %p108 = scmp.eq.s32.totalorder %s18, 0
    %p109 = por %p107, %p108
    %s111 = sadd.s32 %s110, 1
    %p114 = scmp.eq.s32.totalorder %s12, 1
    %p115 = scmp.ne.s32.totalorder %s110, %s112
    %p116 = scmp.eq.s32.totalorder %s12, 0
    %p117 = por %p115, %p116
    %p118 = scmp.ne.s32.totalorder %s110, %s112
    %p119 = scmp.eq.s32.totalorder %s17, 1
    %p120 = por %p118, %p119
    %p121 = scmp.ne.s32.totalorder %s112, %s113
    %p122 = scmp.eq.s32.totalorder %s17, 0
    %p123 = por %p121, %p122
    %p124 = scmp.ne.s32.totalorder %s112, %s113
    %p125 = scmp.eq.s32.totalorder %s18, 1
    %p126 = por %p124, %p125
    %p128 = scmp.ne.s32.totalorder %s113, %s127
    %p129 = scmp.eq.s32.totalorder %s18, 0
    %p130 = por %p128, %p129
    %s132 = sadd.s32 %s131, 1
    %p135 = scmp.eq.s32.totalorder %s12, 1
    %p136 = scmp.ne.s32.totalorder %s131, %s133
    %p137 = scmp.eq.s32.totalorder %s12, 0
    %p138 = por %p136, %p137
    %p139 = scmp.ne.s32.totalorder %s131, %s133
    %p140 = scmp.eq.s32.totalorder %s17, 1
    %p141 = por %p139, %p140
    %p142 = scmp.ne.s32.totalorder %s133, %s134
    %p143 = scmp.eq.s32.totalorder %s17, 0
    %p144 = por %p142, %p143
    %p145 = scmp.ne.s32.totalorder %s133, %s134
    %p146 = scmp.eq.s32.totalorder %s18, 1
    %p147 = por %p145, %p146
    %p149 = scmp.ne.s32.totalorder %s134, %s148
    %p150 = scmp.eq.s32.totalorder %s18, 0
    %p151 = por %p149, %p150
    %s152 = ssub.s32 %s20, %s27
    %p153 = scmp.eq.s32.totalorder %s152, 0
    %s155 = sadd.s32 %s154, 1
    %s156 = scalar_select %p153, %s154, %s155
    %p159 = pneg %p153
    %p160 = scmp.eq.s32.totalorder %s12, 1
    %p161 = por %p159, %p160
    %p162 = scmp.ne.s32.totalorder %s154, %s157
    %p163 = scmp.eq.s32.totalorder %s12, 0
    %p164 = por %p162, %p163
    %p165 = scmp.ne.s32.totalorder %s154, %s157
    %p166 = scmp.eq.s32.totalorder %s17, 1
    %p167 = por %p165, %p166
    %p168 = scmp.ne.s32.totalorder %s157, %s158
    %p169 = scmp.eq.s32.totalorder %s17, 0
    %p170 = por %p168, %p169
    %p171 = scmp.ne.s32.totalorder %s157, %s158
    %p172 = scmp.eq.s32.totalorder %s18, 1
    %p173 = por %p171, %p172
    %p175 = scmp.ne.s32.totalorder %s158, %s174
    %p176 = scmp.eq.s32.totalorder %s18, 0
    %p177 = por %p175, %p176
    %s178 = ssub.s32 %s19, %s31
    %s179 = ssub.s32 %s20, %s27
    %s180 = sor.u32 %s178, %s179
    %p181 = scmp.eq.s32.totalorder %s180, 0
    %s183 = sadd.s32 %s182, 1
    %s184 = scalar_select %p181, %s182, %s183
    %p187 = pneg %p181
    %p188 = scmp.eq.s32.totalorder %s12, 1
    %p189 = por %p187, %p188
    %p190 = scmp.ne.s32.totalorder %s182, %s185
    %p191 = scmp.eq.s32.totalorder %s12, 0
    %p192 = por %p190, %p191
    %p193 = scmp.ne.s32.totalorder %s182, %s185
    %p194 = scmp.eq.s32.totalorder %s17, 1
    %p195 = por %p193, %p194
    %p196 = scmp.ne.s32.totalorder %s185, %s186
    %p197 = scmp.eq.s32.totalorder %s17, 0
    %p198 = por %p196, %p197
    %p199 = scmp.ne.s32.totalorder %s185, %s186
    %p200 = scmp.eq.s32.totalorder %s18, 1
    %p201 = por %p199, %p200
    %p203 = scmp.ne.s32.totalorder %s186, %s202
    %p204 = scmp.eq.s32.totalorder %s18, 0
    %p205 = por %p203, %p204
    %p206 = scmp.le.s32.totalorder 1, %s12
    %p207 = scmp.lt.s32.totalorder %s12, 3
    %p208 = pnand %p206, %p207
    %p209 = pneg %p208
    // Predicated region
    $region9: #{basic_block_v2_forward.3} parent=5 // pred_check
      _
    $region10: #{basic_block_v2_forward.3} parent=5 // pred_check_branch
      %211 = sbr.rel (%p208) target = $region12
    $region11: #{basic_block_v2_forward.3} parent=5 // pred_region
      %s212 = ssub.s32 %s12, 1
      // Predicated region
      $region13: #{basic_block_v2_forward.3} parent=11 // pred_check
        %p213 = pneg %p76
      $region14: #{basic_block_v2_forward.3} parent=11 // pred_check_branch
        %215 = sbr.rel (%p213) target = $region16
      $region15: #{basic_block_v2_forward.3} parent=11 // pred_region
        %p216 = scmp.lt.s32.totalorder %s22, 0
        %s217 = scalar_select %p216, %s22, 0
        %s218 = smul.addr %s217, 4
        %s219 = scalar_lea.vmem %s1, %s218
      $region16: #{basic_block_v2_forward.3} parent=11 // pred_fallthru
        _
      // Predicated region
      $region17: #{basic_block_v2_forward.3} parent=11 // pred_check
        %p220 = pneg %p123
      $region18: #{basic_block_v2_forward.3} parent=11 // pred_check_branch
        %222 = sbr.rel (%p220) target = $region20
      $region19: #{basic_block_v2_forward.3} parent=11 // pred_region
        _
      $region20: #{basic_block_v2_forward.3} parent=11 // pred_fallthru
        _
      // Predicated region
      $region21: #{basic_block_v2_forward.3} parent=11 // pred_check
        %p223 = pneg %p144
      $region22: #{basic_block_v2_forward.3} parent=11 // pred_check_branch
        %225 = sbr.rel (%p223) target = $region24
      $region23: #{basic_block_v2_forward.3} parent=11 // pred_region
        _
      $region24: #{basic_block_v2_forward.3} parent=11 // pred_fallthru
        _
      // Predicated region
      $region25: #{basic_block_v2_forward.3} parent=11 // pred_check
        %p226 = pneg %p170
      $region26: #{basic_block_v2_forward.3} parent=11 // pred_check_branch
        %228 = sbr.rel (%p226) target = $region28
      $region27: #{basic_block_v2_forward.3} parent=11 // pred_region
        %p229 = scmp.lt.s32.totalorder %s22, 0
        %s230 = scalar_select %p229, %s22, 0
        %s231 = smul.addr %s230, 4
        %s232 = scalar_lea.vmem %s5, %s231
      $region28: #{basic_block_v2_forward.3} parent=11 // pred_fallthru
        _
    $region12: #{basic_block_v2_forward.3} parent=5 // pred_fallthru
      _
    %p233 = scmp.lt.s32.totalorder %s12, 2
    // Predicated region
    $region29: #{basic_block_v2_forward.3} parent=5 // pred_check
      %p234 = pneg %p233
    $region30: #{basic_block_v2_forward.3} parent=5 // pred_check_branch
      %236 = sbr.rel (%p234) target = $region32
    $region31: #{basic_block_v2_forward.3} parent=5 // pred_region
      // Predicated region
      $region33: #{basic_block_v2_forward.3} parent=31 // pred_check
        %p237 = pneg %p44
      $region34: #{basic_block_v2_forward.3} parent=31 // pred_check_branch
        %239 = sbr.rel (%p237) target = $region36
      $region35: #{basic_block_v2_forward.3} parent=31 // pred_region
        %p240 = scmp.lt.s32.totalorder %s19, 1
        %s241 = scalar_select %p240, %s19, 1
        %s242 = smul.addr %s241, 20
        %s243 = smul.addr %s242, 4
        %s244 = scalar_lea.vmem %s0, %s243
      $region36: #{basic_block_v2_forward.3} parent=31 // pred_fallthru
        _
      // Predicated region
      $region37: #{basic_block_v2_forward.3} parent=31 // pred_check
        %p245 = pneg %p96
      $region38: #{basic_block_v2_forward.3} parent=31 // pred_check_branch
        %247 = sbr.rel (%p245) target = $region40
      $region39: #{basic_block_v2_forward.3} parent=31 // pred_region
        %p248 = scmp.lt.s32.totalorder %s19, 1
        %s249 = scalar_select %p248, %s19, 1
        %s250 = smul.addr %s249, 8
        %s251 = smul.addr %s250, 4
        %s252 = scalar_lea.vmem %s2, %s251
      $region40: #{basic_block_v2_forward.3} parent=31 // pred_fallthru
        _
    $region32: #{basic_block_v2_forward.3} parent=5 // pred_fallthru
      _
    %p253 = scmp.le.s32.totalorder 1, %s12
    %p254 = scmp.lt.s32.totalorder %s12, 3
    %p255 = pnand %p253, %p254
    %p256 = pneg %p255
    // Predicated region
    $region41: #{basic_block_v2_forward.3} parent=5 // pred_check
      _
    $region42: #{basic_block_v2_forward.3} parent=5 // pred_check_branch
      %258 = sbr.rel (%p255) target = $region44
    $region43: #{basic_block_v2_forward.3} parent=5 // pred_region
      %s259 = ssub.s32 %s12, 1
      %p260 = scmp.lt.s32.totalorder %s21, 1
      %s261 = scalar_select %p260, %s21, 1
      %s262 = smul.addr %s261, 20
      %s263 = smul.addr %s262, 4
      %s264 = scalar_lea.vmem %s0, %s263
      %p265 = pneg %p50
      %p266 = pneg %p47
      %p267 = scmp.lt.s32.totalorder %s22, 0
      %s268 = scalar_select %p267, %s22, 0
      %s269 = smul.addr %s268, 4
      %s270 = scalar_lea.vmem %s1, %s269
      %p271 = pneg %p76
      %p272 = pneg %p73
      %p273 = scmp.lt.s32.totalorder %s21, 1
      %s274 = scalar_select %p273, %s21, 1
      %s275 = smul.addr %s274, 8
      %s276 = smul.addr %s275, 4
      %s277 = scalar_lea.vmem %s2, %s276
      %p278 = pneg %p102
      %p279 = pneg %p99
      %p280 = pneg %p123
      %p281 = pneg %p120
      %p282 = pneg %p144
      %p283 = pneg %p141
      %p284 = scmp.lt.s32.totalorder %s22, 0
      %s285 = scalar_select %p284, %s22, 0
      %s286 = smul.addr %s285, 4
      %s287 = scalar_lea.vmem %s5, %s286
      %p288 = pneg %p170
      %p289 = pneg %p167
      %p290 = pneg %p198
      %p291 = pneg %p195
      %p292 = scmp.lt.s32.totalorder %s21, 1
      %s293 = scalar_select %p292, %s21, 1
      %p294 = scmp.lt.s32.totalorder %s22, 0
      %s295 = scalar_select %p294, %s22, 0
      %s296 = smul.addr %s293, 8
      %s297 = sadd.s32 %s295, %s296
      %s298 = smul.addr %s297, 8
      %s299 = scalar_lea.vmem %s6, %s298
      %p300 = scmp.lt.s32.totalorder %s21, 1
      %s301 = scalar_select %p300, %s21, 1
      %s302 = smul.addr %s301, 20
      %s303 = smul.addr %s302, 4
      %s304 = scalar_lea.vmem %s0, %s303
      %p305 = scmp.lt.s32.totalorder %s22, 0
      %s306 = scalar_select %p305, %s22, 0
      %s307 = smul.addr %s306, 4
      %s308 = scalar_lea.vmem %s1, %s307
      %p309 = scmp.lt.s32.totalorder %s21, 1
      %s310 = scalar_select %p309, %s21, 1
      %s311 = smul.addr %s310, 8
      %s312 = smul.addr %s311, 4
      %s313 = scalar_lea.vmem %s2, %s312
      %p314 = scmp.lt.s32.totalorder %s22, 0
      %s315 = scalar_select %p314, %s22, 0
      %s316 = smul.addr %s315, 4
      %s317 = scalar_lea.vmem %s5, %s316
      %p318 = scmp.lt.s32.totalorder %s21, 1
      %s319 = scalar_select %p318, %s21, 1
      %p320 = scmp.lt.s32.totalorder %s22, 0
      %s321 = scalar_select %p320, %s22, 0
      %s322 = smul.addr %s319, 8
      %s323 = sadd.s32 %s321, %s322
      %s324 = smul.addr %s323, 8
      %s325 = scalar_lea.vmem %s6, %s324
      %p326 = scmp.eq.s32.totalorder %s22, 0
      // Predicated region
      $region45: #{basic_block_v2_forward.3} parent=43 // pred_check
        %p327 = pneg %p326
      $region46: #{basic_block_v2_forward.3} parent=43 // pred_check_branch
        %329 = sbr.rel (%p327) target = $region48
      $region47: #{basic_block_v2_forward.3} parent=43 // pred_region
        %v330 = vld [vmem:[%s313] sm:$0xf]
        %v331 = vld [vmem:[%s313 + $0x4] sm:$0xf]
        %v332 = vld [vmem:[%s313 + $0x8] sm:$0xf]
        %v333 = vld [vmem:[%s313 + $0xc] sm:$0xf]
        %v334 = vld [vmem:[%s313 + $0x10] sm:$0xf]
        %v335 = vld [vmem:[%s313 + $0x14] sm:$0xf]
        %v336 = vld [vmem:[%s313 + $0x18] sm:$0xf]
        %v337 = vld [vmem:[%s313 + $0x1c] sm:$0xf]
        %v338 = vunpack.c.l.bf16 %v330
        %v339 = vunpack.c.l.bf16 %v331
        %v340 = vunpack.c.l.bf16 %v332
        %v341 = vunpack.c.l.bf16 %v333
        %v342 = vunpack.c.l.bf16 %v334
        %v343 = vunpack.c.l.bf16 %v335
        %v344 = vunpack.c.l.bf16 %v336
        %v345 = vunpack.c.l.bf16 %v337
        %v346 = vld [vmem:[%s3] sm:$0x1]
        %v348 = vperm.slane %v346, 0
        %v350 = vmul.f32 %v338, %v348
        %v351 = vmul.f32 %v339, %v348
        %v352 = vmul.f32 %v340, %v348
        %v353 = vmul.f32 %v341, %v348
        %v354 = vmul.f32 %v342, %v348
        %v355 = vmul.f32 %v343, %v348
        %v356 = vmul.f32 %v344, %v348
        %v357 = vmul.f32 %v345, %v348
        %v358 = vld [vmem:[%s4] sm:$0x1]
        %v360 = vperm.slane %v358, 0
        %v362 = vadd.f32 %v350, %v360
        %v363 = vadd.f32 %v351, %v360
        %v364 = vadd.f32 %v352, %v360
        %v365 = vadd.f32 %v353, %v360
        %v366 = vadd.f32 %v354, %v360
        %v367 = vadd.f32 %v355, %v360
        %v368 = vadd.f32 %v356, %v360
        %v369 = vadd.f32 %v357, %v360
        %v370 = vmax.f32 %v362, 0.0
        %v371 = vmax.f32 %v363, 0.0
        %v372 = vmax.f32 %v364, 0.0
        %v373 = vmax.f32 %v365, 0.0
        %v374 = vmax.f32 %v366, 0.0
        %v375 = vmax.f32 %v367, 0.0
        %v376 = vmax.f32 %v368, 0.0
        %v377 = vmax.f32 %v369, 0.0
        %v378 = vpack.c.bf16 %v370, %v370
        %v379 = vpack.c.bf16 %v371, %v371
        %v380 = vpack.c.bf16 %v372, %v372
        %v381 = vpack.c.bf16 %v373, %v373
        %v382 = vpack.c.bf16 %v374, %v374
        %v383 = vpack.c.bf16 %v375, %v375
        %v384 = vpack.c.bf16 %v376, %v376
        %v385 = vpack.c.bf16 %v377, %v377
        %386 = vst [vmem:[#allocation2] sm:$0xf] %v378
        %387 = vst [vmem:[#allocation2 + $0x4] sm:$0xf] %v379
        %388 = vst [vmem:[#allocation2 + $0x8] sm:$0xf] %v380
        %389 = vst [vmem:[#allocation2 + $0xc] sm:$0xf] %v381
        %390 = vst [vmem:[#allocation2 + $0x10] sm:$0xf] %v382
        %391 = vst [vmem:[#allocation2 + $0x14] sm:$0xf] %v383
        %392 = vst [vmem:[#allocation2 + $0x18] sm:$0xf] %v384
        %393 = vst [vmem:[#allocation2 + $0x1c] sm:$0xf] %v385
      $region48: #{basic_block_v2_forward.3} parent=43 // pred_fallthru
        _
      %v394 = vld [vmem:[%s304] sm:$0xf]
      %v395 = vld [vmem:[%s304 + $0x8] sm:$0xf]
      %v396 = vld [vmem:[%s304 + $0x10] sm:$0xf]
      %v397 = vld [vmem:[%s304 + $0x18] sm:$0xf]
      %v398 = vld [vmem:[%s304 + $0x20] sm:$0xf]
      %v399 = vld [vmem:[%s304 + $0x28] sm:$0xf]
      %v400 = vld [vmem:[%s304 + $0x30] sm:$0xf]
      %v401 = vld [vmem:[%s304 + $0x38] sm:$0xf]
      %v402 = vld [vmem:[%s308] sm:$0xf]
      %v403 = vld [vmem:[%s308 + $0x4] sm:$0xf]
      %v404 = vld [vmem:[%s308 + $0x8] sm:$0xf]
      %v405 = vld [vmem:[%s308 + $0xc] sm:$0xf]
      %v406 = vld [vmem:[%s308 + $0x10] sm:$0xf]
      %v407 = vld [vmem:[%s308 + $0x14] sm:$0xf]
      %v408 = vld [vmem:[%s308 + $0x18] sm:$0xf]
      %v409 = vld [vmem:[%s308 + $0x1c] sm:$0xf]
      %v410 = vld [vmem:[%s308 + $0x20] sm:$0xf]
      %v411 = vld [vmem:[%s308 + $0x24] sm:$0xf]
      %v412 = vld [vmem:[%s308 + $0x28] sm:$0xf]
      %v413 = vld [vmem:[%s308 + $0x2c] sm:$0xf]
      %v414 = vld [vmem:[%s308 + $0x30] sm:$0xf]
      %v415 = vld [vmem:[%s308 + $0x34] sm:$0xf]
      %v416 = vld [vmem:[%s308 + $0x38] sm:$0xf]
      %v417 = vld [vmem:[%s308 + $0x3c] sm:$0xf]
      %v418 = vld [vmem:[%s304 + $0x4] sm:$0x1]
      %v419 = vld [vmem:[%s304 + $0xc] sm:$0x1]
      %v420 = vld [vmem:[%s304 + $0x14] sm:$0x1]
      %v421 = vld [vmem:[%s304 + $0x1c] sm:$0x1]
      %v422 = vld [vmem:[%s304 + $0x24] sm:$0x1]
      %v423 = vld [vmem:[%s304 + $0x2c] sm:$0x1]
      %v424 = vld [vmem:[%s304 + $0x34] sm:$0x1]
      %v425 = vld [vmem:[%s304 + $0x3c] sm:$0x1]
      %vm426 = vsmask.f32 3328
      %vm427 = vsmask.f32 7440
      %vm428 = vmor %vm426, %vm427
      %v430 = vshrl.u32 %v394, 16
      %v432 = vrot.slane %v430, 4
      %v433 = vshll.u32 %v394, 16
      %v435 = vrot.slane %v433, 5
      %v436 = vor.u32 %v432, %v435
      %v437 = vrot.slane %v436, 4
      %v439 = vshll.u32 %v418, 16
      %v441 = vrot.slane %v439, 5
      %v442 = vsel %vm428, %v437, %v441
      %v444 = vshrl.u32 %v395, 16
      %v446 = vrot.slane %v444, 4
      %v447 = vshll.u32 %v395, 16
      %v449 = vrot.slane %v447, 5
      %v450 = vor.u32 %v446, %v449
      %v451 = vrot.slane %v450, 4
      %v453 = vshll.u32 %v419, 16
      %v455 = vrot.slane %v453, 5
      %v456 = vsel %vm428, %v451, %v455
      %v458 = vshrl.u32 %v396, 16
      %v460 = vrot.slane %v458, 4
      %v461 = vshll.u32 %v396, 16
      %v463 = vrot.slane %v461, 5
      %v464 = vor.u32 %v460, %v463
      %v465 = vrot.slane %v464, 4
      %v467 = vshll.u32 %v420, 16
      %v469 = vrot.slane %v467, 5
      %v470 = vsel %vm428, %v465, %v469
      %v472 = vshrl.u32 %v397, 16
      %v474 = vrot.slane %v472, 4
      %v475 = vshll.u32 %v397, 16
      %v477 = vrot.slane %v475, 5
      %v478 = vor.u32 %v474, %v477
      %v479 = vrot.slane %v478, 4
      %v481 = vshll.u32 %v421, 16
      %v483 = vrot.slane %v481, 5
      %v484 = vsel %vm428, %v479, %v483
      %v486 = vshrl.u32 %v398, 16
      %v488 = vrot.slane %v486, 4
      %v489 = vshll.u32 %v398, 16
      %v491 = vrot.slane %v489, 5
      %v492 = vor.u32 %v488, %v491
      %v493 = vrot.slane %v492, 4
      %v495 = vshll.u32 %v422, 16
      %v497 = vrot.slane %v495, 5
      %v498 = vsel %vm428, %v493, %v497
      %v500 = vshrl.u32 %v399, 16
      %v502 = vrot.slane %v500, 4
      %v503 = vshll.u32 %v399, 16
      %v505 = vrot.slane %v503, 5
      %v506 = vor.u32 %v502, %v505
      %v507 = vrot.slane %v506, 4
      %v509 = vshll.u32 %v423, 16
      %v511 = vrot.slane %v509, 5
      %v512 = vsel %vm428, %v507, %v511
      %v514 = vshrl.u32 %v400, 16
      %v516 = vrot.slane %v514, 4
      %v517 = vshll.u32 %v400, 16
      %v519 = vrot.slane %v517, 5
      %v520 = vor.u32 %v516, %v519
      %v521 = vrot.slane %v520, 4
      %v523 = vshll.u32 %v424, 16
      %v525 = vrot.slane %v523, 5
      %v526 = vsel %vm428, %v521, %v525
      %v528 = vshrl.u32 %v401, 16
      %v530 = vrot.slane %v528, 4
      %v531 = vshll.u32 %v401, 16
      %v533 = vrot.slane %v531, 5
      %v534 = vor.u32 %v530, %v533
      %v535 = vrot.slane %v534, 4
      %v537 = vshll.u32 %v425, 16
      %v539 = vrot.slane %v537, 5
      %v540 = vsel %vm428, %v535, %v539
      %s541 = scalar_lea.vmem %s308, 64
      %v542 = vld [vmem:[%s541] sm:$0xf]
      %v543 = vld [vmem:[%s541 + $0x4] sm:$0xf]
      %v544 = vld [vmem:[%s541 + $0x8] sm:$0xf]
      %v545 = vld [vmem:[%s541 + $0xc] sm:$0xf]
      %v546 = vld [vmem:[%s541 + $0x10] sm:$0xf]
      %v547 = vld [vmem:[%s541 + $0x14] sm:$0xf]
      %v548 = vld [vmem:[%s541 + $0x18] sm:$0xf]
      %v549 = vld [vmem:[%s541 + $0x1c] sm:$0xf]
      %v550 = vld [vmem:[%s541 + $0x20] sm:$0xf]
      %v551 = vld [vmem:[%s541 + $0x24] sm:$0xf]
      %v552 = vld [vmem:[%s541 + $0x28] sm:$0xf]
      %v553 = vld [vmem:[%s541 + $0x2c] sm:$0xf]
      %v554 = vld [vmem:[%s541 + $0x30] sm:$0xf]
      %v555 = vld [vmem:[%s541 + $0x34] sm:$0xf]
      %v556 = vld [vmem:[%s541 + $0x38] sm:$0xf]
      %v557 = vld [vmem:[%s541 + $0x3c] sm:$0xf]
      %v558 = vunpack.c.l.b16 %v442
      %v559 = vunpack.c.l.b16 %v456
      %v560 = vunpack.c.l.b16 %v470
      %v561 = vunpack.c.l.b16 %v484
      %v562 = vunpack.c.l.b16 %v498
      %v563 = vunpack.c.l.b16 %v512
      %v564 = vunpack.c.l.b16 %v526
      %v565 = vunpack.c.l.b16 %v540
      %v566 = vpack.c.b16 %v559, %v558
      %v567 = vpack.c.b16 %v561, %v560
      %v568 = vpack.c.b16 %v563, %v562
      %v569 = vpack.c.b16 %v565, %v564
      %v590 = vunpack.c.l.b16 %v542
      %v591 = vunpack.c.l.b16 %v543
      %v592 = vunpack.c.l.b16 %v544
      %v593 = vunpack.c.l.b16 %v545
      %v594 = vunpack.c.l.b16 %v546
      %v595 = vunpack.c.l.b16 %v547
      %v596 = vunpack.c.l.b16 %v548
      %v597 = vunpack.c.l.b16 %v549
      %v598 = vunpack.c.l.b16 %v550
      %v599 = vunpack.c.l.b16 %v551
      %v600 = vunpack.c.l.b16 %v552
      %v601 = vunpack.c.l.b16 %v553
      %v602 = vunpack.c.l.b16 %v554
      %v603 = vunpack.c.l.b16 %v555
      %v604 = vunpack.c.l.b16 %v556
      %v605 = vunpack.c.l.b16 %v557
      %v606 = vpack.c.b16 %v591, %v590
      %v607 = vpack.c.b16 %v593, %v592
      %v608 = vpack.c.b16 %v595, %v594
      %v609 = vpack.c.b16 %v597, %v596
      %v610 = vpack.c.b16 %v599, %v598
      %v611 = vpack.c.b16 %v601, %v600
      %v612 = vpack.c.b16 %v603, %v602
      %v613 = vpack.c.b16 %v605, %v604
      %622 = vmatpush.bf16.msra.mxu0 %v613
      %623 = vmatpush.bf16.msra.mxu0 %v612
      %624 = vmatpush.bf16.msra.mxu0 %v611
      %625 = vmatpush.bf16.msra.mxu0 %v610
      %626 = vmatpush.bf16.msra.mxu0 %v609
      %627 = vmatpush.bf16.msra.mxu0 %v608
      %628 = vmatpush.bf16.msra.mxu0 %v607
      %629 = vmatpush.bf16.msra.mxu0 %v606
      %630 = vmatmul.bf16.gmra.mxu0 %v566
      %v631 = vpop.f32.mrf.mxu0
      %v632 = vadd.f32 0.0, %v631
      %v633 = vpop.f32.mrf.mxu0
      %v634 = vadd.f32 0.0, %v633
      %635 = vmatmul.bf16.gmra.mxu0 %v567
      %v636 = vpop.f32.mrf.mxu0
      %v637 = vadd.f32 0.0, %v636
      %v638 = vpop.f32.mrf.mxu0
      %v639 = vadd.f32 0.0, %v638
      %640 = vmatmul.bf16.gmra.mxu0 %v568
      %v641 = vpop.f32.mrf.mxu0
      %v642 = vadd.f32 0.0, %v641
      %v643 = vpop.f32.mrf.mxu0
      %v644 = vadd.f32 0.0, %v643
      %645 = vmatmul.bf16.gmra.mxu0 %v569
      %v646 = vpop.f32.mrf.mxu0
      %v647 = vadd.f32 0.0, %v646
      %v648 = vpop.f32.mrf.mxu0
      %v649 = vadd.f32 0.0, %v648
      %650 = vdwg.mxu0
      %v659 = vunpack.c.l.b16 %v394
      %v660 = vunpack.c.l.b16 %v395
      %v661 = vunpack.c.l.b16 %v396
      %v662 = vunpack.c.l.b16 %v397
      %v663 = vunpack.c.l.b16 %v398
      %v664 = vunpack.c.l.b16 %v399
      %v665 = vunpack.c.l.b16 %v400
      %v666 = vunpack.c.l.b16 %v401
      %v667 = vpack.c.b16 %v660, %v659
      %v668 = vpack.c.b16 %v662, %v661
      %v669 = vpack.c.b16 %v664, %v663
      %v670 = vpack.c.b16 %v666, %v665
      %v691 = vunpack.c.l.b16 %v402
      %v692 = vunpack.c.l.b16 %v403
      %v693 = vunpack.c.l.b16 %v404
      %v694 = vunpack.c.l.b16 %v405
      %v695 = vunpack.c.l.b16 %v406
      %v696 = vunpack.c.l.b16 %v407
      %v697 = vunpack.c.l.b16 %v408
      %v698 = vunpack.c.l.b16 %v409
      %v699 = vunpack.c.l.b16 %v410
      %v700 = vunpack.c.l.b16 %v411
      %v701 = vunpack.c.l.b16 %v412
      %v702 = vunpack.c.l.b16 %v413
      %v703 = vunpack.c.l.b16 %v414
      %v704 = vunpack.c.l.b16 %v415
      %v705 = vunpack.c.l.b16 %v416
      %v706 = vunpack.c.l.b16 %v417
      %v707 = vpack.c.b16 %v692, %v691
      %v708 = vpack.c.b16 %v694, %v693
      %v709 = vpack.c.b16 %v696, %v695
      %v710 = vpack.c.b16 %v698, %v697
      %v711 = vpack.c.b16 %v700, %v699
      %v712 = vpack.c.b16 %v702, %v701
      %v713 = vpack.c.b16 %v704, %v703
      %v714 = vpack.c.b16 %v706, %v705
      %723 = vmatpush.bf16.msra.mxu0 %v714
      %724 = vmatpush.bf16.msra.mxu0 %v713
      %725 = vmatpush.bf16.msra.mxu0 %v712
      %726 = vmatpush.bf16.msra.mxu0 %v711
      %727 = vmatpush.bf16.msra.mxu0 %v710
      %728 = vmatpush.bf16.msra.mxu0 %v709
      %729 = vmatpush.bf16.msra.mxu0 %v708
      %730 = vmatpush.bf16.msra.mxu0 %v707
      %731 = vmatmul.bf16.gmra.mxu0 %v667
      %v732 = vpop.f32.mrf.mxu0
      %v733 = vadd.f32 %v632, %v732
      %v734 = vpop.f32.mrf.mxu0
      %v735 = vadd.f32 %v634, %v734
      %736 = vmatmul.bf16.gmra.mxu0 %v668
      %v737 = vpop.f32.mrf.mxu0
      %v738 = vadd.f32 %v637, %v737
      %v739 = vpop.f32.mrf.mxu0
      %v740 = vadd.f32 %v639, %v739
      %741 = vmatmul.bf16.gmra.mxu0 %v669
      %v742 = vpop.f32.mrf.mxu0
      %v743 = vadd.f32 %v642, %v742
      %v744 = vpop.f32.mrf.mxu0
      %v745 = vadd.f32 %v644, %v744
      %746 = vmatmul.bf16.gmra.mxu0 %v670
      %v747 = vpop.f32.mrf.mxu0
      %v748 = vadd.f32 %v647, %v747
      %v749 = vpop.f32.mrf.mxu0
      %v750 = vadd.f32 %v649, %v749
      %751 = vdwg.mxu0
      %v752 = vld [vmem:[%s304] sm:$0xe]
      %v753 = vld [vmem:[%s304 + $0x8] sm:$0xe]
      %v754 = vld [vmem:[%s304 + $0x10] sm:$0xe]
      %v755 = vld [vmem:[%s304 + $0x18] sm:$0xe]
      %v756 = vld [vmem:[%s304 + $0x20] sm:$0xe]
      %v757 = vld [vmem:[%s304 + $0x28] sm:$0xe]
      %v758 = vld [vmem:[%s304 + $0x30] sm:$0xe]
      %v759 = vld [vmem:[%s304 + $0x38] sm:$0xe]
      %vm776 = vcmask 1042432
      %vm777 = vcmask 1046532
      %vm778 = vmor %vm776, %vm777
      %v779 = vrot.slane %v752, 5
      %v780 = vrot.slane %v779, 4
      %v781 = vrot.slane %v418, 5
      %v782 = vsel %vm778, %v780, %v781
      %v783 = vrot.slane %v753, 5
      %v784 = vrot.slane %v783, 4
      %v785 = vrot.slane %v419, 5
      %v786 = vsel %vm778, %v784, %v785
      %v787 = vrot.slane %v754, 5
      %v788 = vrot.slane %v787, 4
      %v789 = vrot.slane %v420, 5
      %v790 = vsel %vm778, %v788, %v789
      %v791 = vrot.slane %v755, 5
      %v792 = vrot.slane %v791, 4
      %v793 = vrot.slane %v421, 5
      %v794 = vsel %vm778, %v792, %v793
      %v795 = vrot.slane %v756, 5
      %v796 = vrot.slane %v795, 4
      %v797 = vrot.slane %v422, 5
      %v798 = vsel %vm778, %v796, %v797
      %v799 = vrot.slane %v757, 5
      %v800 = vrot.slane %v799, 4
      %v801 = vrot.slane %v423, 5
      %v802 = vsel %vm778, %v800, %v801
      %v803 = vrot.slane %v758, 5
      %v804 = vrot.slane %v803, 4
      %v805 = vrot.slane %v424, 5
      %v806 = vsel %vm778, %v804, %v805
      %v807 = vrot.slane %v759, 5
      %v808 = vrot.slane %v807, 4
      %v809 = vrot.slane %v425, 5
      %v810 = vsel %vm778, %v808, %v809
      %s811 = scalar_lea.vmem %s308, 128
      %v812 = vld [vmem:[%s811] sm:$0xf]
      %v813 = vld [vmem:[%s811 + $0x4] sm:$0xf]
      %v814 = vld [vmem:[%s811 + $0x8] sm:$0xf]
      %v815 = vld [vmem:[%s811 + $0xc] sm:$0xf]
      %v816 = vld [vmem:[%s811 + $0x10] sm:$0xf]
      %v817 = vld [vmem:[%s811 + $0x14] sm:$0xf]
      %v818 = vld [vmem:[%s811 + $0x18] sm:$0xf]
      %v819 = vld [vmem:[%s811 + $0x1c] sm:$0xf]
      %v820 = vld [vmem:[%s811 + $0x20] sm:$0xf]
      %v821 = vld [vmem:[%s811 + $0x24] sm:$0xf]
      %v822 = vld [vmem:[%s811 + $0x28] sm:$0xf]
      %v823 = vld [vmem:[%s811 + $0x2c] sm:$0xf]
      %v824 = vld [vmem:[%s811 + $0x30] sm:$0xf]
      %v825 = vld [vmem:[%s811 + $0x34] sm:$0xf]
      %v826 = vld [vmem:[%s811 + $0x38] sm:$0xf]
      %v827 = vld [vmem:[%s811 + $0x3c] sm:$0xf]
      %v828 = vunpack.c.l.b16 %v782
      %v829 = vunpack.c.l.b16 %v786
      %v830 = vunpack.c.l.b16 %v790
      %v831 = vunpack.c.l.b16 %v794
      %v832 = vunpack.c.l.b16 %v798
      %v833 = vunpack.c.l.b16 %v802
      %v834 = vunpack.c.l.b16 %v806
      %v835 = vunpack.c.l.b16 %v810
      %v836 = vpack.c.b16 %v829, %v828
      %v837 = vpack.c.b16 %v831, %v830
      %v838 = vpack.c.b16 %v833, %v832
      %v839 = vpack.c.b16 %v835, %v834
      %v860 = vunpack.c.l.b16 %v812
      %v861 = vunpack.c.l.b16 %v813
      %v862 = vunpack.c.l.b16 %v814
      %v863 = vunpack.c.l.b16 %v815
      %v864 = vunpack.c.l.b16 %v816
      %v865 = vunpack.c.l.b16 %v817
      %v866 = vunpack.c.l.b16 %v818
      %v867 = vunpack.c.l.b16 %v819
      %v868 = vunpack.c.l.b16 %v820
      %v869 = vunpack.c.l.b16 %v821
      %v870 = vunpack.c.l.b16 %v822
      %v871 = vunpack.c.l.b16 %v823
      %v872 = vunpack.c.l.b16 %v824
      %v873 = vunpack.c.l.b16 %v825
      %v874 = vunpack.c.l.b16 %v826
      %v875 = vunpack.c.l.b16 %v827
      %v876 = vpack.c.b16 %v861, %v860
      %v877 = vpack.c.b16 %v863, %v862
      %v878 = vpack.c.b16 %v865, %v864
      %v879 = vpack.c.b16 %v867, %v866
      %v880 = vpack.c.b16 %v869, %v868
      %v881 = vpack.c.b16 %v871, %v870
      %v882 = vpack.c.b16 %v873, %v872
      %v883 = vpack.c.b16 %v875, %v874
      %892 = vmatpush.bf16.msra.mxu0 %v883
      %893 = vmatpush.bf16.msra.mxu0 %v882
      %894 = vmatpush.bf16.msra.mxu0 %v881
      %895 = vmatpush.bf16.msra.mxu0 %v880
      %896 = vmatpush.bf16.msra.mxu0 %v879
      %897 = vmatpush.bf16.msra.mxu0 %v878
      %898 = vmatpush.bf16.msra.mxu0 %v877
      %899 = vmatpush.bf16.msra.mxu0 %v876
      %900 = vmatmul.bf16.gmra.mxu0 %v836
      %v901 = vpop.f32.mrf.mxu0
      %v902 = vadd.f32 0.0, %v901
      %v903 = vpop.f32.mrf.mxu0
      %v904 = vadd.f32 0.0, %v903
      %905 = vmatmul.bf16.gmra.mxu0 %v837
      %v906 = vpop.f32.mrf.mxu0
      %v907 = vadd.f32 0.0, %v906
      %v908 = vpop.f32.mrf.mxu0
      %v909 = vadd.f32 0.0, %v908
      %910 = vmatmul.bf16.gmra.mxu0 %v838
      %v911 = vpop.f32.mrf.mxu0
      %v912 = vadd.f32 0.0, %v911
      %v913 = vpop.f32.mrf.mxu0
      %v914 = vadd.f32 0.0, %v913
      %915 = vmatmul.bf16.gmra.mxu0 %v839
      %v916 = vpop.f32.mrf.mxu0
      %v917 = vadd.f32 0.0, %v916
      %v918 = vpop.f32.mrf.mxu0
      %v919 = vadd.f32 0.0, %v918
      %920 = vdwg.mxu0
      %v921 = vadd.f32 %v733, %v902
      %v922 = vadd.f32 %v735, %v904
      %v923 = vadd.f32 %v738, %v907
      %v924 = vadd.f32 %v740, %v909
      %v925 = vadd.f32 %v743, %v912
      %v926 = vadd.f32 %v745, %v914
      %v927 = vadd.f32 %v748, %v917
      %v928 = vadd.f32 %v750, %v919
      %s929 = scalar_lea.vmem %s304, 8
      %v930 = vld [vmem:[%s929] sm:$0xf]
      %v931 = vld [vmem:[%s929 + $0x8] sm:$0xf]
      %v932 = vld [vmem:[%s929 + $0x10] sm:$0xf]
      %v933 = vld [vmem:[%s929 + $0x18] sm:$0xf]
      %v934 = vld [vmem:[%s929 + $0x20] sm:$0xf]
      %v935 = vld [vmem:[%s929 + $0x28] sm:$0xf]
      %v936 = vld [vmem:[%s929 + $0x30] sm:$0xf]
      %v937 = vld [vmem:[%s929 + $0x38] sm:$0xf]
      %s938 = scalar_lea.vmem %s308, 192
      %v939 = vld [vmem:[%s938] sm:$0xf]
      %v940 = vld [vmem:[%s938 + $0x4] sm:$0xf]
      %v941 = vld [vmem:[%s938 + $0x8] sm:$0xf]
      %v942 = vld [vmem:[%s938 + $0xc] sm:$0xf]
      %v943 = vld [vmem:[%s938 + $0x10] sm:$0xf]
      %v944 = vld [vmem:[%s938 + $0x14] sm:$0xf]
      %v945 = vld [vmem:[%s938 + $0x18] sm:$0xf]
      %v946 = vld [vmem:[%s938 + $0x1c] sm:$0xf]
      %v947 = vld [vmem:[%s938 + $0x20] sm:$0xf]
      %v948 = vld [vmem:[%s938 + $0x24] sm:$0xf]
      %v949 = vld [vmem:[%s938 + $0x28] sm:$0xf]
      %v950 = vld [vmem:[%s938 + $0x2c] sm:$0xf]
      %v951 = vld [vmem:[%s938 + $0x30] sm:$0xf]
      %v952 = vld [vmem:[%s938 + $0x34] sm:$0xf]
      %v953 = vld [vmem:[%s938 + $0x38] sm:$0xf]
      %v954 = vld [vmem:[%s938 + $0x3c] sm:$0xf]
      %v963 = vunpack.c.l.b16 %v930
      %v964 = vunpack.c.l.b16 %v931
      %v965 = vunpack.c.l.b16 %v932
      %v966 = vunpack.c.l.b16 %v933
      %v967 = vunpack.c.l.b16 %v934
      %v968 = vunpack.c.l.b16 %v935
      %v969 = vunpack.c.l.b16 %v936
      %v970 = vunpack.c.l.b16 %v937
      %v971 = vpack.c.b16 %v964, %v963
      %v972 = vpack.c.b16 %v966, %v965
      %v973 = vpack.c.b16 %v968, %v967
      %v974 = vpack.c.b16 %v970, %v969
      %v995 = vunpack.c.l.b16 %v939
      %v996 = vunpack.c.l.b16 %v940
      %v997 = vunpack.c.l.b16 %v941
      %v998 = vunpack.c.l.b16 %v942
      %v999 = vunpack.c.l.b16 %v943
      %v1000 = vunpack.c.l.b16 %v944
      %v1001 = vunpack.c.l.b16 %v945
      %v1002 = vunpack.c.l.b16 %v946
      %v1003 = vunpack.c.l.b16 %v947
      %v1004 = vunpack.c.l.b16 %v948
      %v1005 = vunpack.c.l.b16 %v949
      %v1006 = vunpack.c.l.b16 %v950
      %v1007 = vunpack.c.l.b16 %v951
      %v1008 = vunpack.c.l.b16 %v952
      %v1009 = vunpack.c.l.b16 %v953
      %v1010 = vunpack.c.l.b16 %v954
      %v1011 = vpack.c.b16 %v996, %v995
      %v1012 = vpack.c.b16 %v998, %v997
      %v1013 = vpack.c.b16 %v1000, %v999
      %v1014 = vpack.c.b16 %v1002, %v1001
      %v1015 = vpack.c.b16 %v1004, %v1003
      %v1016 = vpack.c.b16 %v1006, %v1005
      %v1017 = vpack.c.b16 %v1008, %v1007
      %v1018 = vpack.c.b16 %v1010, %v1009
      %1027 = vmatpush.bf16.msra.mxu0 %v1018
      %1028 = vmatpush.bf16.msra.mxu0 %v1017
      %1029 = vmatpush.bf16.msra.mxu0 %v1016
      %1030 = vmatpush.bf16.msra.mxu0 %v1015
      %1031 = vmatpush.bf16.msra.mxu0 %v1014
      %1032 = vmatpush.bf16.msra.mxu0 %v1013
      %1033 = vmatpush.bf16.msra.mxu0 %v1012
      %1034 = vmatpush.bf16.msra.mxu0 %v1011
      %1035 = vmatmul.bf16.gmra.mxu0 %v971
      %v1036 = vpop.f32.mrf.mxu0
      %v1037 = vadd.f32 0.0, %v1036
      %v1038 = vpop.f32.mrf.mxu0
      %v1039 = vadd.f32 0.0, %v1038
      %1040 = vmatmul.bf16.gmra.mxu0 %v972
      %v1041 = vpop.f32.mrf.mxu0
      %v1042 = vadd.f32 0.0, %v1041
      %v1043 = vpop.f32.mrf.mxu0
      %v1044 = vadd.f32 0.0, %v1043
      %1045 = vmatmul.bf16.gmra.mxu0 %v973
      %v1046 = vpop.f32.mrf.mxu0
      %v1047 = vadd.f32 0.0, %v1046
      %v1048 = vpop.f32.mrf.mxu0
      %v1049 = vadd.f32 0.0, %v1048
      %1050 = vmatmul.bf16.gmra.mxu0 %v974
      %v1051 = vpop.f32.mrf.mxu0
      %v1052 = vadd.f32 0.0, %v1051
      %v1053 = vpop.f32.mrf.mxu0
      %v1054 = vadd.f32 0.0, %v1053
      %1055 = vdwg.mxu0
      %v1056 = vadd.f32 %v921, %v1037
      %v1057 = vadd.f32 %v922, %v1039
      %v1058 = vadd.f32 %v923, %v1042
      %v1059 = vadd.f32 %v924, %v1044
      %v1060 = vadd.f32 %v925, %v1047
      %v1061 = vadd.f32 %v926, %v1049
      %v1062 = vadd.f32 %v927, %v1052
      %v1063 = vadd.f32 %v928, %v1054
      %v1064 = vld [vmem:[%s929] sm:$0xf]
      %v1065 = vld [vmem:[%s929 + $0x4] sm:$0x1]
      %v1066 = vld [vmem:[%s929 + $0x8] sm:$0xf]
      %v1067 = vld [vmem:[%s929 + $0xc] sm:$0x1]
      %v1068 = vld [vmem:[%s929 + $0x10] sm:$0xf]
      %v1069 = vld [vmem:[%s929 + $0x14] sm:$0x1]
      %v1070 = vld [vmem:[%s929 + $0x18] sm:$0xf]
      %v1071 = vld [vmem:[%s929 + $0x1c] sm:$0x1]
      %v1072 = vld [vmem:[%s929 + $0x20] sm:$0xf]
      %v1073 = vld [vmem:[%s929 + $0x24] sm:$0x1]
      %v1074 = vld [vmem:[%s929 + $0x28] sm:$0xf]
      %v1075 = vld [vmem:[%s929 + $0x2c] sm:$0x1]
      %v1076 = vld [vmem:[%s929 + $0x30] sm:$0xf]
      %v1077 = vld [vmem:[%s929 + $0x34] sm:$0x1]
      %v1078 = vld [vmem:[%s929 + $0x38] sm:$0xf]
      %v1079 = vld [vmem:[%s929 + $0x3c] sm:$0x1]
      %v1081 = vshrl.u32 %v1064, 16
      %v1083 = vrot.slane %v1081, 4
      %v1084 = vshll.u32 %v1064, 16
      %v1086 = vrot.slane %v1084, 5
      %v1087 = vor.u32 %v1083, %v1086
      %v1088 = vrot.slane %v1087, 4
      %v1090 = vshll.u32 %v1065, 16
      %v1092 = vrot.slane %v1090, 5
      %v1093 = vsel %vm428, %v1088, %v1092
      %v1095 = vshrl.u32 %v1066, 16
      %v1097 = vrot.slane %v1095, 4
      %v1098 = vshll.u32 %v1066, 16
      %v1100 = vrot.slane %v1098, 5
      %v1101 = vor.u32 %v1097, %v1100
      %v1102 = vrot.slane %v1101, 4
      %v1104 = vshll.u32 %v1067, 16
      %v1106 = vrot.slane %v1104, 5
      %v1107 = vsel %vm428, %v1102, %v1106
      %v1109 = vshrl.u32 %v1068, 16
      %v1111 = vrot.slane %v1109, 4
      %v1112 = vshll.u32 %v1068, 16
      %v1114 = vrot.slane %v1112, 5
      %v1115 = vor.u32 %v1111, %v1114
      %v1116 = vrot.slane %v1115, 4
      %v1118 = vshll.u32 %v1069, 16
      %v1120 = vrot.slane %v1118, 5
      %v1121 = vsel %vm428, %v1116, %v1120
      %v1123 = vshrl.u32 %v1070, 16
      %v1125 = vrot.slane %v1123, 4
      %v1126 = vshll.u32 %v1070, 16
      %v1128 = vrot.slane %v1126, 5
      %v1129 = vor.u32 %v1125, %v1128
      %v1130 = vrot.slane %v1129, 4
      %v1132 = vshll.u32 %v1071, 16
      %v1134 = vrot.slane %v1132, 5
      %v1135 = vsel %vm428, %v1130, %v1134
      %v1137 = vshrl.u32 %v1072, 16
      %v1139 = vrot.slane %v1137, 4
      %v1140 = vshll.u32 %v1072, 16
      %v1142 = vrot.slane %v1140, 5
      %v1143 = vor.u32 %v1139, %v1142
      %v1144 = vrot.slane %v1143, 4
      %v1146 = vshll.u32 %v1073, 16
      %v1148 = vrot.slane %v1146, 5
      %v1149 = vsel %vm428, %v1144, %v1148
      %v1151 = vshrl.u32 %v1074, 16
      %v1153 = vrot.slane %v1151, 4
      %v1154 = vshll.u32 %v1074, 16
      %v1156 = vrot.slane %v1154, 5
      %v1157 = vor.u32 %v1153, %v1156
      %v1158 = vrot.slane %v1157, 4
      %v1160 = vshll.u32 %v1075, 16
      %v1162 = vrot.slane %v1160, 5
      %v1163 = vsel %vm428, %v1158, %v1162
      %v1165 = vshrl.u32 %v1076, 16
      %v1167 = vrot.slane %v1165, 4
      %v1168 = vshll.u32 %v1076, 16
      %v1170 = vrot.slane %v1168, 5
      %v1171 = vor.u32 %v1167, %v1170
      %v1172 = vrot.slane %v1171, 4
      %v1174 = vshll.u32 %v1077, 16
      %v1176 = vrot.slane %v1174, 5
      %v1177 = vsel %vm428, %v1172, %v1176
      %v1179 = vshrl.u32 %v1078, 16
      %v1181 = vrot.slane %v1179, 4
      %v1182 = vshll.u32 %v1078, 16
      %v1184 = vrot.slane %v1182, 5
      %v1185 = vor.u32 %v1181, %v1184
      %v1186 = vrot.slane %v1185, 4
      %v1188 = vshll.u32 %v1079, 16
      %v1190 = vrot.slane %v1188, 5
      %v1191 = vsel %vm428, %v1186, %v1190
      %s1192 = scalar_lea.vmem %s308, 256
      %v1193 = vld [vmem:[%s1192] sm:$0xf]
      %v1194 = vld [vmem:[%s1192 + $0x4] sm:$0xf]
      %v1195 = vld [vmem:[%s1192 + $0x8] sm:$0xf]
      %v1196 = vld [vmem:[%s1192 + $0xc] sm:$0xf]
      %v1197 = vld [vmem:[%s1192 + $0x10] sm:$0xf]
      %v1198 = vld [vmem:[%s1192 + $0x14] sm:$0xf]
      %v1199 = vld [vmem:[%s1192 + $0x18] sm:$0xf]
      %v1200 = vld [vmem:[%s1192 + $0x1c] sm:$0xf]
      %v1201 = vld [vmem:[%s1192 + $0x20] sm:$0xf]
      %v1202 = vld [vmem:[%s1192 + $0x24] sm:$0xf]
      %v1203 = vld [vmem:[%s1192 + $0x28] sm:$0xf]
      %v1204 = vld [vmem:[%s1192 + $0x2c] sm:$0xf]
      %v1205 = vld [vmem:[%s1192 + $0x30] sm:$0xf]
      %v1206 = vld [vmem:[%s1192 + $0x34] sm:$0xf]
      %v1207 = vld [vmem:[%s1192 + $0x38] sm:$0xf]
      %v1208 = vld [vmem:[%s1192 + $0x3c] sm:$0xf]
      %v1209 = vunpack.c.l.b16 %v1093
      %v1210 = vunpack.c.l.b16 %v1107
      %v1211 = vunpack.c.l.b16 %v1121
      %v1212 = vunpack.c.l.b16 %v1135
      %v1213 = vunpack.c.l.b16 %v1149
      %v1214 = vunpack.c.l.b16 %v1163
      %v1215 = vunpack.c.l.b16 %v1177
      %v1216 = vunpack.c.l.b16 %v1191
      %v1217 = vpack.c.b16 %v1210, %v1209
      %v1218 = vpack.c.b16 %v1212, %v1211
      %v1219 = vpack.c.b16 %v1214, %v1213
      %v1220 = vpack.c.b16 %v1216, %v1215
      %v1241 = vunpack.c.l.b16 %v1193
      %v1242 = vunpack.c.l.b16 %v1194
      %v1243 = vunpack.c.l.b16 %v1195
      %v1244 = vunpack.c.l.b16 %v1196
      %v1245 = vunpack.c.l.b16 %v1197
      %v1246 = vunpack.c.l.b16 %v1198
      %v1247 = vunpack.c.l.b16 %v1199
      %v1248 = vunpack.c.l.b16 %v1200
      %v1249 = vunpack.c.l.b16 %v1201
      %v1250 = vunpack.c.l.b16 %v1202
      %v1251 = vunpack.c.l.b16 %v1203
      %v1252 = vunpack.c.l.b16 %v1204
      %v1253 = vunpack.c.l.b16 %v1205
      %v1254 = vunpack.c.l.b16 %v1206
      %v1255 = vunpack.c.l.b16 %v1207
      %v1256 = vunpack.c.l.b16 %v1208
      %v1257 = vpack.c.b16 %v1242, %v1241
      %v1258 = vpack.c.b16 %v1244, %v1243
      %v1259 = vpack.c.b16 %v1246, %v1245
      %v1260 = vpack.c.b16 %v1248, %v1247
      %v1261 = vpack.c.b16 %v1250, %v1249
      %v1262 = vpack.c.b16 %v1252, %v1251
      %v1263 = vpack.c.b16 %v1254, %v1253
      %v1264 = vpack.c.b16 %v1256, %v1255
      %1273 = vmatpush.bf16.msra.mxu0 %v1264
      %1274 = vmatpush.bf16.msra.mxu0 %v1263
      %1275 = vmatpush.bf16.msra.mxu0 %v1262
      %1276 = vmatpush.bf16.msra.mxu0 %v1261
      %1277 = vmatpush.bf16.msra.mxu0 %v1260
      %1278 = vmatpush.bf16.msra.mxu0 %v1259
      %1279 = vmatpush.bf16.msra.mxu0 %v1258
      %1280 = vmatpush.bf16.msra.mxu0 %v1257
      %1281 = vmatmul.bf16.gmra.mxu0 %v1217
      %v1282 = vpop.f32.mrf.mxu0
      %v1283 = vadd.f32 0.0, %v1282
      %v1284 = vpop.f32.mrf.mxu0
      %v1285 = vadd.f32 0.0, %v1284
      %1286 = vmatmul.bf16.gmra.mxu0 %v1218
      %v1287 = vpop.f32.mrf.mxu0
      %v1288 = vadd.f32 0.0, %v1287
      %v1289 = vpop.f32.mrf.mxu0
      %v1290 = vadd.f32 0.0, %v1289
      %1291 = vmatmul.bf16.gmra.mxu0 %v1219
      %v1292 = vpop.f32.mrf.mxu0
      %v1293 = vadd.f32 0.0, %v1292
      %v1294 = vpop.f32.mrf.mxu0
      %v1295 = vadd.f32 0.0, %v1294
      %1296 = vmatmul.bf16.gmra.mxu0 %v1220
      %v1297 = vpop.f32.mrf.mxu0
      %v1298 = vadd.f32 0.0, %v1297
      %v1299 = vpop.f32.mrf.mxu0
      %v1300 = vadd.f32 0.0, %v1299
      %1301 = vdwg.mxu0
      %v1302 = vadd.f32 %v1056, %v1283
      %v1303 = vadd.f32 %v1057, %v1285
      %v1304 = vadd.f32 %v1058, %v1288
      %v1305 = vadd.f32 %v1059, %v1290
      %v1306 = vadd.f32 %v1060, %v1293
      %v1307 = vadd.f32 %v1061, %v1295
      %v1308 = vadd.f32 %v1062, %v1298
      %v1309 = vadd.f32 %v1063, %v1300
      %v1310 = vld [vmem:[%s929] sm:$0xe]
      %v1311 = vld [vmem:[%s929 + $0x8] sm:$0xe]
      %v1312 = vld [vmem:[%s929 + $0x10] sm:$0xe]
      %v1313 = vld [vmem:[%s929 + $0x18] sm:$0xe]
      %v1314 = vld [vmem:[%s929 + $0x20] sm:$0xe]
      %v1315 = vld [vmem:[%s929 + $0x28] sm:$0xe]
      %v1316 = vld [vmem:[%s929 + $0x30] sm:$0xe]
      %v1317 = vld [vmem:[%s929 + $0x38] sm:$0xe]
      %v1334 = vrot.slane %v1310, 5
      %v1335 = vrot.slane %v1334, 4
      %v1336 = vrot.slane %v1065, 5
      %v1337 = vsel %vm778, %v1335, %v1336
      %v1338 = vrot.slane %v1311, 5
      %v1339 = vrot.slane %v1338, 4
      %v1340 = vrot.slane %v1067, 5
      %v1341 = vsel %vm778, %v1339, %v1340
      %v1342 = vrot.slane %v1312, 5
      %v1343 = vrot.slane %v1342, 4
      %v1344 = vrot.slane %v1069, 5
      %v1345 = vsel %vm778, %v1343, %v1344
      %v1346 = vrot.slane %v1313, 5
      %v1347 = vrot.slane %v1346, 4
      %v1348 = vrot.slane %v1071, 5
      %v1349 = vsel %vm778, %v1347, %v1348
      %v1350 = vrot.slane %v1314, 5
      %v1351 = vrot.slane %v1350, 4
      %v1352 = vrot.slane %v1073, 5
      %v1353 = vsel %vm778, %v1351, %v1352
      %v1354 = vrot.slane %v1315, 5
      %v1355 = vrot.slane %v1354, 4
      %v1356 = vrot.slane %v1075, 5
      %v1357 = vsel %vm778, %v1355, %v1356
      %v1358 = vrot.slane %v1316, 5
      %v1359 = vrot.slane %v1358, 4
      %v1360 = vrot.slane %v1077, 5
      %v1361 = vsel %vm778, %v1359, %v1360
      %v1362 = vrot.slane %v1317, 5
      %v1363 = vrot.slane %v1362, 4
      %v1364 = vrot.slane %v1079, 5
      %v1365 = vsel %vm778, %v1363, %v1364
      %s1366 = scalar_lea.vmem %s308, 320
      %v1367 = vld [vmem:[%s1366] sm:$0xf]
      %v1368 = vld [vmem:[%s1366 + $0x4] sm:$0xf]
      %v1369 = vld [vmem:[%s1366 + $0x8] sm:$0xf]
      %v1370 = vld [vmem:[%s1366 + $0xc] sm:$0xf]
      %v1371 = vld [vmem:[%s1366 + $0x10] sm:$0xf]
      %v1372 = vld [vmem:[%s1366 + $0x14] sm:$0xf]
      %v1373 = vld [vmem:[%s1366 + $0x18] sm:$0xf]
      %v1374 = vld [vmem:[%s1366 + $0x1c] sm:$0xf]
      %v1375 = vld [vmem:[%s1366 + $0x20] sm:$0xf]
      %v1376 = vld [vmem:[%s1366 + $0x24] sm:$0xf]
      %v1377 = vld [vmem:[%s1366 + $0x28] sm:$0xf]
      %v1378 = vld [vmem:[%s1366 + $0x2c] sm:$0xf]
      %v1379 = vld [vmem:[%s1366 + $0x30] sm:$0xf]
      %v1380 = vld [vmem:[%s1366 + $0x34] sm:$0xf]
      %v1381 = vld [vmem:[%s1366 + $0x38] sm:$0xf]
      %v1382 = vld [vmem:[%s1366 + $0x3c] sm:$0xf]
      %v1383 = vunpack.c.l.b16 %v1337
      %v1384 = vunpack.c.l.b16 %v1341
      %v1385 = vunpack.c.l.b16 %v1345
      %v1386 = vunpack.c.l.b16 %v1349
      %v1387 = vunpack.c.l.b16 %v1353
      %v1388 = vunpack.c.l.b16 %v1357
      %v1389 = vunpack.c.l.b16 %v1361
      %v1390 = vunpack.c.l.b16 %v1365
      %v1391 = vpack.c.b16 %v1384, %v1383
      %v1392 = vpack.c.b16 %v1386, %v1385
      %v1393 = vpack.c.b16 %v1388, %v1387
      %v1394 = vpack.c.b16 %v1390, %v1389
      %v1415 = vunpack.c.l.b16 %v1367
      %v1416 = vunpack.c.l.b16 %v1368
      %v1417 = vunpack.c.l.b16 %v1369
      %v1418 = vunpack.c.l.b16 %v1370
      %v1419 = vunpack.c.l.b16 %v1371
      %v1420 = vunpack.c.l.b16 %v1372
      %v1421 = vunpack.c.l.b16 %v1373
      %v1422 = vunpack.c.l.b16 %v1374
      %v1423 = vunpack.c.l.b16 %v1375
      %v1424 = vunpack.c.l.b16 %v1376
      %v1425 = vunpack.c.l.b16 %v1377
      %v1426 = vunpack.c.l.b16 %v1378
      %v1427 = vunpack.c.l.b16 %v1379
      %v1428 = vunpack.c.l.b16 %v1380
      %v1429 = vunpack.c.l.b16 %v1381
      %v1430 = vunpack.c.l.b16 %v1382
      %v1431 = vpack.c.b16 %v1416, %v1415
      %v1432 = vpack.c.b16 %v1418, %v1417
      %v1433 = vpack.c.b16 %v1420, %v1419
      %v1434 = vpack.c.b16 %v1422, %v1421
      %v1435 = vpack.c.b16 %v1424, %v1423
      %v1436 = vpack.c.b16 %v1426, %v1425
      %v1437 = vpack.c.b16 %v1428, %v1427
      %v1438 = vpack.c.b16 %v1430, %v1429
      %1447 = vmatpush.bf16.msra.mxu0 %v1438
      %1448 = vmatpush.bf16.msra.mxu0 %v1437
      %1449 = vmatpush.bf16.msra.mxu0 %v1436
      %1450 = vmatpush.bf16.msra.mxu0 %v1435
      %1451 = vmatpush.bf16.msra.mxu0 %v1434
      %1452 = vmatpush.bf16.msra.mxu0 %v1433
      %1453 = vmatpush.bf16.msra.mxu0 %v1432
      %1454 = vmatpush.bf16.msra.mxu0 %v1431
      %1455 = vmatmul.bf16.gmra.mxu0 %v1391
      %v1456 = vpop.f32.mrf.mxu0
      %v1457 = vadd.f32 0.0, %v1456
      %v1458 = vpop.f32.mrf.mxu0
      %v1459 = vadd.f32 0.0, %v1458
      %1460 = vmatmul.bf16.gmra.mxu0 %v1392
      %v1461 = vpop.f32.mrf.mxu0
      %v1462 = vadd.f32 0.0, %v1461
      %v1463 = vpop.f32.mrf.mxu0
      %v1464 = vadd.f32 0.0, %v1463
      %1465 = vmatmul.bf16.gmra.mxu0 %v1393
      %v1466 = vpop.f32.mrf.mxu0
      %v1467 = vadd.f32 0.0, %v1466
      %v1468 = vpop.f32.mrf.mxu0
      %v1469 = vadd.f32 0.0, %v1468
      %1470 = vmatmul.bf16.gmra.mxu0 %v1394
      %v1471 = vpop.f32.mrf.mxu0
      %v1472 = vadd.f32 0.0, %v1471
      %v1473 = vpop.f32.mrf.mxu0
      %v1474 = vadd.f32 0.0, %v1473
      %1475 = vdwg.mxu0
      %v1476 = vadd.f32 %v1302, %v1457
      %v1477 = vadd.f32 %v1303, %v1459
      %v1478 = vadd.f32 %v1304, %v1462
      %v1479 = vadd.f32 %v1305, %v1464
      %v1480 = vadd.f32 %v1306, %v1467
      %v1481 = vadd.f32 %v1307, %v1469
      %v1482 = vadd.f32 %v1308, %v1472
      %v1483 = vadd.f32 %v1309, %v1474
      %s1484 = scalar_lea.vmem %s304, 16
      %v1485 = vld [vmem:[%s1484] sm:$0xf]
      %v1486 = vld [vmem:[%s1484 + $0x8] sm:$0xf]
      %v1487 = vld [vmem:[%s1484 + $0x10] sm:$0xf]
      %v1488 = vld [vmem:[%s1484 + $0x18] sm:$0xf]
      %v1489 = vld [vmem:[%s1484 + $0x20] sm:$0xf]
      %v1490 = vld [vmem:[%s1484 + $0x28] sm:$0xf]
      %v1491 = vld [vmem:[%s1484 + $0x30] sm:$0xf]
      %v1492 = vld [vmem:[%s1484 + $0x38] sm:$0xf]
      %s1493 = scalar_lea.vmem %s308, 384
      %v1494 = vld [vmem:[%s1493] sm:$0xf]
      %v1495 = vld [vmem:[%s1493 + $0x4] sm:$0xf]
      %v1496 = vld [vmem:[%s1493 + $0x8] sm:$0xf]
      %v1497 = vld [vmem:[%s1493 + $0xc] sm:$0xf]
      %v1498 = vld [vmem:[%s1493 + $0x10] sm:$0xf]
      %v1499 = vld [vmem:[%s1493 + $0x14] sm:$0xf]
      %v1500 = vld [vmem:[%s1493 + $0x18] sm:$0xf]
      %v1501 = vld [vmem:[%s1493 + $0x1c] sm:$0xf]
      %v1502 = vld [vmem:[%s1493 + $0x20] sm:$0xf]
      %v1503 = vld [vmem:[%s1493 + $0x24] sm:$0xf]
      %v1504 = vld [vmem:[%s1493 + $0x28] sm:$0xf]
      %v1505 = vld [vmem:[%s1493 + $0x2c] sm:$0xf]
      %v1506 = vld [vmem:[%s1493 + $0x30] sm:$0xf]
      %v1507 = vld [vmem:[%s1493 + $0x34] sm:$0xf]
      %v1508 = vld [vmem:[%s1493 + $0x38] sm:$0xf]
      %v1509 = vld [vmem:[%s1493 + $0x3c] sm:$0xf]
      %v1518 = vunpack.c.l.b16 %v1485
      %v1519 = vunpack.c.l.b16 %v1486
      %v1520 = vunpack.c.l.b16 %v1487
      %v1521 = vunpack.c.l.b16 %v1488
      %v1522 = vunpack.c.l.b16 %v1489
      %v1523 = vunpack.c.l.b16 %v1490
      %v1524 = vunpack.c.l.b16 %v1491
      %v1525 = vunpack.c.l.b16 %v1492
      %v1526 = vpack.c.b16 %v1519, %v1518
      %v1527 = vpack.c.b16 %v1521, %v1520
      %v1528 = vpack.c.b16 %v1523, %v1522
      %v1529 = vpack.c.b16 %v1525, %v1524
      %v1550 = vunpack.c.l.b16 %v1494
      %v1551 = vunpack.c.l.b16 %v1495
      %v1552 = vunpack.c.l.b16 %v1496
      %v1553 = vunpack.c.l.b16 %v1497
      %v1554 = vunpack.c.l.b16 %v1498
      %v1555 = vunpack.c.l.b16 %v1499
      %v1556 = vunpack.c.l.b16 %v1500
      %v1557 = vunpack.c.l.b16 %v1501
      %v1558 = vunpack.c.l.b16 %v1502
      %v1559 = vunpack.c.l.b16 %v1503
      %v1560 = vunpack.c.l.b16 %v1504
      %v1561 = vunpack.c.l.b16 %v1505
      %v1562 = vunpack.c.l.b16 %v1506
      %v1563 = vunpack.c.l.b16 %v1507
      %v1564 = vunpack.c.l.b16 %v1508
      %v1565 = vunpack.c.l.b16 %v1509
      %v1566 = vpack.c.b16 %v1551, %v1550
      %v1567 = vpack.c.b16 %v1553, %v1552
      %v1568 = vpack.c.b16 %v1555, %v1554
      %v1569 = vpack.c.b16 %v1557, %v1556
      %v1570 = vpack.c.b16 %v1559, %v1558
      %v1571 = vpack.c.b16 %v1561, %v1560
      %v1572 = vpack.c.b16 %v1563, %v1562
      %v1573 = vpack.c.b16 %v1565, %v1564
      %1582 = vmatpush.bf16.msra.mxu0 %v1573
      %1583 = vmatpush.bf16.msra.mxu0 %v1572
      %1584 = vmatpush.bf16.msra.mxu0 %v1571
      %1585 = vmatpush.bf16.msra.mxu0 %v1570
      %1586 = vmatpush.bf16.msra.mxu0 %v1569
      %1587 = vmatpush.bf16.msra.mxu0 %v1568
      %1588 = vmatpush.bf16.msra.mxu0 %v1567
      %1589 = vmatpush.bf16.msra.mxu0 %v1566
      %1590 = vmatmul.bf16.gmra.mxu0 %v1526
      %v1591 = vpop.f32.mrf.mxu0
      %v1592 = vadd.f32 0.0, %v1591
      %v1593 = vpop.f32.mrf.mxu0
      %v1594 = vadd.f32 0.0, %v1593
      %1595 = vmatmul.bf16.gmra.mxu0 %v1527
      %v1596 = vpop.f32.mrf.mxu0
      %v1597 = vadd.f32 0.0, %v1596
      %v1598 = vpop.f32.mrf.mxu0
      %v1599 = vadd.f32 0.0, %v1598
      %1600 = vmatmul.bf16.gmra.mxu0 %v1528
      %v1601 = vpop.f32.mrf.mxu0
      %v1602 = vadd.f32 0.0, %v1601
      %v1603 = vpop.f32.mrf.mxu0
      %v1604 = vadd.f32 0.0, %v1603
      %1605 = vmatmul.bf16.gmra.mxu0 %v1529
      %v1606 = vpop.f32.mrf.mxu0
      %v1607 = vadd.f32 0.0, %v1606
      %v1608 = vpop.f32.mrf.mxu0
      %v1609 = vadd.f32 0.0, %v1608
      %1610 = vdwg.mxu0
      %v1611 = vadd.f32 %v1476, %v1592
      %v1612 = vadd.f32 %v1477, %v1594
      %v1613 = vadd.f32 %v1478, %v1597
      %v1614 = vadd.f32 %v1479, %v1599
      %v1615 = vadd.f32 %v1480, %v1602
      %v1616 = vadd.f32 %v1481, %v1604
      %v1617 = vadd.f32 %v1482, %v1607
      %v1618 = vadd.f32 %v1483, %v1609
      %v1619 = vld [vmem:[%s1484] sm:$0xf]
      %v1620 = vld [vmem:[%s1484 + $0x4] sm:$0x1]
      %v1621 = vld [vmem:[%s1484 + $0x8] sm:$0xf]
      %v1622 = vld [vmem:[%s1484 + $0xc] sm:$0x1]
      %v1623 = vld [vmem:[%s1484 + $0x10] sm:$0xf]
      %v1624 = vld [vmem:[%s1484 + $0x14] sm:$0x1]
      %v1625 = vld [vmem:[%s1484 + $0x18] sm:$0xf]
      %v1626 = vld [vmem:[%s1484 + $0x1c] sm:$0x1]
      %v1627 = vld [vmem:[%s1484 + $0x20] sm:$0xf]
      %v1628 = vld [vmem:[%s1484 + $0x24] sm:$0x1]
      %v1629 = vld [vmem:[%s1484 + $0x28] sm:$0xf]
      %v1630 = vld [vmem:[%s1484 + $0x2c] sm:$0x1]
      %v1631 = vld [vmem:[%s1484 + $0x30] sm:$0xf]
      %v1632 = vld [vmem:[%s1484 + $0x34] sm:$0x1]
      %v1633 = vld [vmem:[%s1484 + $0x38] sm:$0xf]
      %v1634 = vld [vmem:[%s1484 + $0x3c] sm:$0x1]
      %v1636 = vshrl.u32 %v1619, 16
      %v1638 = vrot.slane %v1636, 4
      %v1639 = vshll.u32 %v1619, 16
      %v1641 = vrot.slane %v1639, 5
      %v1642 = vor.u32 %v1638, %v1641
      %v1643 = vrot.slane %v1642, 4
      %v1645 = vshll.u32 %v1620, 16
      %v1647 = vrot.slane %v1645, 5
      %v1648 = vsel %vm428, %v1643, %v1647
      %v1650 = vshrl.u32 %v1621, 16
      %v1652 = vrot.slane %v1650, 4
      %v1653 = vshll.u32 %v1621, 16
      %v1655 = vrot.slane %v1653, 5
      %v1656 = vor.u32 %v1652, %v1655
      %v1657 = vrot.slane %v1656, 4
      %v1659 = vshll.u32 %v1622, 16
      %v1661 = vrot.slane %v1659, 5
      %v1662 = vsel %vm428, %v1657, %v1661
      %v1664 = vshrl.u32 %v1623, 16
      %v1666 = vrot.slane %v1664, 4
      %v1667 = vshll.u32 %v1623, 16
      %v1669 = vrot.slane %v1667, 5
      %v1670 = vor.u32 %v1666, %v1669
      %v1671 = vrot.slane %v1670, 4
      %v1673 = vshll.u32 %v1624, 16
      %v1675 = vrot.slane %v1673, 5
      %v1676 = vsel %vm428, %v1671, %v1675
      %v1678 = vshrl.u32 %v1625, 16
      %v1680 = vrot.slane %v1678, 4
      %v1681 = vshll.u32 %v1625, 16
      %v1683 = vrot.slane %v1681, 5
      %v1684 = vor.u32 %v1680, %v1683
      %v1685 = vrot.slane %v1684, 4
      %v1687 = vshll.u32 %v1626, 16
      %v1689 = vrot.slane %v1687, 5
      %v1690 = vsel %vm428, %v1685, %v1689
      %v1692 = vshrl.u32 %v1627, 16
      %v1694 = vrot.slane %v1692, 4
      %v1695 = vshll.u32 %v1627, 16
      %v1697 = vrot.slane %v1695, 5
      %v1698 = vor.u32 %v1694, %v1697
      %v1699 = vrot.slane %v1698, 4
      %v1701 = vshll.u32 %v1628, 16
      %v1703 = vrot.slane %v1701, 5
      %v1704 = vsel %vm428, %v1699, %v1703
      %v1706 = vshrl.u32 %v1629, 16
      %v1708 = vrot.slane %v1706, 4
      %v1709 = vshll.u32 %v1629, 16
      %v1711 = vrot.slane %v1709, 5
      %v1712 = vor.u32 %v1708, %v1711
      %v1713 = vrot.slane %v1712, 4
      %v1715 = vshll.u32 %v1630, 16
      %v1717 = vrot.slane %v1715, 5
      %v1718 = vsel %vm428, %v1713, %v1717
      %v1720 = vshrl.u32 %v1631, 16
      %v1722 = vrot.slane %v1720, 4
      %v1723 = vshll.u32 %v1631, 16
      %v1725 = vrot.slane %v1723, 5
      %v1726 = vor.u32 %v1722, %v1725
      %v1727 = vrot.slane %v1726, 4
      %v1729 = vshll.u32 %v1632, 16
      %v1731 = vrot.slane %v1729, 5
      %v1732 = vsel %vm428, %v1727, %v1731
      %v1734 = vshrl.u32 %v1633, 16
      %v1736 = vrot.slane %v1734, 4
      %v1737 = vshll.u32 %v1633, 16
      %v1739 = vrot.slane %v1737, 5
      %v1740 = vor.u32 %v1736, %v1739
      %v1741 = vrot.slane %v1740, 4
      %v1743 = vshll.u32 %v1634, 16
      %v1745 = vrot.slane %v1743, 5
      %v1746 = vsel %vm428, %v1741, %v1745
      %s1747 = scalar_lea.vmem %s308, 448
      %v1748 = vld [vmem:[%s1747] sm:$0xf]
      %v1749 = vld [vmem:[%s1747 + $0x4] sm:$0xf]
      %v1750 = vld [vmem:[%s1747 + $0x8] sm:$0xf]
      %v1751 = vld [vmem:[%s1747 + $0xc] sm:$0xf]
      %v1752 = vld [vmem:[%s1747 + $0x10] sm:$0xf]
      %v1753 = vld [vmem:[%s1747 + $0x14] sm:$0xf]
      %v1754 = vld [vmem:[%s1747 + $0x18] sm:$0xf]
      %v1755 = vld [vmem:[%s1747 + $0x1c] sm:$0xf]
      %v1756 = vld [vmem:[%s1747 + $0x20] sm:$0xf]
      %v1757 = vld [vmem:[%s1747 + $0x24] sm:$0xf]
      %v1758 = vld [vmem:[%s1747 + $0x28] sm:$0xf]
      %v1759 = vld [vmem:[%s1747 + $0x2c] sm:$0xf]
      %v1760 = vld [vmem:[%s1747 + $0x30] sm:$0xf]
      %v1761 = vld [vmem:[%s1747 + $0x34] sm:$0xf]
      %v1762 = vld [vmem:[%s1747 + $0x38] sm:$0xf]
      %v1763 = vld [vmem:[%s1747 + $0x3c] sm:$0xf]
      %v1764 = vunpack.c.l.b16 %v1648
      %v1765 = vunpack.c.l.b16 %v1662
      %v1766 = vunpack.c.l.b16 %v1676
      %v1767 = vunpack.c.l.b16 %v1690
      %v1768 = vunpack.c.l.b16 %v1704
      %v1769 = vunpack.c.l.b16 %v1718
      %v1770 = vunpack.c.l.b16 %v1732
      %v1771 = vunpack.c.l.b16 %v1746
      %v1772 = vpack.c.b16 %v1765, %v1764
      %v1773 = vpack.c.b16 %v1767, %v1766
      %v1774 = vpack.c.b16 %v1769, %v1768
      %v1775 = vpack.c.b16 %v1771, %v1770
      %v1796 = vunpack.c.l.b16 %v1748
      %v1797 = vunpack.c.l.b16 %v1749
      %v1798 = vunpack.c.l.b16 %v1750
      %v1799 = vunpack.c.l.b16 %v1751
      %v1800 = vunpack.c.l.b16 %v1752
      %v1801 = vunpack.c.l.b16 %v1753
      %v1802 = vunpack.c.l.b16 %v1754
      %v1803 = vunpack.c.l.b16 %v1755
      %v1804 = vunpack.c.l.b16 %v1756
      %v1805 = vunpack.c.l.b16 %v1757
      %v1806 = vunpack.c.l.b16 %v1758
      %v1807 = vunpack.c.l.b16 %v1759
      %v1808 = vunpack.c.l.b16 %v1760
      %v1809 = vunpack.c.l.b16 %v1761
      %v1810 = vunpack.c.l.b16 %v1762
      %v1811 = vunpack.c.l.b16 %v1763
      %v1812 = vpack.c.b16 %v1797, %v1796
      %v1813 = vpack.c.b16 %v1799, %v1798
      %v1814 = vpack.c.b16 %v1801, %v1800
      %v1815 = vpack.c.b16 %v1803, %v1802
      %v1816 = vpack.c.b16 %v1805, %v1804
      %v1817 = vpack.c.b16 %v1807, %v1806
      %v1818 = vpack.c.b16 %v1809, %v1808
      %v1819 = vpack.c.b16 %v1811, %v1810
      %1828 = vmatpush.bf16.msra.mxu0 %v1819
      %1829 = vmatpush.bf16.msra.mxu0 %v1818
      %1830 = vmatpush.bf16.msra.mxu0 %v1817
      %1831 = vmatpush.bf16.msra.mxu0 %v1816
      %1832 = vmatpush.bf16.msra.mxu0 %v1815
      %1833 = vmatpush.bf16.msra.mxu0 %v1814
      %1834 = vmatpush.bf16.msra.mxu0 %v1813
      %1835 = vmatpush.bf16.msra.mxu0 %v1812
      %1836 = vmatmul.bf16.gmra.mxu0 %v1772
      %v1837 = vpop.f32.mrf.mxu0
      %v1838 = vadd.f32 0.0, %v1837
      %v1839 = vpop.f32.mrf.mxu0
      %v1840 = vadd.f32 0.0, %v1839
      %1841 = vmatmul.bf16.gmra.mxu0 %v1773
      %v1842 = vpop.f32.mrf.mxu0
      %v1843 = vadd.f32 0.0, %v1842
      %v1844 = vpop.f32.mrf.mxu0
      %v1845 = vadd.f32 0.0, %v1844
      %1846 = vmatmul.bf16.gmra.mxu0 %v1774
      %v1847 = vpop.f32.mrf.mxu0
      %v1848 = vadd.f32 0.0, %v1847
      %v1849 = vpop.f32.mrf.mxu0
      %v1850 = vadd.f32 0.0, %v1849
      %1851 = vmatmul.bf16.gmra.mxu0 %v1775
      %v1852 = vpop.f32.mrf.mxu0
      %v1853 = vadd.f32 0.0, %v1852
      %v1854 = vpop.f32.mrf.mxu0
      %v1855 = vadd.f32 0.0, %v1854
      %1856 = vdwg.mxu0
      %v1857 = vadd.f32 %v1611, %v1838
      %v1858 = vadd.f32 %v1612, %v1840
      %v1859 = vadd.f32 %v1613, %v1843
      %v1860 = vadd.f32 %v1614, %v1845
      %v1861 = vadd.f32 %v1615, %v1848
      %v1862 = vadd.f32 %v1616, %v1850
      %v1863 = vadd.f32 %v1617, %v1853
      %v1864 = vadd.f32 %v1618, %v1855
      %v1865 = vld [vmem:[%s1484] sm:$0xe]
      %v1866 = vld [vmem:[%s1484 + $0x8] sm:$0xe]
      %v1867 = vld [vmem:[%s1484 + $0x10] sm:$0xe]
      %v1868 = vld [vmem:[%s1484 + $0x18] sm:$0xe]
      %v1869 = vld [vmem:[%s1484 + $0x20] sm:$0xe]
      %v1870 = vld [vmem:[%s1484 + $0x28] sm:$0xe]
      %v1871 = vld [vmem:[%s1484 + $0x30] sm:$0xe]
      %v1872 = vld [vmem:[%s1484 + $0x38] sm:$0xe]
      %v1889 = vrot.slane %v1865, 5
      %v1890 = vrot.slane %v1889, 4
      %v1891 = vrot.slane %v1620, 5
      %v1892 = vsel %vm778, %v1890, %v1891
      %v1893 = vrot.slane %v1866, 5
      %v1894 = vrot.slane %v1893, 4
      %v1895 = vrot.slane %v1622, 5
      %v1896 = vsel %vm778, %v1894, %v1895
      %v1897 = vrot.slane %v1867, 5
      %v1898 = vrot.slane %v1897, 4
      %v1899 = vrot.slane %v1624, 5
      %v1900 = vsel %vm778, %v1898, %v1899
      %v1901 = vrot.slane %v1868, 5
      %v1902 = vrot.slane %v1901, 4
      %v1903 = vrot.slane %v1626, 5
      %v1904 = vsel %vm778, %v1902, %v1903
      %v1905 = vrot.slane %v1869, 5
      %v1906 = vrot.slane %v1905, 4
      %v1907 = vrot.slane %v1628, 5
      %v1908 = vsel %vm778, %v1906, %v1907
      %v1909 = vrot.slane %v1870, 5
      %v1910 = vrot.slane %v1909, 4
      %v1911 = vrot.slane %v1630, 5
      %v1912 = vsel %vm778, %v1910, %v1911
      %v1913 = vrot.slane %v1871, 5
      %v1914 = vrot.slane %v1913, 4
      %v1915 = vrot.slane %v1632, 5
      %v1916 = vsel %vm778, %v1914, %v1915
      %v1917 = vrot.slane %v1872, 5
      %v1918 = vrot.slane %v1917, 4
      %v1919 = vrot.slane %v1634, 5
      %v1920 = vsel %vm778, %v1918, %v1919
      %s1921 = scalar_lea.vmem %s308, 512
      %v1922 = vld [vmem:[%s1921] sm:$0xf]
      %v1923 = vld [vmem:[%s1921 + $0x4] sm:$0xf]
      %v1924 = vld [vmem:[%s1921 + $0x8] sm:$0xf]
      %v1925 = vld [vmem:[%s1921 + $0xc] sm:$0xf]
      %v1926 = vld [vmem:[%s1921 + $0x10] sm:$0xf]
      %v1927 = vld [vmem:[%s1921 + $0x14] sm:$0xf]
      %v1928 = vld [vmem:[%s1921 + $0x18] sm:$0xf]
      %v1929 = vld [vmem:[%s1921 + $0x1c] sm:$0xf]
      %v1930 = vld [vmem:[%s1921 + $0x20] sm:$0xf]
      %v1931 = vld [vmem:[%s1921 + $0x24] sm:$0xf]
      %v1932 = vld [vmem:[%s1921 + $0x28] sm:$0xf]
      %v1933 = vld [vmem:[%s1921 + $0x2c] sm:$0xf]
      %v1934 = vld [vmem:[%s1921 + $0x30] sm:$0xf]
      %v1935 = vld [vmem:[%s1921 + $0x34] sm:$0xf]
      %v1936 = vld [vmem:[%s1921 + $0x38] sm:$0xf]
      %v1937 = vld [vmem:[%s1921 + $0x3c] sm:$0xf]
      %v1938 = vunpack.c.l.b16 %v1892
      %v1939 = vunpack.c.l.b16 %v1896
      %v1940 = vunpack.c.l.b16 %v1900
      %v1941 = vunpack.c.l.b16 %v1904
      %v1942 = vunpack.c.l.b16 %v1908
      %v1943 = vunpack.c.l.b16 %v1912
      %v1944 = vunpack.c.l.b16 %v1916
      %v1945 = vunpack.c.l.b16 %v1920
      %v1946 = vpack.c.b16 %v1939, %v1938
      %v1947 = vpack.c.b16 %v1941, %v1940
      %v1948 = vpack.c.b16 %v1943, %v1942
      %v1949 = vpack.c.b16 %v1945, %v1944
      %v1970 = vunpack.c.l.b16 %v1922
      %v1971 = vunpack.c.l.b16 %v1923
      %v1972 = vunpack.c.l.b16 %v1924
      %v1973 = vunpack.c.l.b16 %v1925
      %v1974 = vunpack.c.l.b16 %v1926
      %v1975 = vunpack.c.l.b16 %v1927
      %v1976 = vunpack.c.l.b16 %v1928
      %v1977 = vunpack.c.l.b16 %v1929
      %v1978 = vunpack.c.l.b16 %v1930
      %v1979 = vunpack.c.l.b16 %v1931
      %v1980 = vunpack.c.l.b16 %v1932
      %v1981 = vunpack.c.l.b16 %v1933
      %v1982 = vunpack.c.l.b16 %v1934
      %v1983 = vunpack.c.l.b16 %v1935
      %v1984 = vunpack.c.l.b16 %v1936
      %v1985 = vunpack.c.l.b16 %v1937
      %v1986 = vpack.c.b16 %v1971, %v1970
      %v1987 = vpack.c.b16 %v1973, %v1972
      %v1988 = vpack.c.b16 %v1975, %v1974
      %v1989 = vpack.c.b16 %v1977, %v1976
      %v1990 = vpack.c.b16 %v1979, %v1978
      %v1991 = vpack.c.b16 %v1981, %v1980
      %v1992 = vpack.c.b16 %v1983, %v1982
      %v1993 = vpack.c.b16 %v1985, %v1984
      %2002 = vmatpush.bf16.msra.mxu0 %v1993
      %2003 = vmatpush.bf16.msra.mxu0 %v1992
      %2004 = vmatpush.bf16.msra.mxu0 %v1991
      %2005 = vmatpush.bf16.msra.mxu0 %v1990
      %2006 = vmatpush.bf16.msra.mxu0 %v1989
      %2007 = vmatpush.bf16.msra.mxu0 %v1988
      %2008 = vmatpush.bf16.msra.mxu0 %v1987
      %2009 = vmatpush.bf16.msra.mxu0 %v1986
      %2010 = vmatmul.bf16.gmra.mxu0 %v1946
      %v2011 = vpop.f32.mrf.mxu0
      %v2012 = vadd.f32 0.0, %v2011
      %v2013 = vpop.f32.mrf.mxu0
      %v2014 = vadd.f32 0.0, %v2013
      %2015 = vmatmul.bf16.gmra.mxu0 %v1947
      %v2016 = vpop.f32.mrf.mxu0
      %v2017 = vadd.f32 0.0, %v2016
      %v2018 = vpop.f32.mrf.mxu0
      %v2019 = vadd.f32 0.0, %v2018
      %2020 = vmatmul.bf16.gmra.mxu0 %v1948
      %v2021 = vpop.f32.mrf.mxu0
      %v2022 = vadd.f32 0.0, %v2021
      %v2023 = vpop.f32.mrf.mxu0
      %v2024 = vadd.f32 0.0, %v2023
      %2025 = vmatmul.bf16.gmra.mxu0 %v1949
      %v2026 = vpop.f32.mrf.mxu0
      %v2027 = vadd.f32 0.0, %v2026
      %v2028 = vpop.f32.mrf.mxu0
      %v2029 = vadd.f32 0.0, %v2028
      %2030 = vdwg.mxu0
      %v2031 = vadd.f32 %v1857, %v2012
      %v2032 = vadd.f32 %v1858, %v2014
      %v2033 = vadd.f32 %v1859, %v2017
      %v2034 = vadd.f32 %v1860, %v2019
      %v2035 = vadd.f32 %v1861, %v2022
      %v2036 = vadd.f32 %v1862, %v2024
      %v2037 = vadd.f32 %v1863, %v2027
      %v2038 = vadd.f32 %v1864, %v2029
      %v2039 = vld [vmem:[#allocation2] sm:$0xf]
      %v2040 = vld [vmem:[#allocation2 + $0x4] sm:$0xf]
      %v2041 = vld [vmem:[#allocation2 + $0x8] sm:$0xf]
      %v2042 = vld [vmem:[#allocation2 + $0xc] sm:$0xf]
      %v2043 = vld [vmem:[#allocation2 + $0x10] sm:$0xf]
      %v2044 = vld [vmem:[#allocation2 + $0x14] sm:$0xf]
      %v2045 = vld [vmem:[#allocation2 + $0x18] sm:$0xf]
      %v2046 = vld [vmem:[#allocation2 + $0x1c] sm:$0xf]
      %v2047 = vld [vmem:[%s317] sm:$0xf]
      %v2048 = vld [vmem:[%s317 + $0x4] sm:$0xf]
      %v2049 = vld [vmem:[%s317 + $0x8] sm:$0xf]
      %v2050 = vld [vmem:[%s317 + $0xc] sm:$0xf]
      %v2051 = vld [vmem:[%s317 + $0x10] sm:$0xf]
      %v2052 = vld [vmem:[%s317 + $0x14] sm:$0xf]
      %v2053 = vld [vmem:[%s317 + $0x18] sm:$0xf]
      %v2054 = vld [vmem:[%s317 + $0x1c] sm:$0xf]
      %v2055 = vld [vmem:[%s317 + $0x20] sm:$0xf]
      %v2056 = vld [vmem:[%s317 + $0x24] sm:$0xf]
      %v2057 = vld [vmem:[%s317 + $0x28] sm:$0xf]
      %v2058 = vld [vmem:[%s317 + $0x2c] sm:$0xf]
      %v2059 = vld [vmem:[%s317 + $0x30] sm:$0xf]
      %v2060 = vld [vmem:[%s317 + $0x34] sm:$0xf]
      %v2061 = vld [vmem:[%s317 + $0x38] sm:$0xf]
      %v2062 = vld [vmem:[%s317 + $0x3c] sm:$0xf]
      %v2071 = vunpack.c.l.b16 %v2039
      %v2072 = vunpack.c.l.b16 %v2040
      %v2073 = vunpack.c.l.b16 %v2041
      %v2074 = vunpack.c.l.b16 %v2042
      %v2075 = vunpack.c.l.b16 %v2043
      %v2076 = vunpack.c.l.b16 %v2044
      %v2077 = vunpack.c.l.b16 %v2045
      %v2078 = vunpack.c.l.b16 %v2046
      %v2079 = vpack.c.b16 %v2072, %v2071
      %v2080 = vpack.c.b16 %v2074, %v2073
      %v2081 = vpack.c.b16 %v2076, %v2075
      %v2082 = vpack.c.b16 %v2078, %v2077
      %v2103 = vunpack.c.l.b16 %v2047
      %v2104 = vunpack.c.l.b16 %v2048
      %v2105 = vunpack.c.l.b16 %v2049
      %v2106 = vunpack.c.l.b16 %v2050
      %v2107 = vunpack.c.l.b16 %v2051
      %v2108 = vunpack.c.l.b16 %v2052
      %v2109 = vunpack.c.l.b16 %v2053
      %v2110 = vunpack.c.l.b16 %v2054
      %v2111 = vunpack.c.l.b16 %v2055
      %v2112 = vunpack.c.l.b16 %v2056
      %v2113 = vunpack.c.l.b16 %v2057
      %v2114 = vunpack.c.l.b16 %v2058
      %v2115 = vunpack.c.l.b16 %v2059
      %v2116 = vunpack.c.l.b16 %v2060
      %v2117 = vunpack.c.l.b16 %v2061
      %v2118 = vunpack.c.l.b16 %v2062
      %v2119 = vpack.c.b16 %v2104, %v2103
      %v2120 = vpack.c.b16 %v2106, %v2105
      %v2121 = vpack.c.b16 %v2108, %v2107
      %v2122 = vpack.c.b16 %v2110, %v2109
      %v2123 = vpack.c.b16 %v2112, %v2111
      %v2124 = vpack.c.b16 %v2114, %v2113
      %v2125 = vpack.c.b16 %v2116, %v2115
      %v2126 = vpack.c.b16 %v2118, %v2117
      %2135 = vmatpush.bf16.msra.mxu0 %v2126
      %2136 = vmatpush.bf16.msra.mxu0 %v2125
      %2137 = vmatpush.bf16.msra.mxu0 %v2124
      %2138 = vmatpush.bf16.msra.mxu0 %v2123
      %2139 = vmatpush.bf16.msra.mxu0 %v2122
      %2140 = vmatpush.bf16.msra.mxu0 %v2121
      %2141 = vmatpush.bf16.msra.mxu0 %v2120
      %2142 = vmatpush.bf16.msra.mxu0 %v2119
      %2143 = vmatmul.bf16.gmra.mxu0 %v2079
      %v2144 = vpop.f32.mrf.mxu0
      %v2145 = vadd.f32 0.0, %v2144
      %v2146 = vpop.f32.mrf.mxu0
      %v2147 = vadd.f32 0.0, %v2146
      %2148 = vmatmul.bf16.gmra.mxu0 %v2080
      %v2149 = vpop.f32.mrf.mxu0
      %v2150 = vadd.f32 0.0, %v2149
      %v2151 = vpop.f32.mrf.mxu0
      %v2152 = vadd.f32 0.0, %v2151
      %2153 = vmatmul.bf16.gmra.mxu0 %v2081
      %v2154 = vpop.f32.mrf.mxu0
      %v2155 = vadd.f32 0.0, %v2154
      %v2156 = vpop.f32.mrf.mxu0
      %v2157 = vadd.f32 0.0, %v2156
      %2158 = vmatmul.bf16.gmra.mxu0 %v2082
      %v2159 = vpop.f32.mrf.mxu0
      %v2160 = vadd.f32 0.0, %v2159
      %v2161 = vpop.f32.mrf.mxu0
      %v2162 = vadd.f32 0.0, %v2161
      %2163 = vdwg.mxu0
      %v2164 = vadd.f32 %v2031, %v2145
      %v2165 = vadd.f32 %v2032, %v2147
      %v2166 = vadd.f32 %v2033, %v2150
      %v2167 = vadd.f32 %v2034, %v2152
      %v2168 = vadd.f32 %v2035, %v2155
      %v2169 = vadd.f32 %v2036, %v2157
      %v2170 = vadd.f32 %v2037, %v2160
      %v2171 = vadd.f32 %v2038, %v2162
      %2172 = vst [vmem:[%s325] sm:$0xff] %v2164
      %2173 = vst [vmem:[%s325 + $0x8] sm:$0xff] %v2165
      %2174 = vst [vmem:[%s325 + $0x10] sm:$0xff] %v2166
      %2175 = vst [vmem:[%s325 + $0x18] sm:$0xff] %v2167
      %2176 = vst [vmem:[%s325 + $0x20] sm:$0xff] %v2168
      %2177 = vst [vmem:[%s325 + $0x28] sm:$0xff] %v2169
      %2178 = vst [vmem:[%s325 + $0x30] sm:$0xff] %v2170
      %2179 = vst [vmem:[%s325 + $0x38] sm:$0xff] %v2171
      %p2180 = scmp.lt.s32.totalorder %s21, 1
      %s2181 = scalar_select %p2180, %s21, 1
      %p2182 = scmp.lt.s32.totalorder %s22, 0
      %s2183 = scalar_select %p2182, %s22, 0
      %s2184 = smul.addr %s2181, 8
      %s2185 = sadd.s32 %s2183, %s2184
      %s2186 = smul.addr %s2185, 8
      %s2187 = scalar_lea.vmem %s6, %s2186
      // Predicated region
      $region49: #{basic_block_v2_forward.3} parent=43 // pred_check
        %p2188 = pneg %p195
      $region50: #{basic_block_v2_forward.3} parent=43 // pred_check_branch
        %2190 = sbr.rel (%p2188) target = $region52
      $region51: #{basic_block_v2_forward.3} parent=43 // pred_region
        _
      $region52: #{basic_block_v2_forward.3} parent=43 // pred_fallthru
        _
    $region44: #{basic_block_v2_forward.3} parent=5 // pred_fallthru
      _
    %p2191 = scmp.le.s32.totalorder 2, %s12
    // Predicated region
    $region53: #{basic_block_v2_forward.3} parent=5 // pred_check
      %p2192 = pneg %p2191
    $region54: #{basic_block_v2_forward.3} parent=5 // pred_check_branch
      %2194 = sbr.rel (%p2192) target = $region56
    $region55: #{basic_block_v2_forward.3} parent=5 // pred_region
      %s2195 = ssub.s32 %s12, 2
      // Predicated region
      $region57: #{basic_block_v2_forward.3} parent=55 // pred_check
        %p2196 = pneg %p201
      $region58: #{basic_block_v2_forward.3} parent=55 // pred_check_branch
        %2198 = sbr.rel (%p2196) target = $region60
      $region59: #{basic_block_v2_forward.3} parent=55 // pred_region
        %p2199 = scmp.lt.s32.totalorder %s23, 1
        %s2200 = scalar_select %p2199, %s23, 1
        %p2201 = scmp.lt.s32.totalorder %s24, 0
        %s2202 = scalar_select %p2201, %s24, 0
        %s2203 = smul.addr %s2200, 8
        %s2204 = sadd.s32 %s2202, %s2203
        %s2205 = smul.addr %s2204, 8
        %s2206 = scalar_lea.vmem %s6, %s2205
      $region60: #{basic_block_v2_forward.3} parent=55 // pred_fallthru
        _
    $region56: #{basic_block_v2_forward.3} parent=5 // pred_fallthru
      _
  $region6: #{basic_block_v2_forward.3} parent=0 // loop_footer
    %s16 = sadd.s32 1, %s12
  $region7: #{basic_block_v2_forward.3} parent=0 // loop_footer_branch
    %11 = sbr.rel target = $region3
  $region8: #{basic_block_v2_forward.3} parent=0 // loop_exit
    _

</llo_original>
